<compile_context>
chip_gen: v5e
topology: v5e:2x2
jax: 0.10.0
libtpu: 0.0.40
codegen_flags: <defaults>
</compile_context>

<pallas_src>
import functools
import math

import jax
import jax.numpy as jnp
from jax import lax
from jax.experimental import pallas as pl
from jax.experimental.pallas import tpu as pltpu


_NEG_BIG = -1e30                      # plain Python float -> jaxpr literal, never a captured const
_GELU_C = math.sqrt(2.0 / math.pi)    # plain Python float


def _layer_norm(v, g, b, eps=1e-5):
    # matches reference LayerNorm: mean/var over last dim, unbiased=False, eps=1e-5
    mean = jnp.mean(v, axis=-1, keepdims=True)
    var = jnp.mean((v - mean) ** 2, axis=-1, keepdims=True)
    return g * ((v - mean) * lax.rsqrt(var + eps)) + b


def _gelu(x):
    # tanh-approximation GELU (matches the reference GELU module), kept in fp32
    return 0.5 * x * (1.0 + jnp.tanh(_GELU_C * (x + 0.044715 * x ** 3)))


# ------------------------------- the kernel -------------------------------

def _tf_block_kernel(x_ref,
                     ln1g_ref, ln1b_ref,
                     wq_ref, bq_ref, wk_ref, bk_ref, wv_ref, bv_ref,
                     wo_ref, bo_ref,
                     ln2g_ref, ln2b_ref,
                     w1_ref, b1_ref, w2_ref, b2_ref,
                     out_ref,
                     q_scr, kc_scr, vc_scr, m_scr, l_scr, acc_scr,
                     *, num_heads, tile, ff_chunk):
    f32 = jnp.float32
    cdt = q_scr.dtype                      # matmul-input compute dtype (bf16)
    H = num_heads
    D = x_ref.shape[-1]
    hd = D // H

    qi = pl.program_id(1)
    ki = pl.program_id(2)
    n_kv = pl.num_programs(2)

    # ---- once per (batch, q-tile): init stats, LN1, Q proj, fill K/V cache slot #qi ----
    @pl.when(ki == 0)
    def _init():
        m_scr[...] = jnp.full_like(m_scr, _NEG_BIG)
        l_scr[...] = jnp.zeros_like(l_scr)
        acc_scr[...] = jnp.zeros_like(acc_scr)

        h1 = _layer_norm(x_ref[0].astype(f32), ln1g_ref[...], ln1b_ref[...]).astype(cdt)
        # full-D, lane-dense projections (one MXU matmul each); 1/sqrt(hd) folded into Wq/bq
        q_scr[...] = (jnp.dot(h1, wq_ref[...], preferred_element_type=f32)
                      + bq_ref[...]).astype(cdt)
        # this q tile is also kv tile #qi: fill the persistent cache exactly once per batch
        kc_scr[qi] = (jnp.dot(h1, wk_ref[...], preferred_element_type=f32)
                      + bk_ref[...]).astype(cdt)
        vc_scr[qi] = (jnp.dot(h1, wv_ref[...], preferred_element_type=f32)
                      + bv_ref[...]).astype(cdt)

    # ---- flash online-softmax update over one cached KV tile ----
    def _attn_update(apply_mask):
        qh = q_scr[...].reshape(tile, H, hd)
        kh = kc_scr[ki].reshape(tile, H, hd)
        vh = vc_scr[ki].reshape(tile, H, hd)

        s = jnp.einsum('qhd,khd->hqk', qh, kh, preferred_element_type=f32)  # (H,tq,tk) f32
        if apply_mask:
            # diagonal tile only: q_off == k_off, so tile-local iotas suffice
            row = lax.broadcasted_iota(jnp.int32, (1, tile, tile), 1)
            col = lax.broadcasted_iota(jnp.int32, (1, tile, tile), 2)
            s = jnp.where(col > row, _NEG_BIG, s)

        m_prev = m_scr[...]
        m_new = jnp.maximum(m_prev, jnp.max(s, axis=-1, keepdims=True))
        alpha = jnp.exp(m_prev - m_new)
        p = jnp.exp(s - m_new)
        l_scr[...] = alpha * l_scr[...] + jnp.sum(p, axis=-1, keepdims=True)
        acc_scr[...] = alpha * acc_scr[...] + jnp.einsum(
            'hqk,khd->hqd', p.astype(cdt), vh, preferred_element_type=f32)
        m_scr[...] = m_new

    @pl.when(ki < qi)          # strictly below the diagonal: no mask ops on the VPU
    def _update_below():
        _attn_update(apply_mask=False)

    @pl.when(ki == qi)         # diagonal tile: apply the causal mask
    def _update_diag():
        _attn_update(apply_mask=True)
    # ki > qi: fully masked tile -> skipped entirely (no compute, no DMA: x block is per-qi)

    # ---- finalize: out-proj, residual, LN2, chunked FF, residual ----
    @pl.when(ki == n_kv - 1)
    def _finalize():
        inv_l = pl.reciprocal(l_scr[...], approx=True)           # EUP slot
        ctx = (acc_scr[...] * inv_l).astype(cdt)                  # (H, tq, hd)
        ctx2d = jnp.transpose(ctx, (1, 0, 2)).reshape(tile, D)    # one cheap transpose
        att = jnp.dot(ctx2d, wo_ref[...], preferred_element_type=f32) + bo_ref[...]

        x1 = x_ref[0].astype(f32) + att                           # residual 1 (dropout p=0)

        h2 = _layer_norm(x1, ln2g_ref[...], ln2b_ref[...]).astype(cdt)
        Fh = w1_ref.shape[-1]
        ff = None
        for c0 in range(0, Fh, ff_chunk):                         # static chunking of hidden dim
            cw = min(ff_chunk, Fh - c0)
            f = (jnp.dot(h2, w1_ref[:, c0:c0 + cw], preferred_element_type=f32)
                 + b1_ref[:, c0:c0 + cw])
            f = _gelu(f).astype(cdt)                              # GELU in fp32, cast at matmul
            part = jnp.dot(f, w2_ref[c0:c0 + cw, :], preferred_element_type=f32)
            ff = part if ff is None else ff + part
        ff = ff + b2_ref[...]

        out_ref[0] = (x1 + ff).astype(out_ref.dtype)              # residual 2 (dropout p=0)


# ------------------------------- wrapper -------------------------------

def prepare_params(params, num_heads, compute_dtype=jnp.bfloat16):
    """One-time weight prep (dtype casts + fold 1/sqrt(hd) into the Q projection).
    Call once and reuse across steps/layers so the casts do not compete with the
    kernel for HBM bandwidth."""
    (ln1g, ln1b, wq, bq, wk, bk, wv, bv, wo, bo,
     ln2g, ln2b, w1, b1, w2, b2) = params
    D = wq.shape[0]
    hd = D // num_heads
    scale = 1.0 / math.sqrt(float(hd))
    f32 = jnp.float32
    cdt = compute_dtype
    return (
        ln1g.astype(f32), ln1b.astype(f32),
        (wq * scale).astype(cdt), (bq * scale).astype(f32),
        wk.astype(cdt), bk.astype(f32),
        wv.astype(cdt), bv.astype(f32),
        wo.astype(cdt), bo.astype(f32),
        ln2g.astype(f32), ln2b.astype(f32),
        w1.astype(cdt), b1.astype(f32),
        w2.astype(cdt), b2.astype(f32),
    )


def _default_vmem_limit_bytes():
    # Generation-aware: ~80% of physical VMEM (v5e/v6e: 128 MiB, v7x: 64 MiB per TC).
    try:
        cap = pltpu.get_tpu_info().vmem_capacity_bytes
        return max(32 * 1024 * 1024, int(cap * 0.8))
    except Exception:
        return 64 * 1024 * 1024


def _default_tile(T):
    # 256-wide tiles feed the 256x256 MXU on v6e/v7x and amortize per-grid-step overhead;
    # on v5e (128-wide MXU) 128/256 are both fine.
    for cand in (256, 128, 64, 32, 16, 8):
        if T % cand == 0:
            return min(cand, T)
    return T


def transformer_block(x, prepared_params, num_heads, *, tile=None, ff_chunk=512,
                      vmem_limit_bytes=None):
    (ln1g, ln1b, wq, bq, wk, bk, wv, bv, wo, bo,
     ln2g, ln2b, w1, b1, w2, b2) = prepared_params

    B, T, D = x.shape
    H = num_heads
    assert D % H == 0, "emb_dim must be divisible by n_heads"
    hd = D // H
    cdt = wq.dtype

    if tile is None:
        tile = _default_tile(T)
    assert T % tile == 0, "context_length must be divisible by the tile size"
    n_t = T // tile

    if vmem_limit_bytes is None:
        vmem_limit_bytes = _default_vmem_limit_bytes()

    kparams = (ln1g, ln1b, wq, bq, wk, bk, wv, bv, wo, bo,
               ln2g, ln2b, w1, b1, w2, b2)

    def _const_spec(arr):
        nd = arr.ndim
        # grid-invariant weights/biases: same block for every grid step
        return pl.BlockSpec(arr.shape, lambda b, qi, ki, _nd=nd: (0,) * _nd)

    # single x input: it is the q tile AND (at ki==0) the source of kv-cache slot #qi,
    # so fully-masked kv tiles cost no extra DMA.
    in_specs = ([pl.BlockSpec((1, tile, D), lambda b, qi, ki: (b, qi, 0))]
                + [_const_spec(p) for p in kparams])
    out_spec = pl.BlockSpec((1, tile, D), lambda b, qi, ki: (b, qi, 0))

    f32 = jnp.float32
    scratch_shapes = [
        pltpu.VMEM((tile, D), cdt),        # Q for the current q tile (lane-dense)
        pltpu.VMEM((n_t, tile, D), cdt),   # persistent K cache (refilled per batch)
        pltpu.VMEM((n_t, tile, D), cdt),   # persistent V cache (refilled per batch)
        pltpu.VMEM((H, tile, 1), f32),     # running max
        pltpu.VMEM((H, tile, 1), f32),     # running sum
        pltpu.VMEM((H, tile, hd), f32),    # running (unnormalized) context
    ]

    kernel = functools.partial(_tf_block_kernel, num_heads=H, tile=tile, ff_chunk=ff_chunk)

    # TODO(synk): single-buffer the grid-invariant weight specs (pl.Buffered(1)) and/or
    # stream w1/w2 from HBM for very large D on v7x (64 MiB VMEM); kept default-buffered
    # here for maximum compile robustness.
    return pl.pallas_call(
        kernel,
        out_shape=jax.ShapeDtypeStruct((B, T, D), x.dtype),
        grid_spec=pltpu.PrefetchScalarGridSpec(
            num_scalar_prefetch=0,
            grid=(B, n_t, n_t),
            in_specs=in_specs,
            out_specs=out_spec,
            scratch_shapes=scratch_shapes,
        ),
        compiler_params=pltpu.CompilerParams(
            # q-tile axis must stay sequential ("arbitrary"): the K/V cache filled at a
            # q-row's ki==0 step is consumed by later q rows of the same batch.
            dimension_semantics=("parallel", "arbitrary", "arbitrary"),
            vmem_limit_bytes=vmem_limit_bytes,
        ),
    )(x, *kparams)


# -------------------------- plain-JAX (fp32) reference --------------------------

def transformer_block_ref(x, params, num_heads):
    (ln1g, ln1b, wq, bq, wk, bk, wv, bv, wo, bo,
     ln2g, ln2b, w1, b1, w2, b2) = params

    def ln(v, g, b):
        m = v.mean(-1, keepdims=True)
        var = ((v - m) ** 2).mean(-1, keepdims=True)
        return g * (v - m) / jnp.sqrt(var + 1e-5) + b

    B, T, D = x.shape
    hd = D // num_heads
    h = ln(x, ln1g, ln1b)
    q = h @ wq + bq
    k = h @ wk + bk
    v = h @ wv + bv
    qh = q.reshape(B, T, num_heads, hd).transpose(0, 2, 1, 3)
    kh = k.reshape(B, T, num_heads, hd).transpose(0, 2, 1, 3)
    vh = v.reshape(B, T, num_heads, hd).transpose(0, 2, 1, 3)
    s = jnp.einsum('bhtd,bhsd->bhts', qh, kh) / jnp.sqrt(float(hd))
    mask = jnp.triu(jnp.ones((T, T), bool), 1)
    s = jnp.where(mask, -jnp.inf, s)
    p = jax.nn.softmax(s, axis=-1)
    ctx = jnp.einsum('bhts,bhsd->bhtd', p, vh).transpose(0, 2, 1, 3).reshape(B, T, D)
    att = ctx @ wo + bo
    x1 = x + att
    h2 = ln(x1, ln2g, ln2b)
    f = h2 @ w1 + b1
    f = 0.5 * f * (1.0 + jnp.tanh(jnp.sqrt(2.0 / jnp.pi) * (f + 0.044715 * f ** 3)))
    f = f @ w2 + b2
    return x1 + f


# --------------------------------- main ---------------------------------

if __name__ == "__main__":
    cfg = dict(emb_dim=32, context_length=16, n_heads=4, drop_rate=0.0, qkv_bias=True)
    B, T, D = 2, cfg['context_length'], cfg['emb_dim']
    H = cfg['n_heads']
    hidden = 4 * D

    key = jax.random.PRNGKey(0)
    kx, *ks = jax.random.split(key, 13)

    def init(k, shape):
        return (0.02 * jax.random.normal(k, shape)).astype(jnp.float32)

    # parameter order matches the wrapper's unpacking order
    params = [
        jnp.ones((1, D), jnp.float32),   # ln1 scale
        jnp.zeros((1, D), jnp.float32),  # ln1 shift
        init(ks[0], (D, D)),  init(ks[1], (1, D)),            # W_query, b_query
        init(ks[2], (D, D)),  init(ks[3], (1, D)),            # W_key,   b_key
        init(ks[4], (D, D)),  init(ks[5], (1, D)),            # W_value, b_value
        init(ks[6], (D, D)),  init(ks[7], (1, D)),            # out_proj W, b
        jnp.ones((1, D), jnp.float32),   # ln2 scale
        jnp.zeros((1, D), jnp.float32),  # ln2 shift
        init(ks[8], (D, hidden)),  init(ks[9], (1, hidden)),  # ff layer 1
        init(ks[10], (hidden, D)), init(ks[11], (1, D)),      # ff layer 2
    ]

    x = jax.random.normal(kx, (B, T, D), jnp.float32)

    prepared = prepare_params(params, num_heads=H)   # one-time weight prep (hoisted)

    # tile=8 exercises the multi-tile flash path: 2 q tiles x 2 kv tiles per batch,
    # including one fully-masked (skipped) tile and a K/V-cache reuse across q rows.
    out = transformer_block(x, prepared, num_heads=H, tile=8)
    out = jax.block_until_ready(out)

    ref = transformer_block_ref(x, params, num_heads=H)
    assert out.shape == (B, T, D)
    # kernel uses bf16 matmul inputs with fp32 accumulation -> bf16-level tolerance
    assert jnp.allclose(out, ref, atol=2e-2, rtol=2e-2), "mismatch vs. JAX reference"

    print("KERNEL_OK")
</pallas_src>

<mosaic_0001>
module attributes {stable_mosaic.version = 11 : i64} {
  func.func @_tf_block_kernel(%arg0: i32, %arg1: i32, %arg2: i32, %arg3: memref<1x8x32xf32, #tpu.memory_space<vmem>>, %arg4: memref<1x32xf32, #tpu.memory_space<vmem>>, %arg5: memref<1x32xf32, #tpu.memory_space<vmem>>, %arg6: memref<32x32xbf16, #tpu.memory_space<vmem>>, %arg7: memref<1x32xf32, #tpu.memory_space<vmem>>, %arg8: memref<32x32xbf16, #tpu.memory_space<vmem>>, %arg9: memref<1x32xf32, #tpu.memory_space<vmem>>, %arg10: memref<32x32xbf16, #tpu.memory_space<vmem>>, %arg11: memref<1x32xf32, #tpu.memory_space<vmem>>, %arg12: memref<32x32xbf16, #tpu.memory_space<vmem>>, %arg13: memref<1x32xf32, #tpu.memory_space<vmem>>, %arg14: memref<1x32xf32, #tpu.memory_space<vmem>>, %arg15: memref<1x32xf32, #tpu.memory_space<vmem>>, %arg16: memref<32x128xbf16, #tpu.memory_space<vmem>>, %arg17: memref<1x128xf32, #tpu.memory_space<vmem>>, %arg18: memref<128x32xbf16, #tpu.memory_space<vmem>>, %arg19: memref<1x32xf32, #tpu.memory_space<vmem>>, %arg20: memref<1x8x32xf32, #tpu.memory_space<vmem>>, %arg21: memref<8x32xbf16, #tpu.memory_space<vmem>>, %arg22: memref<2x8x32xbf16, #tpu.memory_space<vmem>>, %arg23: memref<2x8x32xbf16, #tpu.memory_space<vmem>>, %arg24: memref<4x8x1xf32, #tpu.memory_space<vmem>>, %arg25: memref<4x8x1xf32, #tpu.memory_space<vmem>>, %arg26: memref<4x8x8xf32, #tpu.memory_space<vmem>>) attributes {dimension_semantics = [#tpu.dimension_semantics<parallel>, #tpu.dimension_semantics<arbitrary>, #tpu.dimension_semantics<arbitrary>], iteration_bounds = array<i64: 2, 2, 2>, scalar_prefetch = 0 : i64, scratch_operands = 6 : i64, tpu.core_type = #tpu.core_type<tc>, window_params = [{transform_indices = @transform_0, window_bounds = array<i64: 1, 8, 32>}, {pipeline_mode = #tpu.pipeline_mode<synchronous>, transform_indices = @transform_1, window_bounds = array<i64: 1, 32>}, {pipeline_mode = #tpu.pipeline_mode<synchronous>, transform_indices = @transform_2, window_bounds = array<i64: 1, 32>}, {pipeline_mode = #tpu.pipeline_mode<synchronous>, transform_indices = @transform_3, window_bounds = array<i64: 32, 32>}, {pipeline_mode = #tpu.pipeline_mode<synchronous>, transform_indices = @transform_4, window_bounds = array<i64: 1, 32>}, {pipeline_mode = #tpu.pipeline_mode<synchronous>, transform_indices = @transform_5, window_bounds = array<i64: 32, 32>}, {pipeline_mode = #tpu.pipeline_mode<synchronous>, transform_indices = @transform_6, window_bounds = array<i64: 1, 32>}, {pipeline_mode = #tpu.pipeline_mode<synchronous>, transform_indices = @transform_7, window_bounds = array<i64: 32, 32>}, {pipeline_mode = #tpu.pipeline_mode<synchronous>, transform_indices = @transform_8, window_bounds = array<i64: 1, 32>}, {pipeline_mode = #tpu.pipeline_mode<synchronous>, transform_indices = @transform_9, window_bounds = array<i64: 32, 32>}, {pipeline_mode = #tpu.pipeline_mode<synchronous>, transform_indices = @transform_10, window_bounds = array<i64: 1, 32>}, {pipeline_mode = #tpu.pipeline_mode<synchronous>, transform_indices = @transform_11, window_bounds = array<i64: 1, 32>}, {pipeline_mode = #tpu.pipeline_mode<synchronous>, transform_indices = @transform_12, window_bounds = array<i64: 1, 32>}, {pipeline_mode = #tpu.pipeline_mode<synchronous>, transform_indices = @transform_13, window_bounds = array<i64: 32, 128>}, {pipeline_mode = #tpu.pipeline_mode<synchronous>, transform_indices = @transform_14, window_bounds = array<i64: 1, 128>}, {pipeline_mode = #tpu.pipeline_mode<synchronous>, transform_indices = @transform_15, window_bounds = array<i64: 128, 32>}, {pipeline_mode = #tpu.pipeline_mode<synchronous>, transform_indices = @transform_16, window_bounds = array<i64: 1, 32>}, {transform_indices = @transform_17, window_bounds = array<i64: 1, 8, 32>}]} {
    %c0_i32 = arith.constant 0 : i32
    %0 = arith.cmpi eq, %arg2, %c0_i32 : i32
    %1 = arith.extui %0 : i1 to i32
    %c0_i32_0 = arith.constant 0 : i32
    %2 = arith.cmpi ne, %1, %c0_i32_0 : i32
    scf.if %2 {
      %cst = arith.constant -1.000000e+30 : f32
      %12 = vector.broadcast %cst : f32 to vector<4x8x1xf32>
      %c0 = arith.constant 0 : index
      %c0_4 = arith.constant 0 : index
      %c0_5 = arith.constant 0 : index
      %13 = vector.load %arg24[%c0, %c0_4, %c0_5] : memref<4x8x1xf32, #tpu.memory_space<vmem>>, vector<4x8x1xf32>
      tpu.vector_store %arg24[%c0, %c0_4, %c0_5], %12 {strides = array<i32>} : memref<4x8x1xf32, #tpu.memory_space<vmem>>, vector<4x8x1xf32>,
      %cst_6 = arith.constant 0.000000e+00 : f32
      %14 = vector.broadcast %cst_6 : f32 to vector<4x8x1xf32>
      %c0_7 = arith.constant 0 : index
      %c0_8 = arith.constant 0 : index
      %c0_9 = arith.constant 0 : index
      %15 = vector.load %arg25[%c0_7, %c0_8, %c0_9] : memref<4x8x1xf32, #tpu.memory_space<vmem>>, vector<4x8x1xf32>
      tpu.vector_store %arg25[%c0_7, %c0_8, %c0_9], %14 {strides = array<i32>} : memref<4x8x1xf32, #tpu.memory_space<vmem>>, vector<4x8x1xf32>,
      %cst_10 = arith.constant 0.000000e+00 : f32
      %16 = vector.broadcast %cst_10 : f32 to vector<4x8x8xf32>
      %c0_11 = arith.constant 0 : index
      %c0_12 = arith.constant 0 : index
      %c0_13 = arith.constant 0 : index
      %17 = vector.load %arg26[%c0_11, %c0_12, %c0_13] : memref<4x8x8xf32, #tpu.memory_space<vmem>>, vector<4x8x8xf32>
      tpu.vector_store %arg26[%c0_11, %c0_12, %c0_13], %16 {strides = array<i32>} : memref<4x8x8xf32, #tpu.memory_space<vmem>>, vector<4x8x8xf32>,
      %c0_14 = arith.constant 0 : index
      %c0_15 = arith.constant 0 : index
      %c0_16 = arith.constant 0 : index
      %18 = vector.load %arg3[%c0_14, %c0_15, %c0_16] : memref<1x8x32xf32, #tpu.memory_space<vmem>>, vector<1x8x32xf32>
      %19 = vector.shape_cast %18 : vector<1x8x32xf32> to vector<8x32xf32>
      %c0_17 = arith.constant 0 : index
      %c0_18 = arith.constant 0 : index
      %20 = vector.load %arg4[%c0_17, %c0_18] : memref<1x32xf32, #tpu.memory_space<vmem>>, vector<1x32xf32>
      %c0_19 = arith.constant 0 : index
      %c0_20 = arith.constant 0 : index
      %21 = vector.load %arg5[%c0_19, %c0_20] : memref<1x32xf32, #tpu.memory_space<vmem>>, vector<1x32xf32>
      %cst_21 = arith.constant dense<0.000000e+00> : vector<8xf32>
      %22 = vector.multi_reduction <add>, %19, %cst_21 [1] : vector<8x32xf32> to vector<8xf32>
      %23 = vector.shape_cast %22 : vector<8xf32> to vector<8x1xf32>
      %cst_22 = arith.constant 3.200000e+01 : f32
      %24 = vector.broadcast %cst_22 : f32 to vector<8x1xf32>
      %25 = arith.divf %23, %24 : vector<8x1xf32>
      %26 = vector.broadcast %25 : vector<8x1xf32> to vector<8x32xf32>
      %27 = arith.subf %19, %26 : vector<8x32xf32>
      %28 = arith.mulf %27, %27 : vector<8x32xf32>
      %cst_23 = arith.constant dense<0.000000e+00> : vector<8xf32>
      %29 = vector.multi_reduction <add>, %28, %cst_23 [1] : vector<8x32xf32> to vector<8xf32>
      %30 = vector.shape_cast %29 : vector<8xf32> to vector<8x1xf32>
      %cst_24 = arith.constant 3.200000e+01 : f32
      %31 = vector.broadcast %cst_24 : f32 to vector<8x1xf32>
      %32 = arith.divf %30, %31 : vector<8x1xf32>
      %33 = vector.broadcast %25 : vector<8x1xf32> to vector<8x32xf32>
      %34 = arith.subf %19, %33 : vector<8x32xf32>
      %cst_25 = arith.constant 9.99999974E-6 : f32
      %35 = vector.broadcast %cst_25 : f32 to vector<8x1xf32>
      %36 = arith.addf %32, %35 : vector<8x1xf32>
      %37 = math.rsqrt %36 : vector<8x1xf32>
      %38 = vector.broadcast %37 : vector<8x1xf32> to vector<8x32xf32>
      %39 = arith.mulf %34, %38 : vector<8x32xf32>
      %40 = vector.broadcast %20 : vector<1x32xf32> to vector<8x32xf32>
      %41 = arith.mulf %40, %39 : vector<8x32xf32>
      %42 = vector.broadcast %21 : vector<1x32xf32> to vector<8x32xf32>
      %43 = arith.addf %41, %42 : vector<8x32xf32>
      %44 = arith.truncf %43 : vector<8x32xf32> to vector<8x32xbf16>
      %c0_26 = arith.constant 0 : index
      %c0_27 = arith.constant 0 : index
      %45 = vector.load %arg6[%c0_26, %c0_27] : memref<32x32xbf16, #tpu.memory_space<vmem>>, vector<32x32xbf16>
      %cst_28 = arith.constant dense<0.000000e+00> : vector<8x32xf32>
      %46 = tpu.matmul %44, %45, %cst_28 {dimension_numbers = #tpu.dot_dimension_numbers<[1], [0], [0], [1], [0, 0, 1, 1], [], []>} : vector<8x32xbf16>, vector<32x32xbf16>, vector<8x32xf32> -> vector<8x32xf32>
      %c0_29 = arith.constant 0 : index
      %c0_30 = arith.constant 0 : index
      %47 = vector.load %arg7[%c0_29, %c0_30] : memref<1x32xf32, #tpu.memory_space<vmem>>, vector<1x32xf32>
      %48 = vector.broadcast %47 : vector<1x32xf32> to vector<8x32xf32>
      %49 = arith.addf %46, %48 : vector<8x32xf32>
      %50 = arith.truncf %49 : vector<8x32xf32> to vector<8x32xbf16>
      %c0_31 = arith.constant 0 : index
      %c0_32 = arith.constant 0 : index
      %51 = vector.load %arg21[%c0_31, %c0_32] : memref<8x32xbf16, #tpu.memory_space<vmem>>, vector<8x32xbf16>
      tpu.vector_store %arg21[%c0_31, %c0_32], %50 {strides = array<i32>} : memref<8x32xbf16, #tpu.memory_space<vmem>>, vector<8x32xbf16>,
      %c0_33 = arith.constant 0 : index
      %c0_34 = arith.constant 0 : index
      %52 = vector.load %arg8[%c0_33, %c0_34] : memref<32x32xbf16, #tpu.memory_space<vmem>>, vector<32x32xbf16>
      %cst_35 = arith.constant dense<0.000000e+00> : vector<8x32xf32>
      %53 = tpu.matmul %44, %52, %cst_35 {dimension_numbers = #tpu.dot_dimension_numbers<[1], [0], [0], [1], [0, 0, 1, 1], [], []>} : vector<8x32xbf16>, vector<32x32xbf16>, vector<8x32xf32> -> vector<8x32xf32>
      %c0_36 = arith.constant 0 : index
      %c0_37 = arith.constant 0 : index
      %54 = vector.load %arg9[%c0_36, %c0_37] : memref<1x32xf32, #tpu.memory_space<vmem>>, vector<1x32xf32>
      %55 = vector.broadcast %54 : vector<1x32xf32> to vector<8x32xf32>
      %56 = arith.addf %53, %55 : vector<8x32xf32>
      %57 = arith.truncf %56 : vector<8x32xf32> to vector<8x32xbf16>
      %58 = arith.index_cast %arg1 : i32 to index
      %c0_38 = arith.constant 0 : index
      %c0_39 = arith.constant 0 : index
      %59 = vector.load %arg22[%58, %c0_38, %c0_39] : memref<2x8x32xbf16, #tpu.memory_space<vmem>>, vector<1x8x32xbf16>
      %60 = vector.shape_cast %59 : vector<1x8x32xbf16> to vector<8x32xbf16>
      %61 = vector.shape_cast %57 : vector<8x32xbf16> to vector<1x8x32xbf16>
      tpu.vector_store %arg22[%58, %c0_38, %c0_39], %61 {strides = array<i32>} : memref<2x8x32xbf16, #tpu.memory_space<vmem>>, vector<1x8x32xbf16>,
      %c0_40 = arith.constant 0 : index
      %c0_41 = arith.constant 0 : index
      %62 = vector.load %arg10[%c0_40, %c0_41] : memref<32x32xbf16, #tpu.memory_space<vmem>>, vector<32x32xbf16>
      %cst_42 = arith.constant dense<0.000000e+00> : vector<8x32xf32>
      %63 = tpu.matmul %44, %62, %cst_42 {dimension_numbers = #tpu.dot_dimension_numbers<[1], [0], [0], [1], [0, 0, 1, 1], [], []>} : vector<8x32xbf16>, vector<32x32xbf16>, vector<8x32xf32> -> vector<8x32xf32>
      %c0_43 = arith.constant 0 : index
      %c0_44 = arith.constant 0 : index
      %64 = vector.load %arg11[%c0_43, %c0_44] : memref<1x32xf32, #tpu.memory_space<vmem>>, vector<1x32xf32>
      %65 = vector.broadcast %64 : vector<1x32xf32> to vector<8x32xf32>
      %66 = arith.addf %63, %65 : vector<8x32xf32>
      %67 = arith.truncf %66 : vector<8x32xf32> to vector<8x32xbf16>
      %68 = arith.index_cast %arg1 : i32 to index
      %c0_45 = arith.constant 0 : index
      %c0_46 = arith.constant 0 : index
      %69 = vector.load %arg23[%68, %c0_45, %c0_46] : memref<2x8x32xbf16, #tpu.memory_space<vmem>>, vector<1x8x32xbf16>
      %70 = vector.shape_cast %69 : vector<1x8x32xbf16> to vector<8x32xbf16>
      %71 = vector.shape_cast %67 : vector<8x32xbf16> to vector<1x8x32xbf16>
      tpu.vector_store %arg23[%68, %c0_45, %c0_46], %71 {strides = array<i32>} : memref<2x8x32xbf16, #tpu.memory_space<vmem>>, vector<1x8x32xbf16>,
    } else {
    }
    %3 = arith.cmpi slt, %arg2, %arg1 : i32
    %4 = arith.extui %3 : i1 to i32
    %c0_i32_1 = arith.constant 0 : i32
    %5 = arith.cmpi ne, %4, %c0_i32_1 : i32
    scf.if %5 {
      %c0 = arith.constant 0 : index
      %c0_4 = arith.constant 0 : index
      %12 = vector.load %arg21[%c0, %c0_4] : memref<8x32xbf16, #tpu.memory_space<vmem>>, vector<8x32xbf16>
      %13 = vector.shape_cast %12 : vector<8x32xbf16> to vector<8x4x8xbf16>
      %14 = arith.index_cast %arg2 : i32 to index
      %c0_5 = arith.constant 0 : index
      %c0_6 = arith.constant 0 : index
      %15 = vector.load %arg22[%14, %c0_5, %c0_6] : memref<2x8x32xbf16, #tpu.memory_space<vmem>>, vector<1x8x32xbf16>
      %16 = vector.shape_cast %15 : vector<1x8x32xbf16> to vector<8x32xbf16>
      %17 = vector.shape_cast %16 : vector<8x32xbf16> to vector<8x4x8xbf16>
      %18 = arith.index_cast %arg2 : i32 to index
      %c0_7 = arith.constant 0 : index
      %c0_8 = arith.constant 0 : index
      %19 = vector.load %arg23[%18, %c0_7, %c0_8] : memref<2x8x32xbf16, #tpu.memory_space<vmem>>, vector<1x8x32xbf16>
      %20 = vector.shape_cast %19 : vector<1x8x32xbf16> to vector<8x32xbf16>
      %21 = vector.shape_cast %20 : vector<8x32xbf16> to vector<8x4x8xbf16>
      "tpu.trace_start"() <{level = 10 : i32, message = "qhd,khd->hqk"}> : () -> ()
      %cst = arith.constant dense<0.000000e+00> : vector<4x8x8xf32>
      %22 = tpu.matmul %13, %17, %cst {dimension_numbers = #tpu.dot_dimension_numbers<[2], [2], [0], [0], [0, 1, 0, 0, 1, 0], [1], [1]>} : vector<8x4x8xbf16>, vector<8x4x8xbf16>, vector<4x8x8xf32> -> vector<4x8x8xf32>
      "tpu.trace_stop"() : () -> ()
      %c0_9 = arith.constant 0 : index
      %c0_10 = arith.constant 0 : index
      %c0_11 = arith.constant 0 : index
      %23 = vector.load %arg24[%c0_9, %c0_10, %c0_11] : memref<4x8x1xf32, #tpu.memory_space<vmem>>, vector<4x8x1xf32>
      %cst_12 = arith.constant dense<0xFF800000> : vector<4x8xf32>
      %24 = vector.multi_reduction <maximumf>, %22, %cst_12 [2] : vector<4x8x8xf32> to vector<4x8xf32>
      %25 = vector.shape_cast %24 : vector<4x8xf32> to vector<4x8x1xf32>
      %26 = arith.maximumf %23, %25 : vector<4x8x1xf32>
      %27 = arith.subf %23, %26 : vector<4x8x1xf32>
      %28 = math.exp %27 : vector<4x8x1xf32>
      %29 = vector.broadcast %26 : vector<4x8x1xf32> to vector<4x8x8xf32>
      %30 = arith.subf %22, %29 : vector<4x8x8xf32>
      %31 = math.exp %30 : vector<4x8x8xf32>
      %c0_13 = arith.constant 0 : index
      %c0_14 = arith.constant 0 : index
      %c0_15 = arith.constant 0 : index
      %32 = vector.load %arg25[%c0_13, %c0_14, %c0_15] : memref<4x8x1xf32, #tpu.memory_space<vmem>>, vector<4x8x1xf32>
      %33 = arith.mulf %28, %32 : vector<4x8x1xf32>
      %cst_16 = arith.constant dense<0.000000e+00> : vector<4x8xf32>
      %34 = vector.multi_reduction <add>, %31, %cst_16 [2] : vector<4x8x8xf32> to vector<4x8xf32>
      %35 = vector.shape_cast %34 : vector<4x8xf32> to vector<4x8x1xf32>
      %36 = arith.addf %33, %35 : vector<4x8x1xf32>
      %c0_17 = arith.constant 0 : index
      %c0_18 = arith.constant 0 : index
      %c0_19 = arith.constant 0 : index
      %37 = vector.load %arg25[%c0_17, %c0_18, %c0_19] : memref<4x8x1xf32, #tpu.memory_space<vmem>>, vector<4x8x1xf32>
      tpu.vector_store %arg25[%c0_17, %c0_18, %c0_19], %36 {strides = array<i32>} : memref<4x8x1xf32, #tpu.memory_space<vmem>>, vector<4x8x1xf32>,
      %c0_20 = arith.constant 0 : index
      %c0_21 = arith.constant 0 : index
      %c0_22 = arith.constant 0 : index
      %38 = vector.load %arg26[%c0_20, %c0_21, %c0_22] : memref<4x8x8xf32, #tpu.memory_space<vmem>>, vector<4x8x8xf32>
      %39 = vector.broadcast %28 : vector<4x8x1xf32> to vector<4x8x8xf32>
      %40 = arith.mulf %39, %38 : vector<4x8x8xf32>
      %41 = arith.truncf %31 : vector<4x8x8xf32> to vector<4x8x8xbf16>
      "tpu.trace_start"() <{level = 10 : i32, message = "hqk,khd->hqd"}> : () -> ()
      %cst_23 = arith.constant dense<0.000000e+00> : vector<4x8x8xf32>
      %42 = tpu.matmul %41, %21, %cst_23 {dimension_numbers = #tpu.dot_dimension_numbers<[2], [0], [1], [2], [0, 0, 0, 1, 1, 2], [0], [1]>} : vector<4x8x8xbf16>, vector<8x4x8xbf16>, vector<4x8x8xf32> -> vector<4x8x8xf32>
      "tpu.trace_stop"() : () -> ()
      %43 = arith.addf %40, %42 : vector<4x8x8xf32>
      %c0_24 = arith.constant 0 : index
      %c0_25 = arith.constant 0 : index
      %c0_26 = arith.constant 0 : index
      %44 = vector.load %arg26[%c0_24, %c0_25, %c0_26] : memref<4x8x8xf32, #tpu.memory_space<vmem>>, vector<4x8x8xf32>
      tpu.vector_store %arg26[%c0_24, %c0_25, %c0_26], %43 {strides = array<i32>} : memref<4x8x8xf32, #tpu.memory_space<vmem>>, vector<4x8x8xf32>,
      %c0_27 = arith.constant 0 : index
      %c0_28 = arith.constant 0 : index
      %c0_29 = arith.constant 0 : index
      %45 = vector.load %arg24[%c0_27, %c0_28, %c0_29] : memref<4x8x1xf32, #tpu.memory_space<vmem>>, vector<4x8x1xf32>
      tpu.vector_store %arg24[%c0_27, %c0_28, %c0_29], %26 {strides = array<i32>} : memref<4x8x1xf32, #tpu.memory_space<vmem>>, vector<4x8x1xf32>,
    } else {
    }
    %6 = arith.cmpi eq, %arg2, %arg1 : i32
    %7 = arith.extui %6 : i1 to i32
    %c0_i32_2 = arith.constant 0 : i32
    %8 = arith.cmpi ne, %7, %c0_i32_2 : i32
    scf.if %8 {
      %c0 = arith.constant 0 : index
      %c0_4 = arith.constant 0 : index
      %12 = vector.load %arg21[%c0, %c0_4] : memref<8x32xbf16, #tpu.memory_space<vmem>>, vector<8x32xbf16>
      %13 = vector.shape_cast %12 : vector<8x32xbf16> to vector<8x4x8xbf16>
      %14 = arith.index_cast %arg2 : i32 to index
      %c0_5 = arith.constant 0 : index
      %c0_6 = arith.constant 0 : index
      %15 = vector.load %arg22[%14, %c0_5, %c0_6] : memref<2x8x32xbf16, #tpu.memory_space<vmem>>, vector<1x8x32xbf16>
      %16 = vector.shape_cast %15 : vector<1x8x32xbf16> to vector<8x32xbf16>
      %17 = vector.shape_cast %16 : vector<8x32xbf16> to vector<8x4x8xbf16>
      %18 = arith.index_cast %arg2 : i32 to index
      %c0_7 = arith.constant 0 : index
      %c0_8 = arith.constant 0 : index
      %19 = vector.load %arg23[%18, %c0_7, %c0_8] : memref<2x8x32xbf16, #tpu.memory_space<vmem>>, vector<1x8x32xbf16>
      %20 = vector.shape_cast %19 : vector<1x8x32xbf16> to vector<8x32xbf16>
      %21 = vector.shape_cast %20 : vector<8x32xbf16> to vector<8x4x8xbf16>
      "tpu.trace_start"() <{level = 10 : i32, message = "qhd,khd->hqk"}> : () -> ()
      %cst = arith.constant dense<0.000000e+00> : vector<4x8x8xf32>
      %22 = tpu.matmul %13, %17, %cst {dimension_numbers = #tpu.dot_dimension_numbers<[2], [2], [0], [0], [0, 1, 0, 0, 1, 0], [1], [1]>} : vector<8x4x8xbf16>, vector<8x4x8xbf16>, vector<4x8x8xf32> -> vector<4x8x8xf32>
      "tpu.trace_stop"() : () -> ()
      %23 = tpu.iota {dimensions = array<i32: 1>} : vector<1x8x8xi32>
      %24 = tpu.iota {dimensions = array<i32: 2>} : vector<1x8x8xi32>
      %25 = arith.cmpi sgt, %24, %23 : vector<1x8x8xi32>
      %cst_9 = arith.constant -1.000000e+30 : f32
      %26 = vector.shape_cast %25 : vector<1x8x8xi1> to vector<1x8x8xi1>
      %27 = vector.broadcast %26 : vector<1x8x8xi1> to vector<4x8x8xi1>
      %28 = vector.broadcast %cst_9 : f32 to vector<4x8x8xf32>
      %29 = arith.select %27, %28, %22 : vector<4x8x8xi1>, vector<4x8x8xf32>
      %c0_10 = arith.constant 0 : index
      %c0_11 = arith.constant 0 : index
      %c0_12 = arith.constant 0 : index
      %30 = vector.load %arg24[%c0_10, %c0_11, %c0_12] : memref<4x8x1xf32, #tpu.memory_space<vmem>>, vector<4x8x1xf32>
      %cst_13 = arith.constant dense<0xFF800000> : vector<4x8xf32>
      %31 = vector.multi_reduction <maximumf>, %29, %cst_13 [2] : vector<4x8x8xf32> to vector<4x8xf32>
      %32 = vector.shape_cast %31 : vector<4x8xf32> to vector<4x8x1xf32>
      %33 = arith.maximumf %30, %32 : vector<4x8x1xf32>
      %34 = arith.subf %30, %33 : vector<4x8x1xf32>
      %35 = math.exp %34 : vector<4x8x1xf32>
      %36 = vector.broadcast %33 : vector<4x8x1xf32> to vector<4x8x8xf32>
      %37 = arith.subf %29, %36 : vector<4x8x8xf32>
      %38 = math.exp %37 : vector<4x8x8xf32>
      %c0_14 = arith.constant 0 : index
      %c0_15 = arith.constant 0 : index
      %c0_16 = arith.constant 0 : index
      %39 = vector.load %arg25[%c0_14, %c0_15, %c0_16] : memref<4x8x1xf32, #tpu.memory_space<vmem>>, vector<4x8x1xf32>
      %40 = arith.mulf %35, %39 : vector<4x8x1xf32>
      %cst_17 = arith.constant dense<0.000000e+00> : vector<4x8xf32>
      %41 = vector.multi_reduction <add>, %38, %cst_17 [2] : vector<4x8x8xf32> to vector<4x8xf32>
      %42 = vector.shape_cast %41 : vector<4x8xf32> to vector<4x8x1xf32>
      %43 = arith.addf %40, %42 : vector<4x8x1xf32>
      %c0_18 = arith.constant 0 : index
      %c0_19 = arith.constant 0 : index
      %c0_20 = arith.constant 0 : index
      %44 = vector.load %arg25[%c0_18, %c0_19, %c0_20] : memref<4x8x1xf32, #tpu.memory_space<vmem>>, vector<4x8x1xf32>
      tpu.vector_store %arg25[%c0_18, %c0_19, %c0_20], %43 {strides = array<i32>} : memref<4x8x1xf32, #tpu.memory_space<vmem>>, vector<4x8x1xf32>,
      %c0_21 = arith.constant 0 : index
      %c0_22 = arith.constant 0 : index
      %c0_23 = arith.constant 0 : index
      %45 = vector.load %arg26[%c0_21, %c0_22, %c0_23] : memref<4x8x8xf32, #tpu.memory_space<vmem>>, vector<4x8x8xf32>
      %46 = vector.broadcast %35 : vector<4x8x1xf32> to vector<4x8x8xf32>
      %47 = arith.mulf %46, %45 : vector<4x8x8xf32>
      %48 = arith.truncf %38 : vector<4x8x8xf32> to vector<4x8x8xbf16>
      "tpu.trace_start"() <{level = 10 : i32, message = "hqk,khd->hqd"}> : () -> ()
      %cst_24 = arith.constant dense<0.000000e+00> : vector<4x8x8xf32>
      %49 = tpu.matmul %48, %21, %cst_24 {dimension_numbers = #tpu.dot_dimension_numbers<[2], [0], [1], [2], [0, 0, 0, 1, 1, 2], [0], [1]>} : vector<4x8x8xbf16>, vector<8x4x8xbf16>, vector<4x8x8xf32> -> vector<4x8x8xf32>
      "tpu.trace_stop"() : () -> ()
      %50 = arith.addf %47, %49 : vector<4x8x8xf32>
      %c0_25 = arith.constant 0 : index
      %c0_26 = arith.constant 0 : index
      %c0_27 = arith.constant 0 : index
      %51 = vector.load %arg26[%c0_25, %c0_26, %c0_27] : memref<4x8x8xf32, #tpu.memory_space<vmem>>, vector<4x8x8xf32>
      tpu.vector_store %arg26[%c0_25, %c0_26, %c0_27], %50 {strides = array<i32>} : memref<4x8x8xf32, #tpu.memory_space<vmem>>, vector<4x8x8xf32>,
      %c0_28 = arith.constant 0 : index
      %c0_29 = arith.constant 0 : index
      %c0_30 = arith.constant 0 : index
      %52 = vector.load %arg24[%c0_28, %c0_29, %c0_30] : memref<4x8x1xf32, #tpu.memory_space<vmem>>, vector<4x8x1xf32>
      tpu.vector_store %arg24[%c0_28, %c0_29, %c0_30], %33 {strides = array<i32>} : memref<4x8x1xf32, #tpu.memory_space<vmem>>, vector<4x8x1xf32>,
    } else {
    }
    %c1_i32 = arith.constant 1 : i32
    %9 = arith.cmpi eq, %arg2, %c1_i32 : i32
    %10 = arith.extui %9 : i1 to i32
    %c0_i32_3 = arith.constant 0 : i32
    %11 = arith.cmpi ne, %10, %c0_i32_3 : i32
    scf.if %11 {
      %c0 = arith.constant 0 : index
      %c0_4 = arith.constant 0 : index
      %c0_5 = arith.constant 0 : index
      %12 = vector.load %arg25[%c0, %c0_4, %c0_5] : memref<4x8x1xf32, #tpu.memory_space<vmem>>, vector<4x8x1xf32>
      %13 = tpu.reciprocal %12 {approx = true} : vector<4x8x1xf32> -> vector<4x8x1xf32>
      %c0_6 = arith.constant 0 : index
      %c0_7 = arith.constant 0 : index
      %c0_8 = arith.constant 0 : index
      %14 = vector.load %arg26[%c0_6, %c0_7, %c0_8] : memref<4x8x8xf32, #tpu.memory_space<vmem>>, vector<4x8x8xf32>
      %15 = vector.broadcast %13 : vector<4x8x1xf32> to vector<4x8x8xf32>
      %16 = arith.mulf %14, %15 : vector<4x8x8xf32>
      %17 = arith.truncf %16 : vector<4x8x8xf32> to vector<4x8x8xbf16>
      %18 = tpu.transpose %17, [1, 0, 2] : vector<4x8x8xbf16> -> vector<8x4x8xbf16>
      %19 = vector.shape_cast %18 : vector<8x4x8xbf16> to vector<8x32xbf16>
      %c0_9 = arith.constant 0 : index
      %c0_10 = arith.constant 0 : index
      %20 = vector.load %arg12[%c0_9, %c0_10] : memref<32x32xbf16, #tpu.memory_space<vmem>>, vector<32x32xbf16>
      %cst = arith.constant dense<0.000000e+00> : vector<8x32xf32>
      %21 = tpu.matmul %19, %20, %cst {dimension_numbers = #tpu.dot_dimension_numbers<[1], [0], [0], [1], [0, 0, 1, 1], [], []>} : vector<8x32xbf16>, vector<32x32xbf16>, vector<8x32xf32> -> vector<8x32xf32>
      %c0_11 = arith.constant 0 : index
      %c0_12 = arith.constant 0 : index
      %22 = vector.load %arg13[%c0_11, %c0_12] : memref<1x32xf32, #tpu.memory_space<vmem>>, vector<1x32xf32>
      %23 = vector.broadcast %22 : vector<1x32xf32> to vector<8x32xf32>
      %24 = arith.addf %21, %23 : vector<8x32xf32>
      %c0_13 = arith.constant 0 : index
      %c0_14 = arith.constant 0 : index
      %c0_15 = arith.constant 0 : index
      %25 = vector.load %arg3[%c0_13, %c0_14, %c0_15] : memref<1x8x32xf32, #tpu.memory_space<vmem>>, vector<1x8x32xf32>
      %26 = vector.shape_cast %25 : vector<1x8x32xf32> to vector<8x32xf32>
      %27 = arith.addf %26, %24 : vector<8x32xf32>
      %c0_16 = arith.constant 0 : index
      %c0_17 = arith.constant 0 : index
      %28 = vector.load %arg14[%c0_16, %c0_17] : memref<1x32xf32, #tpu.memory_space<vmem>>, vector<1x32xf32>
      %c0_18 = arith.constant 0 : index
      %c0_19 = arith.constant 0 : index
      %29 = vector.load %arg15[%c0_18, %c0_19] : memref<1x32xf32, #tpu.memory_space<vmem>>, vector<1x32xf32>
      %cst_20 = arith.constant dense<0.000000e+00> : vector<8xf32>
      %30 = vector.multi_reduction <add>, %27, %cst_20 [1] : vector<8x32xf32> to vector<8xf32>
      %31 = vector.shape_cast %30 : vector<8xf32> to vector<8x1xf32>
      %cst_21 = arith.constant 3.200000e+01 : f32
      %32 = vector.broadcast %cst_21 : f32 to vector<8x1xf32>
      %33 = arith.divf %31, %32 : vector<8x1xf32>
      %34 = vector.broadcast %33 : vector<8x1xf32> to vector<8x32xf32>
      %35 = arith.subf %27, %34 : vector<8x32xf32>
      %36 = arith.mulf %35, %35 : vector<8x32xf32>
      %cst_22 = arith.constant dense<0.000000e+00> : vector<8xf32>
      %37 = vector.multi_reduction <add>, %36, %cst_22 [1] : vector<8x32xf32> to vector<8xf32>
      %38 = vector.shape_cast %37 : vector<8xf32> to vector<8x1xf32>
      %cst_23 = arith.constant 3.200000e+01 : f32
      %39 = vector.broadcast %cst_23 : f32 to vector<8x1xf32>
      %40 = arith.divf %38, %39 : vector<8x1xf32>
      %41 = vector.broadcast %33 : vector<8x1xf32> to vector<8x32xf32>
      %42 = arith.subf %27, %41 : vector<8x32xf32>
      %cst_24 = arith.constant 9.99999974E-6 : f32
      %43 = vector.broadcast %cst_24 : f32 to vector<8x1xf32>
      %44 = arith.addf %40, %43 : vector<8x1xf32>
      %45 = math.rsqrt %44 : vector<8x1xf32>
      %46 = vector.broadcast %45 : vector<8x1xf32> to vector<8x32xf32>
      %47 = arith.mulf %42, %46 : vector<8x32xf32>
      %48 = vector.broadcast %28 : vector<1x32xf32> to vector<8x32xf32>
      %49 = arith.mulf %48, %47 : vector<8x32xf32>
      %50 = vector.broadcast %29 : vector<1x32xf32> to vector<8x32xf32>
      %51 = arith.addf %49, %50 : vector<8x32xf32>
      %52 = arith.truncf %51 : vector<8x32xf32> to vector<8x32xbf16>
      %c0_25 = arith.constant 0 : index
      %c0_26 = arith.constant 0 : index
      %53 = vector.load %arg16[%c0_25, %c0_26] : memref<32x128xbf16, #tpu.memory_space<vmem>>, vector<32x128xbf16>
      %cst_27 = arith.constant dense<0.000000e+00> : vector<8x128xf32>
      %54 = tpu.matmul %52, %53, %cst_27 {dimension_numbers = #tpu.dot_dimension_numbers<[1], [0], [0], [1], [0, 0, 1, 1], [], []>} : vector<8x32xbf16>, vector<32x128xbf16>, vector<8x128xf32> -> vector<8x128xf32>
      %c0_28 = arith.constant 0 : index
      %c0_29 = arith.constant 0 : index
      %55 = vector.load %arg17[%c0_28, %c0_29] : memref<1x128xf32, #tpu.memory_space<vmem>>, vector<1x128xf32>
      %56 = vector.broadcast %55 : vector<1x128xf32> to vector<8x128xf32>
      %57 = arith.addf %54, %56 : vector<8x128xf32>
      %cst_30 = arith.constant 5.000000e-01 : f32
      %58 = vector.broadcast %cst_30 : f32 to vector<8x128xf32>
      %59 = arith.mulf %58, %57 : vector<8x128xf32>
      %60 = arith.mulf %57, %57 : vector<8x128xf32>
      %61 = arith.mulf %57, %60 : vector<8x128xf32>
      %cst_31 = arith.constant 4.471500e-02 : f32
      %62 = vector.broadcast %cst_31 : f32 to vector<8x128xf32>
      %63 = arith.mulf %62, %61 : vector<8x128xf32>
      %64 = arith.addf %57, %63 : vector<8x128xf32>
      %cst_32 = arith.constant 0.797884583 : f32
      %65 = vector.broadcast %cst_32 : f32 to vector<8x128xf32>
      %66 = arith.mulf %65, %64 : vector<8x128xf32>
      %67 = math.tanh %66 : vector<8x128xf32>
      %cst_33 = arith.constant 1.000000e+00 : f32
      %68 = vector.broadcast %cst_33 : f32 to vector<8x128xf32>
      %69 = arith.addf %68, %67 : vector<8x128xf32>
      %70 = arith.mulf %59, %69 : vector<8x128xf32>
      %71 = arith.truncf %70 : vector<8x128xf32> to vector<8x128xbf16>
      %c0_34 = arith.constant 0 : index
      %c0_35 = arith.constant 0 : index
      %72 = vector.load %arg18[%c0_34, %c0_35] : memref<128x32xbf16, #tpu.memory_space<vmem>>, vector<128x32xbf16>
      %cst_36 = arith.constant dense<0.000000e+00> : vector<8x32xf32>
      %73 = tpu.matmul %71, %72, %cst_36 {dimension_numbers = #tpu.dot_dimension_numbers<[1], [0], [0], [1], [0, 0, 1, 1], [], []>} : vector<8x128xbf16>, vector<128x32xbf16>, vector<8x32xf32> -> vector<8x32xf32>
      %c0_37 = arith.constant 0 : index
      %c0_38 = arith.constant 0 : index
      %74 = vector.load %arg19[%c0_37, %c0_38] : memref<1x32xf32, #tpu.memory_space<vmem>>, vector<1x32xf32>
      %75 = vector.broadcast %74 : vector<1x32xf32> to vector<8x32xf32>
      %76 = arith.addf %73, %75 : vector<8x32xf32>
      %77 = arith.addf %27, %76 : vector<8x32xf32>
      %c0_39 = arith.constant 0 : index
      %c0_40 = arith.constant 0 : index
      %c0_41 = arith.constant 0 : index
      %78 = vector.load %arg20[%c0_39, %c0_40, %c0_41] : memref<1x8x32xf32, #tpu.memory_space<vmem>>, vector<1x8x32xf32>
      %79 = vector.shape_cast %78 : vector<1x8x32xf32> to vector<8x32xf32>
      %80 = vector.shape_cast %77 : vector<8x32xf32> to vector<1x8x32xf32>
      tpu.vector_store %arg20[%c0_39, %c0_40, %c0_41], %80 {strides = array<i32>} : memref<1x8x32xf32, #tpu.memory_space<vmem>>, vector<1x8x32xf32>,
    } else {
    }
    return
  }
  func.func @transform_0(%arg0: i32, %arg1: i32, %arg2: i32) -> (i32, i32, i32) {
    %c0_i32 = arith.constant 0 : i32
    %c0_i32_0 = arith.constant 0 : i32
    return %arg0, %arg1, %c0_i32 : i32, i32, i32
  }
  func.func @transform_1(%arg0: i32, %arg1: i32, %arg2: i32) -> (i32, i32) {
    %c0_i32 = arith.constant 0 : i32
    %c0_i32_0 = arith.constant 0 : i32
    %c0_i32_1 = arith.constant 0 : i32
    return %c0_i32, %c0_i32_0 : i32, i32
  }
  func.func @transform_2(%arg0: i32, %arg1: i32, %arg2: i32) -> (i32, i32) {
    %c0_i32 = arith.constant 0 : i32
    %c0_i32_0 = arith.constant 0 : i32
    %c0_i32_1 = arith.constant 0 : i32
    return %c0_i32, %c0_i32_0 : i32, i32
  }
  func.func @transform_3(%arg0: i32, %arg1: i32, %arg2: i32) -> (i32, i32) {
    %c0_i32 = arith.constant 0 : i32
    %c0_i32_0 = arith.constant 0 : i32
    %c0_i32_1 = arith.constant 0 : i32
    return %c0_i32, %c0_i32_0 : i32, i32
  }
  func.func @transform_4(%arg0: i32, %arg1: i32, %arg2: i32) -> (i32, i32) {
    %c0_i32 = arith.constant 0 : i32
    %c0_i32_0 = arith.constant 0 : i32
    %c0_i32_1 = arith.constant 0 : i32
    return %c0_i32, %c0_i32_0 : i32, i32
  }
  func.func @transform_5(%arg0: i32, %arg1: i32, %arg2: i32) -> (i32, i32) {
    %c0_i32 = arith.constant 0 : i32
    %c0_i32_0 = arith.constant 0 : i32
    %c0_i32_1 = arith.constant 0 : i32
    return %c0_i32, %c0_i32_0 : i32, i32
  }
  func.func @transform_6(%arg0: i32, %arg1: i32, %arg2: i32) -> (i32, i32) {
    %c0_i32 = arith.constant 0 : i32
    %c0_i32_0 = arith.constant 0 : i32
    %c0_i32_1 = arith.constant 0 : i32
    return %c0_i32, %c0_i32_0 : i32, i32
  }
  func.func @transform_7(%arg0: i32, %arg1: i32, %arg2: i32) -> (i32, i32) {
    %c0_i32 = arith.constant 0 : i32
    %c0_i32_0 = arith.constant 0 : i32
    %c0_i32_1 = arith.constant 0 : i32
    return %c0_i32, %c0_i32_0 : i32, i32
  }
  func.func @transform_8(%arg0: i32, %arg1: i32, %arg2: i32) -> (i32, i32) {
    %c0_i32 = arith.constant 0 : i32
    %c0_i32_0 = arith.constant 0 : i32
    %c0_i32_1 = arith.constant 0 : i32
    return %c0_i32, %c0_i32_0 : i32, i32
  }
  func.func @transform_9(%arg0: i32, %arg1: i32, %arg2: i32) -> (i32, i32) {
    %c0_i32 = arith.constant 0 : i32
    %c0_i32_0 = arith.constant 0 : i32
    %c0_i32_1 = arith.constant 0 : i32
    return %c0_i32, %c0_i32_0 : i32, i32
  }
  func.func @transform_10(%arg0: i32, %arg1: i32, %arg2: i32) -> (i32, i32) {
    %c0_i32 = arith.constant 0 : i32
    %c0_i32_0 = arith.constant 0 : i32
    %c0_i32_1 = arith.constant 0 : i32
    return %c0_i32, %c0_i32_0 : i32, i32
  }
  func.func @transform_11(%arg0: i32, %arg1: i32, %arg2: i32) -> (i32, i32) {
    %c0_i32 = arith.constant 0 : i32
    %c0_i32_0 = arith.constant 0 : i32
    %c0_i32_1 = arith.constant 0 : i32
    return %c0_i32, %c0_i32_0 : i32, i32
  }
  func.func @transform_12(%arg0: i32, %arg1: i32, %arg2: i32) -> (i32, i32) {
    %c0_i32 = arith.constant 0 : i32
    %c0_i32_0 = arith.constant 0 : i32
    %c0_i32_1 = arith.constant 0 : i32
    return %c0_i32, %c0_i32_0 : i32, i32
  }
  func.func @transform_13(%arg0: i32, %arg1: i32, %arg2: i32) -> (i32, i32) {
    %c0_i32 = arith.constant 0 : i32
    %c0_i32_0 = arith.constant 0 : i32
    %c0_i32_1 = arith.constant 0 : i32
    return %c0_i32, %c0_i32_0 : i32, i32
  }
  func.func @transform_14(%arg0: i32, %arg1: i32, %arg2: i32) -> (i32, i32) {
    %c0_i32 = arith.constant 0 : i32
    %c0_i32_0 = arith.constant 0 : i32
    %c0_i32_1 = arith.constant 0 : i32
    return %c0_i32, %c0_i32_0 : i32, i32
  }
  func.func @transform_15(%arg0: i32, %arg1: i32, %arg2: i32) -> (i32, i32) {
    %c0_i32 = arith.constant 0 : i32
    %c0_i32_0 = arith.constant 0 : i32
    %c0_i32_1 = arith.constant 0 : i32
    return %c0_i32, %c0_i32_0 : i32, i32
  }
  func.func @transform_16(%arg0: i32, %arg1: i32, %arg2: i32) -> (i32, i32) {
    %c0_i32 = arith.constant 0 : i32
    %c0_i32_0 = arith.constant 0 : i32
    %c0_i32_1 = arith.constant 0 : i32
    return %c0_i32, %c0_i32_0 : i32, i32
  }
  func.func @transform_17(%arg0: i32, %arg1: i32, %arg2: i32) -> (i32, i32, i32) {
    %c0_i32 = arith.constant 0 : i32
    %c0_i32_0 = arith.constant 0 : i32
    return %arg0, %arg1, %c0_i32 : i32, i32, i32
  }
}

</mosaic_0001>

<llo_original>
// kernel: tpu_custom_call.1
$region0: #{tpu_custom_call.1}
  #allocation0 [shape = 'u32[]', space=smem, size = 0x4, offset = 0x4, fixed_abs, tag = 'smem constant byte address 0x4 - core index']
  #allocation1 [shape = 'u32[72,128]{1,0:T(1,128)}', space=vmem, size = 0x9000, scoped, tag = 'internal scratch']
  #allocation2 [shape = 'bf16[8,32]{1,0:T(8,128)(2,1)}', space=vmem, size = 0x800, scoped, tag = 'scratch operand']
  #allocation3 [shape = 'bf16[2,8,32]{2,1,0:T(8,128)(2,1)}', space=vmem, size = 0x1000, scoped, tag = 'scratch operand']
  #allocation4 [shape = 'bf16[2,8,32]{2,1,0:T(8,128)(2,1)}', space=vmem, size = 0x1000, scoped, tag = 'scratch operand']
  #allocation5 [shape = 'f32[4,8,1]{2,1,0:T(8,128)}', space=vmem, size = 0x4000, scoped, tag = 'scratch operand']
  #allocation6 [shape = 'f32[4,8,1]{2,1,0:T(8,128)}', space=vmem, size = 0x4000, scoped, tag = 'scratch operand']
  #allocation7 [shape = 'f32[4,8,8]{2,1,0:T(8,128)}', space=vmem, size = 0x4000, scoped, tag = 'scratch operand']
  %s0 = inlined_call_operand.vmem [shape: f32[2,16,32], index: 0, kind: input, shape index: {}]
  %s1 = inlined_call_operand.hbm [shape: f32[1,32], index: 1, kind: input, shape index: {}]
  %s2 = inlined_call_operand.vmem [shape: f32[1,32], index: 2, kind: input, shape index: {}]
  %s3 = inlined_call_operand.vmem [shape: bf16[32,32], index: 3, kind: input, shape index: {}]
  %s4 = inlined_call_operand.vmem [shape: f32[1,32], index: 4, kind: input, shape index: {}]
  %s5 = inlined_call_operand.vmem [shape: bf16[32,32], index: 5, kind: input, shape index: {}]
  %s6 = inlined_call_operand.vmem [shape: f32[1,32], index: 6, kind: input, shape index: {}]
  %s7 = inlined_call_operand.vmem [shape: bf16[32,32], index: 7, kind: input, shape index: {}]
  %s8 = inlined_call_operand.vmem [shape: f32[1,32], index: 8, kind: input, shape index: {}]
  %s9 = inlined_call_operand.hbm [shape: bf16[32,32], index: 9, kind: input, shape index: {}]
  %s10 = inlined_call_operand.vmem [shape: f32[1,32], index: 10, kind: input, shape index: {}]
  %s11 = inlined_call_operand.vmem [shape: f32[1,32], index: 11, kind: input, shape index: {}]
  %s12 = inlined_call_operand.vmem [shape: f32[1,32], index: 12, kind: input, shape index: {}]
  %s13 = inlined_call_operand.hbm [shape: bf16[32,128], index: 13, kind: input, shape index: {}]
  %s14 = inlined_call_operand.vmem [shape: f32[1,128], index: 14, kind: input, shape index: {}]
  %s15 = inlined_call_operand.vmem [shape: bf16[128,32], index: 15, kind: input, shape index: {}]
  %s16 = inlined_call_operand.vmem [shape: f32[1,32], index: 16, kind: input, shape index: {}]
  %s17 = inlined_call_operand.hbm [shape: f32[2,16,32], index: 17, kind: output, shape index: {}]
  %s18 = sld [smem:[#allocation0]]
  $region129: #{tpu_custom_call.1} parent=0
    _
  %s20 = ssub.s32 1, %s18
  %s21 = scalar_select 0, %s20, %s18
  $region1: #{tpu_custom_call.1} parent=0
    #allocation8 [shape = 'u8[512]{0}', space=vmem, size = 0x400, scoped, tag = 'input window, operand 1, single buffered']
    #allocation9 [shape = 's32[2]{0}', space=sflag, size = 0x8, scoped, tag = 'scoped memory for tpu_custom_call.1']
    #allocation10 [shape = 's32[2]{0}', space=sflag, size = 0x8, scoped, tag = 'scoped memory for tpu_custom_call.1']
    #allocation11 [shape = 'u8[8192]{0}', space=vmem, size = 0x2000, scoped, tag = 'input window, operand 9, single buffered']
    #allocation12 [shape = 's32[1]{0}', space=sflag, size = 0x4, scoped, tag = 'scoped memory for tpu_custom_call.1']
    #allocation13 [shape = 'u8[8192]{0}', space=vmem, size = 0x2000, scoped, tag = 'input window, operand 13, single buffered']
    #allocation14 [shape = 'u8[8192]{0}', space=vmem, size = 0x2000, scoped, tag = 'output window, operand 0']
    %22 = vsyncpa [#allocation9], 0
    %23 = vsyncpa [#allocation12], 0
    %24 = vsyncpa [#allocation10], 0
    %s25 = scalar_lea.sflag [#allocation10], 1
    %26 = vsyncpa %s25, 0
    loop: start=0, step=1, limit=10
    $region2: #{tpu_custom_call.1} parent=1 // loop_pre_header
      _
    $region3: #{tpu_custom_call.1} parent=1 // loop_header
      %s28 = sphi 0, %s32
      %p29 = scmp.ge.s32.totalorder %s28, 10
      %s35 = sphi 0, %s54
      %s36 = sphi 0, %s50
      %s37 = sphi 0, %s46
      %s38 = sphi 0, %s35
      %s39 = sphi 0, %s36
      %s40 = sphi 0, %s37
      %s41 = sphi 0, %s38
      %s42 = sphi 0, %s39
      %s43 = sphi 0, %s40
      %s59 = sphi 0, %s61
      %s62 = sphi 0, %s59
      %s63 = sphi 0, %s62
      %s79 = sphi 0, %s63
      %s83 = sphi 0, %s83
      %s85 = sphi 0, %s83
      %s86 = sphi 0, %s85
      %s100 = sphi 0, %s86
      %s104 = sphi 0, %s104
      %s106 = sphi 0, %s104
      %s107 = sphi 0, %s106
      %s121 = sphi 0, %s107
      %s125 = sphi 0, %s125
      %s127 = sphi 0, %s125
      %s128 = sphi 0, %s127
      %s142 = sphi 0, %s128
      %s146 = sphi 0, %s146
      %s148 = sphi 0, %s146
      %s149 = sphi 0, %s148
      %s163 = sphi 0, %s149
      %s167 = sphi 0, %s167
      %s169 = sphi 0, %s167
      %s170 = sphi 0, %s169
      %s184 = sphi 0, %s170
      %s188 = sphi 0, %s188
      %s190 = sphi 0, %s188
      %s191 = sphi 0, %s190
      %s205 = sphi 0, %s191
      %s209 = sphi 0, %s209
      %s211 = sphi 0, %s209
      %s212 = sphi 0, %s211
      %s226 = sphi 0, %s212
      %s230 = sphi 0, %s230
      %s232 = sphi 0, %s230
      %s233 = sphi 0, %s232
      %s247 = sphi 0, %s233
      %s251 = sphi 0, %s251
      %s253 = sphi 0, %s251
      %s254 = sphi 0, %s253
      %s268 = sphi 0, %s254
      %s272 = sphi 0, %s272
      %s274 = sphi 0, %s272
      %s275 = sphi 0, %s274
      %s289 = sphi 0, %s275
      %s293 = sphi 0, %s293
      %s295 = sphi 0, %s293
      %s296 = sphi 0, %s295
      %s310 = sphi 0, %s296
      %s314 = sphi 0, %s314
      %s316 = sphi 0, %s314
      %s317 = sphi 0, %s316
      %s331 = sphi 0, %s317
      %s335 = sphi 0, %s335
      %s337 = sphi 0, %s335
      %s338 = sphi 0, %s337
      %s352 = sphi 0, %s338
      %s356 = sphi 0, %s356
      %s358 = sphi 0, %s356
      %s359 = sphi 0, %s358
      %s373 = sphi 0, %s359
      %s377 = sphi 0, %s377
      %s379 = sphi 0, %s377
      %s380 = sphi 0, %s379
      %s394 = sphi 0, %s380
      %s398 = sphi 0, %s398
      %s400 = sphi 0, %s398
      %s401 = sphi 0, %s400
      %s415 = sphi 0, %s401
      %s423 = sphi 0, %s425
      %s426 = sphi 0, %s423
      %s427 = sphi 0, %s426
      %s443 = sphi 0, %s427
    $region4: #{tpu_custom_call.1} parent=1 // loop_header_branch
      %31 = sbr.rel (%p29) target = $region8
    $region5: #{tpu_custom_call.1} parent=1 // loop_body
      %s33 = ssub.s32 %s28, 1
      %s34 = ssub.s32 %s28, 2
      %s44 = sadd.s32 1, %s37
      %p45 = scmp.ge.s32.totalorder %s44, 2
      %s46 = scalar_select %p45, 0, %s44
      %s47 = sadd.s32 1, %s36
      %s48 = scalar_select %p45, %s47, %s36
      %p49 = scmp.ge.s32.totalorder %s48, 2
      %s50 = scalar_select %p49, 0, %s48
      %s51 = sadd.s32 1, %s35
      %s52 = scalar_select %p49, %s51, %s35
      %p53 = scmp.ge.s32.totalorder %s52, 2
      %s54 = scalar_select %p53, 0, %s52
      %s55 = ssub.s32 %s35, %s54
      %s56 = ssub.s32 %s36, %s50
      %s57 = sor.u32 %s55, %s56
      %p58 = scmp.eq.s32.totalorder %s57, 0
      %s60 = sadd.s32 %s59, 1
      %s61 = scalar_select %p58, %s59, %s60
      %p64 = pneg %p58
      %p65 = scmp.eq.s32.totalorder %s28, 7
      %p66 = por %p64, %p65
      %p67 = scmp.ne.s32.totalorder %s59, %s62
      %p68 = scmp.eq.s32.totalorder %s28, 0
      %p69 = por %p67, %p68
      %p70 = scmp.ne.s32.totalorder %s59, %s62
      %p71 = scmp.eq.s32.totalorder %s33, 7
      %p72 = por %p70, %p71
      %p73 = scmp.ne.s32.totalorder %s62, %s63
      %p74 = scmp.eq.s32.totalorder %s33, 0
      %p75 = por %p73, %p74
      %p76 = scmp.ne.s32.totalorder %s62, %s63
      %p77 = scmp.eq.s32.totalorder %s34, 7
      %p78 = por %p76, %p77
      %p80 = scmp.ne.s32.totalorder %s63, %s79
      %p81 = scmp.eq.s32.totalorder %s34, 0
      %p82 = por %p80, %p81
      %s84 = sadd.s32 %s83, 1
      %p87 = scmp.eq.s32.totalorder %s28, 7
      %p88 = scmp.ne.s32.totalorder %s83, %s85
      %p89 = scmp.eq.s32.totalorder %s28, 0
      %p90 = por %p88, %p89
      %p91 = scmp.ne.s32.totalorder %s83, %s85
      %p92 = scmp.eq.s32.totalorder %s33, 7
      %p93 = por %p91, %p92
      %p94 = scmp.ne.s32.totalorder %s85, %s86
      %p95 = scmp.eq.s32.totalorder %s33, 0
      %p96 = por %p94, %p95
      %p97 = scmp.ne.s32.totalorder %s85, %s86
      %p98 = scmp.eq.s32.totalorder %s34, 7
      %p99 = por %p97, %p98
      %p101 = scmp.ne.s32.totalorder %s86, %s100
      %p102 = scmp.eq.s32.totalorder %s34, 0
      %p103 = por %p101, %p102
      %s105 = sadd.s32 %s104, 1
      %p108 = scmp.eq.s32.totalorder %s28, 7
      %p109 = scmp.ne.s32.totalorder %s104, %s106
      %p110 = scmp.eq.s32.totalorder %s28, 0
      %p111 = por %p109, %p110
      %p112 = scmp.ne.s32.totalorder %s104, %s106
      %p113 = scmp.eq.s32.totalorder %s33, 7
      %p114 = por %p112, %p113
      %p115 = scmp.ne.s32.totalorder %s106, %s107
      %p116 = scmp.eq.s32.totalorder %s33, 0
      %p117 = por %p115, %p116
      %p118 = scmp.ne.s32.totalorder %s106, %s107
      %p119 = scmp.eq.s32.totalorder %s34, 7
      %p120 = por %p118, %p119
      %p122 = scmp.ne.s32.totalorder %s107, %s121
      %p123 = scmp.eq.s32.totalorder %s34, 0
      %p124 = por %p122, %p123
      %s126 = sadd.s32 %s125, 1
      %p129 = scmp.eq.s32.totalorder %s28, 7
      %p130 = scmp.ne.s32.totalorder %s125, %s127
      %p131 = scmp.eq.s32.totalorder %s28, 0
      %p132 = por %p130, %p131
      %p133 = scmp.ne.s32.totalorder %s125, %s127
      %p134 = scmp.eq.s32.totalorder %s33, 7
      %p135 = por %p133, %p134
      %p136 = scmp.ne.s32.totalorder %s127, %s128
      %p137 = scmp.eq.s32.totalorder %s33, 0
      %p138 = por %p136, %p137
      %p139 = scmp.ne.s32.totalorder %s127, %s128
      %p140 = scmp.eq.s32.totalorder %s34, 7
      %p141 = por %p139, %p140
      %p143 = scmp.ne.s32.totalorder %s128, %s142
      %p144 = scmp.eq.s32.totalorder %s34, 0
      %p145 = por %p143, %p144
      %s147 = sadd.s32 %s146, 1
      %p150 = scmp.eq.s32.totalorder %s28, 7
      %p151 = scmp.ne.s32.totalorder %s146, %s148
      %p152 = scmp.eq.s32.totalorder %s28, 0
      %p153 = por %p151, %p152
      %p154 = scmp.ne.s32.totalorder %s146, %s148
      %p155 = scmp.eq.s32.totalorder %s33, 7
      %p156 = por %p154, %p155
      %p157 = scmp.ne.s32.totalorder %s148, %s149
      %p158 = scmp.eq.s32.totalorder %s33, 0
      %p159 = por %p157, %p158
      %p160 = scmp.ne.s32.totalorder %s148, %s149
      %p161 = scmp.eq.s32.totalorder %s34, 7
      %p162 = por %p160, %p161
      %p164 = scmp.ne.s32.totalorder %s149, %s163
      %p165 = scmp.eq.s32.totalorder %s34, 0
      %p166 = por %p164, %p165
      %s168 = sadd.s32 %s167, 1
      %p171 = scmp.eq.s32.totalorder %s28, 7
      %p172 = scmp.ne.s32.totalorder %s167, %s169
      %p173 = scmp.eq.s32.totalorder %s28, 0
      %p174 = por %p172, %p173
      %p175 = scmp.ne.s32.totalorder %s167, %s169
      %p176 = scmp.eq.s32.totalorder %s33, 7
      %p177 = por %p175, %p176
      %p178 = scmp.ne.s32.totalorder %s169, %s170
      %p179 = scmp.eq.s32.totalorder %s33, 0
      %p180 = por %p178, %p179
      %p181 = scmp.ne.s32.totalorder %s169, %s170
      %p182 = scmp.eq.s32.totalorder %s34, 7
      %p183 = por %p181, %p182
      %p185 = scmp.ne.s32.totalorder %s170, %s184
      %p186 = scmp.eq.s32.totalorder %s34, 0
      %p187 = por %p185, %p186
      %s189 = sadd.s32 %s188, 1
      %p192 = scmp.eq.s32.totalorder %s28, 7
      %p193 = scmp.ne.s32.totalorder %s188, %s190
      %p194 = scmp.eq.s32.totalorder %s28, 0
      %p195 = por %p193, %p194
      %p196 = scmp.ne.s32.totalorder %s188, %s190
      %p197 = scmp.eq.s32.totalorder %s33, 7
      %p198 = por %p196, %p197
      %p199 = scmp.ne.s32.totalorder %s190, %s191
      %p200 = scmp.eq.s32.totalorder %s33, 0
      %p201 = por %p199, %p200
      %p202 = scmp.ne.s32.totalorder %s190, %s191
      %p203 = scmp.eq.s32.totalorder %s34, 7
      %p204 = por %p202, %p203
      %p206 = scmp.ne.s32.totalorder %s191, %s205
      %p207 = scmp.eq.s32.totalorder %s34, 0
      %p208 = por %p206, %p207
      %s210 = sadd.s32 %s209, 1
      %p213 = scmp.eq.s32.totalorder %s28, 7
      %p214 = scmp.ne.s32.totalorder %s209, %s211
      %p215 = scmp.eq.s32.totalorder %s28, 0
      %p216 = por %p214, %p215
      %p217 = scmp.ne.s32.totalorder %s209, %s211
      %p218 = scmp.eq.s32.totalorder %s33, 7
      %p219 = por %p217, %p218
      %p220 = scmp.ne.s32.totalorder %s211, %s212
      %p221 = scmp.eq.s32.totalorder %s33, 0
      %p222 = por %p220, %p221
      %p223 = scmp.ne.s32.totalorder %s211, %s212
      %p224 = scmp.eq.s32.totalorder %s34, 7
      %p225 = por %p223, %p224
      %p227 = scmp.ne.s32.totalorder %s212, %s226
      %p228 = scmp.eq.s32.totalorder %s34, 0
      %p229 = por %p227, %p228
      %s231 = sadd.s32 %s230, 1
      %p234 = scmp.eq.s32.totalorder %s28, 7
      %p235 = scmp.ne.s32.totalorder %s230, %s232
      %p236 = scmp.eq.s32.totalorder %s28, 0
      %p237 = por %p235, %p236
      %p238 = scmp.ne.s32.totalorder %s230, %s232
      %p239 = scmp.eq.s32.totalorder %s33, 7
      %p240 = por %p238, %p239
      %p241 = scmp.ne.s32.totalorder %s232, %s233
      %p242 = scmp.eq.s32.totalorder %s33, 0
      %p243 = por %p241, %p242
      %p244 = scmp.ne.s32.totalorder %s232, %s233
      %p245 = scmp.eq.s32.totalorder %s34, 7
      %p246 = por %p244, %p245
      %p248 = scmp.ne.s32.totalorder %s233, %s247
      %p249 = scmp.eq.s32.totalorder %s34, 0
      %p250 = por %p248, %p249
      %s252 = sadd.s32 %s251, 1
      %p255 = scmp.eq.s32.totalorder %s28, 7
      %p256 = scmp.ne.s32.totalorder %s251, %s253
      %p257 = scmp.eq.s32.totalorder %s28, 0
      %p258 = por %p256, %p257
      %p259 = scmp.ne.s32.totalorder %s251, %s253
      %p260 = scmp.eq.s32.totalorder %s33, 7
      %p261 = por %p259, %p260
      %p262 = scmp.ne.s32.totalorder %s253, %s254
      %p263 = scmp.eq.s32.totalorder %s33, 0
      %p264 = por %p262, %p263
      %p265 = scmp.ne.s32.totalorder %s253, %s254
      %p266 = scmp.eq.s32.totalorder %s34, 7
      %p267 = por %p265, %p266
      %p269 = scmp.ne.s32.totalorder %s254, %s268
      %p270 = scmp.eq.s32.totalorder %s34, 0
      %p271 = por %p269, %p270
      %s273 = sadd.s32 %s272, 1
      %p276 = scmp.eq.s32.totalorder %s28, 7
      %p277 = scmp.ne.s32.totalorder %s272, %s274
      %p278 = scmp.eq.s32.totalorder %s28, 0
      %p279 = por %p277, %p278
      %p280 = scmp.ne.s32.totalorder %s272, %s274
      %p281 = scmp.eq.s32.totalorder %s33, 7
      %p282 = por %p280, %p281
      %p283 = scmp.ne.s32.totalorder %s274, %s275
      %p284 = scmp.eq.s32.totalorder %s33, 0
      %p285 = por %p283, %p284
      %p286 = scmp.ne.s32.totalorder %s274, %s275
      %p287 = scmp.eq.s32.totalorder %s34, 7
      %p288 = por %p286, %p287
      %p290 = scmp.ne.s32.totalorder %s275, %s289
      %p291 = scmp.eq.s32.totalorder %s34, 0
      %p292 = por %p290, %p291
      %s294 = sadd.s32 %s293, 1
      %p297 = scmp.eq.s32.totalorder %s28, 7
      %p298 = scmp.ne.s32.totalorder %s293, %s295
      %p299 = scmp.eq.s32.totalorder %s28, 0
      %p300 = por %p298, %p299
      %p301 = scmp.ne.s32.totalorder %s293, %s295
      %p302 = scmp.eq.s32.totalorder %s33, 7
      %p303 = por %p301, %p302
      %p304 = scmp.ne.s32.totalorder %s295, %s296
      %p305 = scmp.eq.s32.totalorder %s33, 0
      %p306 = por %p304, %p305
      %p307 = scmp.ne.s32.totalorder %s295, %s296
      %p308 = scmp.eq.s32.totalorder %s34, 7
      %p309 = por %p307, %p308
      %p311 = scmp.ne.s32.totalorder %s296, %s310
      %p312 = scmp.eq.s32.totalorder %s34, 0
      %p313 = por %p311, %p312
      %s315 = sadd.s32 %s314, 1
      %p318 = scmp.eq.s32.totalorder %s28, 7
      %p319 = scmp.ne.s32.totalorder %s314, %s316
      %p320 = scmp.eq.s32.totalorder %s28, 0
      %p321 = por %p319, %p320
      %p322 = scmp.ne.s32.totalorder %s314, %s316
      %p323 = scmp.eq.s32.totalorder %s33, 7
      %p324 = por %p322, %p323
      %p325 = scmp.ne.s32.totalorder %s316, %s317
      %p326 = scmp.eq.s32.totalorder %s33, 0
      %p327 = por %p325, %p326
      %p328 = scmp.ne.s32.totalorder %s316, %s317
      %p329 = scmp.eq.s32.totalorder %s34, 7
      %p330 = por %p328, %p329
      %p332 = scmp.ne.s32.totalorder %s317, %s331
      %p333 = scmp.eq.s32.totalorder %s34, 0
      %p334 = por %p332, %p333
      %s336 = sadd.s32 %s335, 1
      %p339 = scmp.eq.s32.totalorder %s28, 7
      %p340 = scmp.ne.s32.totalorder %s335, %s337
      %p341 = scmp.eq.s32.totalorder %s28, 0
      %p342 = por %p340, %p341
      %p343 = scmp.ne.s32.totalorder %s335, %s337
      %p344 = scmp.eq.s32.totalorder %s33, 7
      %p345 = por %p343, %p344
      %p346 = scmp.ne.s32.totalorder %s337, %s338
      %p347 = scmp.eq.s32.totalorder %s33, 0
      %p348 = por %p346, %p347
      %p349 = scmp.ne.s32.totalorder %s337, %s338
      %p350 = scmp.eq.s32.totalorder %s34, 7
      %p351 = por %p349, %p350
      %p353 = scmp.ne.s32.totalorder %s338, %s352
      %p354 = scmp.eq.s32.totalorder %s34, 0
      %p355 = por %p353, %p354
      %s357 = sadd.s32 %s356, 1
      %p360 = scmp.eq.s32.totalorder %s28, 7
      %p361 = scmp.ne.s32.totalorder %s356, %s358
      %p362 = scmp.eq.s32.totalorder %s28, 0
      %p363 = por %p361, %p362
      %p364 = scmp.ne.s32.totalorder %s356, %s358
      %p365 = scmp.eq.s32.totalorder %s33, 7
      %p366 = por %p364, %p365
      %p367 = scmp.ne.s32.totalorder %s358, %s359
      %p368 = scmp.eq.s32.totalorder %s33, 0
      %p369 = por %p367, %p368
      %p370 = scmp.ne.s32.totalorder %s358, %s359
      %p371 = scmp.eq.s32.totalorder %s34, 7
      %p372 = por %p370, %p371
      %p374 = scmp.ne.s32.totalorder %s359, %s373
      %p375 = scmp.eq.s32.totalorder %s34, 0
      %p376 = por %p374, %p375
      %s378 = sadd.s32 %s377, 1
      %p381 = scmp.eq.s32.totalorder %s28, 7
      %p382 = scmp.ne.s32.totalorder %s377, %s379
      %p383 = scmp.eq.s32.totalorder %s28, 0
      %p384 = por %p382, %p383
      %p385 = scmp.ne.s32.totalorder %s377, %s379
      %p386 = scmp.eq.s32.totalorder %s33, 7
      %p387 = por %p385, %p386
      %p388 = scmp.ne.s32.totalorder %s379, %s380
      %p389 = scmp.eq.s32.totalorder %s33, 0
      %p390 = por %p388, %p389
      %p391 = scmp.ne.s32.totalorder %s379, %s380
      %p392 = scmp.eq.s32.totalorder %s34, 7
      %p393 = por %p391, %p392
      %p395 = scmp.ne.s32.totalorder %s380, %s394
      %p396 = scmp.eq.s32.totalorder %s34, 0
      %p397 = por %p395, %p396
      %s399 = sadd.s32 %s398, 1
      %p402 = scmp.eq.s32.totalorder %s28, 7
      %p403 = scmp.ne.s32.totalorder %s398, %s400
      %p404 = scmp.eq.s32.totalorder %s28, 0
      %p405 = por %p403, %p404
      %p406 = scmp.ne.s32.totalorder %s398, %s400
      %p407 = scmp.eq.s32.totalorder %s33, 7
      %p408 = por %p406, %p407
      %p409 = scmp.ne.s32.totalorder %s400, %s401
      %p410 = scmp.eq.s32.totalorder %s33, 0
      %p411 = por %p409, %p410
      %p412 = scmp.ne.s32.totalorder %s400, %s401
      %p413 = scmp.eq.s32.totalorder %s34, 7
      %p414 = por %p412, %p413
      %p416 = scmp.ne.s32.totalorder %s401, %s415
      %p417 = scmp.eq.s32.totalorder %s34, 0
      %p418 = por %p416, %p417
      %s419 = ssub.s32 %s35, %s54
      %s420 = ssub.s32 %s36, %s50
      %s421 = sor.u32 %s419, %s420
      %p422 = scmp.eq.s32.totalorder %s421, 0
      %s424 = sadd.s32 %s423, 1
      %s425 = scalar_select %p422, %s423, %s424
      %p428 = pneg %p422
      %p429 = scmp.eq.s32.totalorder %s28, 7
      %p430 = por %p428, %p429
      %p431 = scmp.ne.s32.totalorder %s423, %s426
      %p432 = scmp.eq.s32.totalorder %s28, 0
      %p433 = por %p431, %p432
      %p434 = scmp.ne.s32.totalorder %s423, %s426
      %p435 = scmp.eq.s32.totalorder %s33, 7
      %p436 = por %p434, %p435
      %p437 = scmp.ne.s32.totalorder %s426, %s427
      %p438 = scmp.eq.s32.totalorder %s33, 0
      %p439 = por %p437, %p438
      %p440 = scmp.ne.s32.totalorder %s426, %s427
      %p441 = scmp.eq.s32.totalorder %s34, 7
      %p442 = por %p440, %p441
      %p444 = scmp.ne.s32.totalorder %s427, %s443
      %p445 = scmp.eq.s32.totalorder %s34, 0
      %p446 = por %p444, %p445
      %p447 = scmp.le.s32.totalorder 1, %s28
      %p448 = scmp.lt.s32.totalorder %s28, 9
      %p449 = pnand %p447, %p448
      %p450 = pneg %p449
      // Predicated region
      $region9: #{tpu_custom_call.1} parent=5 // pred_check
        _
      $region10: #{tpu_custom_call.1} parent=5 // pred_check_branch
        %452 = sbr.rel (%p449) target = $region12
      $region11: #{tpu_custom_call.1} parent=5 // pred_region
        %s453 = ssub.s32 %s28, 1
        // Predicated region
        $region13: #{tpu_custom_call.1} parent=11 // pred_check
          %p454 = pneg %p96
        $region14: #{tpu_custom_call.1} parent=11 // pred_check_branch
          %456 = sbr.rel (%p454) target = $region16
        $region15: #{tpu_custom_call.1} parent=11 // pred_region
          %458 = vsyncadd [#allocation9], 0
          %s460 = sshll.u32 %s1, 4
          %s461 = int_to_ptr.hbm [resolvable:$true] %s460
          %s462 = sshll.u32 [#allocation8], 4
          %s463 = int_to_ptr.vmem [resolvable:$true] %s462
          %465 = dma.hbm_to_vmem [thread:$0]  %s461, 16, %s463, [#allocation9]
        $region16: #{tpu_custom_call.1} parent=11 // pred_fallthru
          _
        // Predicated region
        $region17: #{tpu_custom_call.1} parent=11 // pred_check
          %p466 = pneg %p117
        $region18: #{tpu_custom_call.1} parent=11 // pred_check_branch
          %468 = sbr.rel (%p466) target = $region20
        $region19: #{tpu_custom_call.1} parent=11 // pred_region
          _
        $region20: #{tpu_custom_call.1} parent=11 // pred_fallthru
          _
        // Predicated region
        $region21: #{tpu_custom_call.1} parent=11 // pred_check
          %p469 = pneg %p138
        $region22: #{tpu_custom_call.1} parent=11 // pred_check_branch
          %471 = sbr.rel (%p469) target = $region24
        $region23: #{tpu_custom_call.1} parent=11 // pred_region
          _
        $region24: #{tpu_custom_call.1} parent=11 // pred_fallthru
          _
        // Predicated region
        $region25: #{tpu_custom_call.1} parent=11 // pred_check
          %p472 = pneg %p159
        $region26: #{tpu_custom_call.1} parent=11 // pred_check_branch
          %474 = sbr.rel (%p472) target = $region28
        $region27: #{tpu_custom_call.1} parent=11 // pred_region
          _
        $region28: #{tpu_custom_call.1} parent=11 // pred_fallthru
          _
        // Predicated region
        $region29: #{tpu_custom_call.1} parent=11 // pred_check
          %p475 = pneg %p180
        $region30: #{tpu_custom_call.1} parent=11 // pred_check_branch
          %477 = sbr.rel (%p475) target = $region32
        $region31: #{tpu_custom_call.1} parent=11 // pred_region
          _
        $region32: #{tpu_custom_call.1} parent=11 // pred_fallthru
          _
        // Predicated region
        $region33: #{tpu_custom_call.1} parent=11 // pred_check
          %p478 = pneg %p201
        $region34: #{tpu_custom_call.1} parent=11 // pred_check_branch
          %480 = sbr.rel (%p478) target = $region36
        $region35: #{tpu_custom_call.1} parent=11 // pred_region
          _
        $region36: #{tpu_custom_call.1} parent=11 // pred_fallthru
          _
        // Predicated region
        $region37: #{tpu_custom_call.1} parent=11 // pred_check
          %p481 = pneg %p222
        $region38: #{tpu_custom_call.1} parent=11 // pred_check_branch
          %483 = sbr.rel (%p481) target = $region40
        $region39: #{tpu_custom_call.1} parent=11 // pred_region
          _
        $region40: #{tpu_custom_call.1} parent=11 // pred_fallthru
          _
        // Predicated region
        $region41: #{tpu_custom_call.1} parent=11 // pred_check
          %p484 = pneg %p243
        $region42: #{tpu_custom_call.1} parent=11 // pred_check_branch
          %486 = sbr.rel (%p484) target = $region44
        $region43: #{tpu_custom_call.1} parent=11 // pred_region
          _
        $region44: #{tpu_custom_call.1} parent=11 // pred_fallthru
          _
        // Predicated region
        $region45: #{tpu_custom_call.1} parent=11 // pred_check
          %p487 = pneg %p264
        $region46: #{tpu_custom_call.1} parent=11 // pred_check_branch
          %489 = sbr.rel (%p487) target = $region48
        $region47: #{tpu_custom_call.1} parent=11 // pred_region
          %491 = vsyncadd [#allocation12], 0
          %s492 = sshll.u32 %s9, 4
          %s493 = int_to_ptr.hbm [resolvable:$true] %s492
          %s494 = sshll.u32 [#allocation11], 4
          %s495 = int_to_ptr.vmem [resolvable:$true] %s494
          %500 = dma.hbm_to_vmem [thread:$0]  %s493, 256, %s495, [#allocation12], 64, 64, 4
        $region48: #{tpu_custom_call.1} parent=11 // pred_fallthru
          _
        // Predicated region
        $region49: #{tpu_custom_call.1} parent=11 // pred_check
          %p501 = pneg %p285
        $region50: #{tpu_custom_call.1} parent=11 // pred_check_branch
          %503 = sbr.rel (%p501) target = $region52
        $region51: #{tpu_custom_call.1} parent=11 // pred_region
          _
        $region52: #{tpu_custom_call.1} parent=11 // pred_fallthru
          _
        // Predicated region
        $region53: #{tpu_custom_call.1} parent=11 // pred_check
          %p504 = pneg %p306
        $region54: #{tpu_custom_call.1} parent=11 // pred_check_branch
          %506 = sbr.rel (%p504) target = $region56
        $region55: #{tpu_custom_call.1} parent=11 // pred_region
          _
        $region56: #{tpu_custom_call.1} parent=11 // pred_fallthru
          _
        // Predicated region
        $region57: #{tpu_custom_call.1} parent=11 // pred_check
          %p507 = pneg %p327
        $region58: #{tpu_custom_call.1} parent=11 // pred_check_branch
          %509 = sbr.rel (%p507) target = $region60
        $region59: #{tpu_custom_call.1} parent=11 // pred_region
          _
        $region60: #{tpu_custom_call.1} parent=11 // pred_fallthru
          _
        // Predicated region
        $region61: #{tpu_custom_call.1} parent=11 // pred_check
          %p510 = pneg %p348
        $region62: #{tpu_custom_call.1} parent=11 // pred_check_branch
          %512 = sbr.rel (%p510) target = $region64
        $region63: #{tpu_custom_call.1} parent=11 // pred_region
          %514 = vsyncadd [#allocation12], 0
          %s515 = sshll.u32 %s13, 4
          %s516 = int_to_ptr.hbm [resolvable:$true] %s515
          %s517 = sshll.u32 [#allocation13], 4
          %s518 = int_to_ptr.vmem [resolvable:$true] %s517
          %523 = dma.hbm_to_vmem [thread:$0]  %s516, 256, %s518, [#allocation12], 64, 64, 4
        $region64: #{tpu_custom_call.1} parent=11 // pred_fallthru
          _
        // Predicated region
        $region65: #{tpu_custom_call.1} parent=11 // pred_check
          %p524 = pneg %p369
        $region66: #{tpu_custom_call.1} parent=11 // pred_check_branch
          %526 = sbr.rel (%p524) target = $region68
        $region67: #{tpu_custom_call.1} parent=11 // pred_region
          _
        $region68: #{tpu_custom_call.1} parent=11 // pred_fallthru
          _
        // Predicated region
        $region69: #{tpu_custom_call.1} parent=11 // pred_check
          %p527 = pneg %p390
        $region70: #{tpu_custom_call.1} parent=11 // pred_check_branch
          %529 = sbr.rel (%p527) target = $region72
        $region71: #{tpu_custom_call.1} parent=11 // pred_region
          _
        $region72: #{tpu_custom_call.1} parent=11 // pred_fallthru
          _
        // Predicated region
        $region73: #{tpu_custom_call.1} parent=11 // pred_check
          %p530 = pneg %p411
        $region74: #{tpu_custom_call.1} parent=11 // pred_check_branch
          %532 = sbr.rel (%p530) target = $region76
        $region75: #{tpu_custom_call.1} parent=11 // pred_region
          _
        $region76: #{tpu_custom_call.1} parent=11 // pred_fallthru
          _
      $region12: #{tpu_custom_call.1} parent=5 // pred_fallthru
        _
      %p533 = scmp.lt.s32.totalorder %s28, 8
      // Predicated region
      $region77: #{tpu_custom_call.1} parent=5 // pred_check
        %p534 = pneg %p533
      $region78: #{tpu_custom_call.1} parent=5 // pred_check_branch
        %536 = sbr.rel (%p534) target = $region80
      $region79: #{tpu_custom_call.1} parent=5 // pred_region
        // Predicated region
        $region81: #{tpu_custom_call.1} parent=79 // pred_check
          %p537 = pneg %p69
        $region82: #{tpu_custom_call.1} parent=79 // pred_check_branch
          %539 = sbr.rel (%p537) target = $region84
        $region83: #{tpu_custom_call.1} parent=79 // pred_region
          %p540 = scmp.lt.s32.totalorder %s35, 1
          %s541 = scalar_select %p540, %s35, 1
          %p542 = scmp.lt.s32.totalorder %s36, 1
          %s543 = scalar_select %p542, %s36, 1
          %s544 = smul.addr %s541, 2
          %s545 = sadd.s32 %s543, %s544
          %s546 = smul.addr %s545, 8
          %s547 = scalar_lea.vmem %s0, %s546
        $region84: #{tpu_custom_call.1} parent=79 // pred_fallthru
          _
      $region80: #{tpu_custom_call.1} parent=5 // pred_fallthru
        _
      %p548 = scmp.le.s32.totalorder 1, %s28
      %p549 = scmp.lt.s32.totalorder %s28, 9
      %p550 = pnand %p548, %p549
      %p551 = pneg %p550
      // Predicated region
      $region85: #{tpu_custom_call.1} parent=5 // pred_check
        _
      $region86: #{tpu_custom_call.1} parent=5 // pred_check_branch
        %553 = sbr.rel (%p550) target = $region88
      $region87: #{tpu_custom_call.1} parent=5 // pred_region
        %s554 = ssub.s32 %s28, 1
        // Predicated region
        $region89: #{tpu_custom_call.1} parent=87 // pred_check
          %p555 = pneg %p96
        $region90: #{tpu_custom_call.1} parent=87 // pred_check_branch
          %557 = sbr.rel (%p555) target = $region92
        $region91: #{tpu_custom_call.1} parent=87 // pred_region
          %559 = dma.done [#allocation9], 16
        $region92: #{tpu_custom_call.1} parent=87 // pred_fallthru
          _
        // Predicated region
        $region93: #{tpu_custom_call.1} parent=87 // pred_check
          %p560 = pneg %p264
        $region94: #{tpu_custom_call.1} parent=87 // pred_check_branch
          %562 = sbr.rel (%p560) target = $region96
        $region95: #{tpu_custom_call.1} parent=87 // pred_region
          %564 = dma.done [#allocation12], 256
        $region96: #{tpu_custom_call.1} parent=87 // pred_fallthru
          _
        // Predicated region
        $region97: #{tpu_custom_call.1} parent=87 // pred_check
          %p565 = pneg %p348
        $region98: #{tpu_custom_call.1} parent=87 // pred_check_branch
          %567 = sbr.rel (%p565) target = $region100
        $region99: #{tpu_custom_call.1} parent=87 // pred_region
          %569 = dma.done [#allocation12], 256
        $region100: #{tpu_custom_call.1} parent=87 // pred_fallthru
          _
        %p570 = scmp.lt.s32.totalorder %s38, 1
        %s571 = scalar_select %p570, %s38, 1
        %p572 = scmp.lt.s32.totalorder %s39, 1
        %s573 = scalar_select %p572, %s39, 1
        %s574 = smul.addr %s571, 2
        %s575 = sadd.s32 %s573, %s574
        %s576 = smul.addr %s575, 8
        %s577 = scalar_lea.vmem %s0, %s576
        %p578 = pneg %p75
        %p579 = pneg %p72
        %p580 = pneg %p96
        %p581 = pneg %p93
        %p582 = pneg %p117
        %p583 = pneg %p114
        %p584 = pneg %p138
        %p585 = pneg %p135
        %p586 = pneg %p159
        %p587 = pneg %p156
        %p588 = pneg %p180
        %p589 = pneg %p177
        %p590 = pneg %p201
        %p591 = pneg %p198
        %p592 = pneg %p222
        %p593 = pneg %p219
        %p594 = pneg %p243
        %p595 = pneg %p240
        %p596 = pneg %p264
        %p597 = pneg %p261
        %p598 = pneg %p285
        %p599 = pneg %p282
        %p600 = pneg %p306
        %p601 = pneg %p303
        %p602 = pneg %p327
        %p603 = pneg %p324
        %p604 = pneg %p348
        %p605 = pneg %p345
        %p606 = pneg %p369
        %p607 = pneg %p366
        %p608 = pneg %p390
        %p609 = pneg %p387
        %p610 = pneg %p411
        %p611 = pneg %p408
        %p612 = pneg %p439
        %p613 = pneg %p436
        %s614 = sand.u32 %s426, 1
        %s615 = scalar_lea.sflag [#allocation10], %s614
        %s616 = sand.u32 %s426, 1
        %s617 = smul.addr %s616, 8
        %s618 = scalar_lea.vmem [#allocation14], %s617
        %p619 = scmp.lt.s32.totalorder %s38, 1
        %s620 = scalar_select %p619, %s38, 1
        %p621 = scmp.lt.s32.totalorder %s39, 1
        %s622 = scalar_select %p621, %s39, 1
        %s623 = smul.addr %s620, 2
        %s624 = sadd.s32 %s622, %s623
        %s625 = smul.addr %s624, 8
        %s626 = scalar_lea.vmem %s0, %s625
        %p628 = scmp.eq.s32.totalorder %s40, 0
        // Predicated region
        $region101: #{tpu_custom_call.1} parent=87 // pred_check
          %p629 = pneg %p628
        $region102: #{tpu_custom_call.1} parent=87 // pred_check_branch
          %631 = sbr.rel (%p629) target = $region104
        $region103: #{tpu_custom_call.1} parent=87 // pred_region
          %vm632 = vcmask 7168
          %633 = vst.msk [vmem:[#allocation5] sm:$0xff] %vm632, -1e+30
          %634 = vst.msk [vmem:[#allocation5 + $0x8] sm:$0xff] %vm632, -1e+30
          %635 = vst.msk [vmem:[#allocation5 + $0x10] sm:$0xff] %vm632, -1e+30
          %636 = vst.msk [vmem:[#allocation5 + $0x18] sm:$0xff] %vm632, -1e+30
          %637 = vst.msk [vmem:[#allocation6] sm:$0xff] %vm632, 0.0
          %638 = vst.msk [vmem:[#allocation6 + $0x8] sm:$0xff] %vm632, 0.0
          %639 = vst.msk [vmem:[#allocation6 + $0x10] sm:$0xff] %vm632, 0.0
          %640 = vst.msk [vmem:[#allocation6 + $0x18] sm:$0xff] %vm632, 0.0
          %vm641 = vcmask 64512
          %642 = vst.msk [vmem:[#allocation7] sm:$0xff] %vm641, 0.0
          %643 = vst.msk [vmem:[#allocation7 + $0x8] sm:$0xff] %vm641, 0.0
          %644 = vst.msk [vmem:[#allocation7 + $0x10] sm:$0xff] %vm641, 0.0
          %645 = vst.msk [vmem:[#allocation7 + $0x18] sm:$0xff] %vm641, 0.0
          %v646 = vld [vmem:[%s626] sm:$0xff]
          %v647 = vld [vmem:[#allocation8] sm:$0x1]
          %v648 = vld [vmem:[%s2] sm:$0x1]
          %vm649 = vcmask 261120
          %v650 = vsel %vm649, %v646, 0.0
          %651 = vadd.xlane.f32.xlu0 %v650
          %v652 = vpop.xlane.xlu0 %651
          %v653 = vrcp.pop 32.0
          %v654 = vmul.f32 32.0, %v653
          %v655 = vsub.f32 1.0, %v654
          %v656 = vmul.f32 %v653, %v655
          %v657 = vadd.f32 %v653, %v656
          %vm658 = vweird.f32 %v653
          %v659 = vsel %vm658, %v653, %v657
          %v660 = vmul.f32 %v652, %v659
          %v661 = vsub.f32 %v646, %v660
          %v662 = vmul.f32 %v661, %v661
          %v663 = vsel %vm649, %v662, 0.0
          %664 = vadd.xlane.f32.xlu0 %v663
          %v665 = vpop.xlane.xlu0 %664
          %v666 = vmul.f32 %v665, %v659
          %v667 = vadd.f32 %v666, 1e-05
          %v668 = vrsqrt.pop %v667
          %v669 = vmul.f32 %v668, %v667
          %v670 = vmul.f32 %v669, %v668
          %v671 = vmul.f32 0.5, %v670
          %v672 = vsub.f32 1.5, %v671
          %v673 = vmul.f32 %v668, %v672
          %vm674 = vweird.f32 %v667
          %vm675 = vweird.f32 %v668
          %vm676 = vmor %vm674, %vm675
          %v677 = vsel %vm676, %v668, %v673
          %v678 = vmul.f32 %v661, %v677
          %v680 = vperm.slane %v647, 0
          %v682 = vmul.f32 %v680, %v678
          %v684 = vperm.slane %v648, 0
          %v686 = vadd.f32 %v682, %v684
          %v687 = vpack.c.bf16 %v686, %v686
          %v688 = vld [vmem:[%s3] sm:$0xf]
          %v689 = vld [vmem:[%s3 + $0x4] sm:$0xf]
          %v690 = vld [vmem:[%s3 + $0x8] sm:$0xf]
          %v691 = vld [vmem:[%s3 + $0xc] sm:$0xf]
          %v692 = vld [vmem:[%s4] sm:$0x1]
          %v694 = vperm.slane %v692, 0
          %v700 = vunpack.c.l.b16 %v688
          %v701 = vunpack.c.l.b16 %v689
          %v702 = vunpack.c.l.b16 %v690
          %v703 = vunpack.c.l.b16 %v691
          %v704 = vpack.c.b16 %v701, %v700
          %v705 = vpack.c.b16 %v703, %v702
          %v709 = vsel %vm649, %v687, 0
          %711 = vmatpush.bf16.msra.mxu0 0
          %712 = vmatpush.bf16.msra.mxu0 0
          %713 = vmatpush.bf16.msra.mxu0 0
          %714 = vmatpush.bf16.msra.mxu0 0
          %715 = vmatpush.bf16.msra.mxu0 0
          %716 = vmatpush.bf16.msra.mxu0 0
          %717 = vmatpush.bf16.msra.mxu0 %v705
          %718 = vmatpush.bf16.msra.mxu0 %v704
          %719 = vmatmul.bf16.gmra.mxu0 %v709
          %v720 = vpop.f32.mrf.mxu0
          %v721 = vadd.f32 %v694, %v720
          %v722 = vpop.f32.mrf.mxu0
          %723 = vdwg.mxu0
          %v724 = vpack.c.bf16 %v721, %v721
          %vm725 = vcmask 257024
          %726 = vst.msk [vmem:[#allocation2] sm:$0xf] %vm725, %v724
          %v727 = vld [vmem:[%s5] sm:$0xf]
          %v728 = vld [vmem:[%s5 + $0x4] sm:$0xf]
          %v729 = vld [vmem:[%s5 + $0x8] sm:$0xf]
          %v730 = vld [vmem:[%s5 + $0xc] sm:$0xf]
          %v731 = vld [vmem:[%s6] sm:$0x1]
          %v733 = vperm.slane %v731, 0
          %v739 = vunpack.c.l.b16 %v727
          %v740 = vunpack.c.l.b16 %v728
          %v741 = vunpack.c.l.b16 %v729
          %v742 = vunpack.c.l.b16 %v730
          %v743 = vpack.c.b16 %v740, %v739
          %v744 = vpack.c.b16 %v742, %v741
          %747 = vmatpush.bf16.msra.mxu0 0
          %748 = vmatpush.bf16.msra.mxu0 0
          %749 = vmatpush.bf16.msra.mxu0 0
          %750 = vmatpush.bf16.msra.mxu0 0
          %751 = vmatpush.bf16.msra.mxu0 0
          %752 = vmatpush.bf16.msra.mxu0 0
          %753 = vmatpush.bf16.msra.mxu0 %v744
          %754 = vmatpush.bf16.msra.mxu0 %v743
          %755 = vmatmul.bf16.gmra.mxu0 %v709
          %v756 = vpop.f32.mrf.mxu0
          %v757 = vadd.f32 %v733, %v756
          %v758 = vpop.f32.mrf.mxu0
          %759 = vdwg.mxu0
          %v760 = vpack.c.bf16 %v757, %v757
          %s761 = smul.addr %s39, 4
          %s762 = scalar_lea.vmem [#allocation3], %s761
          %763 = vst.msk [vmem:[%s762] sm:$0xf] %vm725, %v760
          %v764 = vld [vmem:[%s7] sm:$0xf]
          %v765 = vld [vmem:[%s7 + $0x4] sm:$0xf]
          %v766 = vld [vmem:[%s7 + $0x8] sm:$0xf]
          %v767 = vld [vmem:[%s7 + $0xc] sm:$0xf]
          %v768 = vld [vmem:[%s8] sm:$0x1]
          %v770 = vperm.slane %v768, 0
          %v776 = vunpack.c.l.b16 %v764
          %v777 = vunpack.c.l.b16 %v765
          %v778 = vunpack.c.l.b16 %v766
          %v779 = vunpack.c.l.b16 %v767
          %v780 = vpack.c.b16 %v777, %v776
          %v781 = vpack.c.b16 %v779, %v778
          %784 = vmatpush.bf16.msra.mxu0 0
          %785 = vmatpush.bf16.msra.mxu0 0
          %786 = vmatpush.bf16.msra.mxu0 0
          %787 = vmatpush.bf16.msra.mxu0 0
          %788 = vmatpush.bf16.msra.mxu0 0
          %789 = vmatpush.bf16.msra.mxu0 0
          %790 = vmatpush.bf16.msra.mxu0 %v781
          %791 = vmatpush.bf16.msra.mxu0 %v780
          %792 = vmatmul.bf16.gmra.mxu0 %v709
          %v793 = vpop.f32.mrf.mxu0
          %v794 = vadd.f32 %v770, %v793
          %v795 = vpop.f32.mrf.mxu0
          %796 = vdwg.mxu0
          %v797 = vpack.c.bf16 %v794, %v794
          %s798 = smul.addr %s39, 4
          %s799 = scalar_lea.vmem [#allocation4], %s798
          %800 = vst.msk [vmem:[%s799] sm:$0xf] %vm725, %v797
        $region104: #{tpu_custom_call.1} parent=87 // pred_fallthru
          _
        %p801 = scmp.lt.s32.totalorder %s40, %s39
        // Predicated region
        $region105: #{tpu_custom_call.1} parent=87 // pred_check
          %p802 = pneg %p801
        $region106: #{tpu_custom_call.1} parent=87 // pred_check_branch
          %804 = sbr.rel (%p802) target = $region108
        $region107: #{tpu_custom_call.1} parent=87 // pred_region
          %v805 = vld [vmem:[#allocation2] sm:$0xf]
          %807 = vrot.lane.b32.xlu0 %v805, 120
          %v808 = vpop.permute.xlu0 %807
          %809 = vrot.lane.b32.xlu0 %v805, 112
          %v810 = vpop.permute.xlu0 %809
          %811 = vrot.lane.b32.xlu0 %v805, 104
          %v812 = vpop.permute.xlu0 %811
          %s813 = smul.addr %s40, 4
          %s814 = scalar_lea.vmem [#allocation3], %s813
          %v815 = vld [vmem:[%s814] sm:$0xf]
          %817 = vrot.lane.b32.xlu0 %v815, 120
          %v818 = vpop.permute.xlu0 %817
          %819 = vrot.lane.b32.xlu0 %v815, 112
          %v820 = vpop.permute.xlu0 %819
          %821 = vrot.lane.b32.xlu0 %v815, 104
          %v822 = vpop.permute.xlu0 %821
          %v825 = vpack.i.b16 %v818, %v815
          %v826 = vshrl.u32 %v815, 16
          %v827 = vshrl.u32 %v818, 16
          %v828 = vpack.i.b16 %v827, %v826
          %v831 = vpack.i.b16 %v822, %v820
          %v832 = vshrl.u32 %v820, 16
          %v833 = vshrl.u32 %v822, 16
          %v834 = vpack.i.b16 %v833, %v832
          %v837 = vunpack.c.l.s4 1983009808
          %v838 = vunpack.c.0.s8 %v837
          %v839 = vperm.slane %v825, %v838
          %v842 = vunpack.c.l.s4 1983009808
          %v843 = vunpack.c.0.s8 %v842
          %v844 = vperm.slane %v831, %v843
          %v845 = vrot.slane %v844, 4
          %vm846 = vcmask 1047556
          %v847 = vsel %vm846, %v845, %v839
          %v848 = vrot.slane %v839, 4
          %v849 = vsel %vm846, %v844, %v848
          %v851 = vunpack.c.l.s4 1934713408
          %v852 = vunpack.c.0.s8 %v851
          %v853 = vperm.slane %v847, %v852
          %v855 = vunpack.c.l.s4 1934713408
          %v856 = vunpack.c.0.s8 %v855
          %v857 = vperm.slane %v849, %v856
          %v858 = vrot.slane %v853, 4
          %v859 = vsel %vm846, 0, %v858
          %v860 = vrot.slane %v857, 4
          %v861 = vsel %vm846, 0, %v860
          %v864 = vunpack.c.l.s4 1983009808
          %v865 = vunpack.c.0.s8 %v864
          %v866 = vperm.slane %v828, %v865
          %v869 = vunpack.c.l.s4 1983009808
          %v870 = vunpack.c.0.s8 %v869
          %v871 = vperm.slane %v834, %v870
          %v872 = vrot.slane %v871, 4
          %v873 = vsel %vm846, %v872, %v866
          %v874 = vrot.slane %v866, 4
          %v875 = vsel %vm846, %v871, %v874
          %v877 = vunpack.c.l.s4 1934713408
          %v878 = vunpack.c.0.s8 %v877
          %v879 = vperm.slane %v873, %v878
          %v881 = vunpack.c.l.s4 1934713408
          %v882 = vunpack.c.0.s8 %v881
          %v883 = vperm.slane %v875, %v882
          %v884 = vrot.slane %v879, 4
          %v885 = vsel %vm846, 0, %v884
          %v886 = vrot.slane %v883, 4
          %v887 = vsel %vm846, 0, %v886
          %s888 = smul.addr %s40, 4
          %s889 = scalar_lea.vmem [#allocation4], %s888
          %v890 = vld [vmem:[%s889] sm:$0xf]
          %892 = vrot.lane.b32.xlu0 %v890, 120
          %v893 = vpop.permute.xlu0 %892
          %894 = vrot.lane.b32.xlu0 %v890, 112
          %v895 = vpop.permute.xlu0 %894
          %896 = vrot.lane.b32.xlu0 %v890, 104
          %v897 = vpop.permute.xlu0 %896
          %v900 = vpack.i.b16 %v893, %v890
          %v901 = vshrl.u32 %v890, 16
          %v902 = vshrl.u32 %v893, 16
          %v903 = vpack.i.b16 %v902, %v901
          %v906 = vpack.i.b16 %v897, %v895
          %v907 = vshrl.u32 %v895, 16
          %v908 = vshrl.u32 %v897, 16
          %v909 = vpack.i.b16 %v908, %v907
          %v912 = vunpack.c.l.s4 1983009808
          %v913 = vunpack.c.0.s8 %v912
          %v914 = vperm.slane %v900, %v913
          %v917 = vunpack.c.l.s4 1983009808
          %v918 = vunpack.c.0.s8 %v917
          %v919 = vperm.slane %v906, %v918
          %v920 = vrot.slane %v919, 4
          %v921 = vsel %vm846, %v920, %v914
          %v922 = vrot.slane %v914, 4
          %v923 = vsel %vm846, %v919, %v922
          %v925 = vunpack.c.l.s4 1934713408
          %v926 = vunpack.c.0.s8 %v925
          %v927 = vperm.slane %v921, %v926
          %v929 = vunpack.c.l.s4 1934713408
          %v930 = vunpack.c.0.s8 %v929
          %v931 = vperm.slane %v923, %v930
          %v932 = vrot.slane %v927, 4
          %v933 = vsel %vm846, 0, %v932
          %v934 = vrot.slane %v931, 4
          %v935 = vsel %vm846, 0, %v934
          %v938 = vunpack.c.l.s4 1983009808
          %v939 = vunpack.c.0.s8 %v938
          %v940 = vperm.slane %v903, %v939
          %v943 = vunpack.c.l.s4 1983009808
          %v944 = vunpack.c.0.s8 %v943
          %v945 = vperm.slane %v909, %v944
          %v946 = vrot.slane %v945, 4
          %v947 = vsel %vm846, %v946, %v940
          %v948 = vrot.slane %v940, 4
          %v949 = vsel %vm846, %v945, %v948
          %v951 = vunpack.c.l.s4 1934713408
          %v952 = vunpack.c.0.s8 %v951
          %v953 = vperm.slane %v947, %v952
          %v955 = vunpack.c.l.s4 1934713408
          %v956 = vunpack.c.0.s8 %v955
          %v957 = vperm.slane %v949, %v956
          %v958 = vrot.slane %v953, 4
          %v959 = vsel %vm846, 0, %v958
          %v960 = vrot.slane %v957, 4
          %v961 = vsel %vm846, 0, %v960
          %962 = vxpose.xlu0.c.b16.start [1/8] %v853, 128
          %963 = vxpose.xlu0.c.b16.cont [2/8] 0, 128
          %964 = vxpose.xlu0.c.b16.cont [3/8] 0, 128
          %965 = vxpose.xlu0.c.b16.cont [4/8] 0, 128
          %966 = vxpose.xlu0.c.b16.cont [5/8] 0, 128
          %967 = vxpose.xlu0.c.b16.cont [6/8] 0, 128
          %968 = vxpose.xlu0.c.b16.cont [7/8] 0, 128
          %969 = vxpose.xlu0.c.b16.end [8/8] 0, 128
          %v970 = vpop.trf.xlu0
          %v971 = vpop.trf.xlu0
          %v972 = vpop.trf.xlu0
          %v973 = vpop.trf.xlu0
          %v974 = vpop.trf.xlu0
          %v975 = vpop.trf.xlu0
          %v976 = vpop.trf.xlu0
          %v977 = vpop.trf.xlu0
          %978 = vxpose.xlu0.c.b16.start [1/8] %v879, 128
          %979 = vxpose.xlu0.c.b16.cont [2/8] 0, 128
          %980 = vxpose.xlu0.c.b16.cont [3/8] 0, 128
          %981 = vxpose.xlu0.c.b16.cont [4/8] 0, 128
          %982 = vxpose.xlu0.c.b16.cont [5/8] 0, 128
          %983 = vxpose.xlu0.c.b16.cont [6/8] 0, 128
          %984 = vxpose.xlu0.c.b16.cont [7/8] 0, 128
          %985 = vxpose.xlu0.c.b16.end [8/8] 0, 128
          %v986 = vpop.trf.xlu0
          %v987 = vpop.trf.xlu0
          %v988 = vpop.trf.xlu0
          %v989 = vpop.trf.xlu0
          %v990 = vpop.trf.xlu0
          %v991 = vpop.trf.xlu0
          %v992 = vpop.trf.xlu0
          %v993 = vpop.trf.xlu0
          %994 = vxpose.xlu0.c.b16.start [1/8] %v859, 128
          %995 = vxpose.xlu0.c.b16.cont [2/8] 0, 128
          %996 = vxpose.xlu0.c.b16.cont [3/8] 0, 128
          %997 = vxpose.xlu0.c.b16.cont [4/8] 0, 128
          %998 = vxpose.xlu0.c.b16.cont [5/8] 0, 128
          %999 = vxpose.xlu0.c.b16.cont [6/8] 0, 128
          %1000 = vxpose.xlu0.c.b16.cont [7/8] 0, 128
          %1001 = vxpose.xlu0.c.b16.end [8/8] 0, 128
          %v1002 = vpop.trf.xlu0
          %v1003 = vpop.trf.xlu0
          %v1004 = vpop.trf.xlu0
          %v1005 = vpop.trf.xlu0
          %v1006 = vpop.trf.xlu0
          %v1007 = vpop.trf.xlu0
          %v1008 = vpop.trf.xlu0
          %v1009 = vpop.trf.xlu0
          %1010 = vxpose.xlu0.c.b16.start [1/8] %v885, 128
          %1011 = vxpose.xlu0.c.b16.cont [2/8] 0, 128
          %1012 = vxpose.xlu0.c.b16.cont [3/8] 0, 128
          %1013 = vxpose.xlu0.c.b16.cont [4/8] 0, 128
          %1014 = vxpose.xlu0.c.b16.cont [5/8] 0, 128
          %1015 = vxpose.xlu0.c.b16.cont [6/8] 0, 128
          %1016 = vxpose.xlu0.c.b16.cont [7/8] 0, 128
          %1017 = vxpose.xlu0.c.b16.end [8/8] 0, 128
          %v1018 = vpop.trf.xlu0
          %v1019 = vpop.trf.xlu0
          %v1020 = vpop.trf.xlu0
          %v1021 = vpop.trf.xlu0
          %v1022 = vpop.trf.xlu0
          %v1023 = vpop.trf.xlu0
          %v1024 = vpop.trf.xlu0
          %v1025 = vpop.trf.xlu0
          %1026 = vxpose.xlu0.c.b16.start [1/8] %v857, 128
          %1027 = vxpose.xlu0.c.b16.cont [2/8] 0, 128
          %1028 = vxpose.xlu0.c.b16.cont [3/8] 0, 128
          %1029 = vxpose.xlu0.c.b16.cont [4/8] 0, 128
          %1030 = vxpose.xlu0.c.b16.cont [5/8] 0, 128
          %1031 = vxpose.xlu0.c.b16.cont [6/8] 0, 128
          %1032 = vxpose.xlu0.c.b16.cont [7/8] 0, 128
          %1033 = vxpose.xlu0.c.b16.end [8/8] 0, 128
          %v1034 = vpop.trf.xlu0
          %v1035 = vpop.trf.xlu0
          %v1036 = vpop.trf.xlu0
          %v1037 = vpop.trf.xlu0
          %v1038 = vpop.trf.xlu0
          %v1039 = vpop.trf.xlu0
          %v1040 = vpop.trf.xlu0
          %v1041 = vpop.trf.xlu0
          %1042 = vxpose.xlu0.c.b16.start [1/8] %v883, 128
          %1043 = vxpose.xlu0.c.b16.cont [2/8] 0, 128
          %1044 = vxpose.xlu0.c.b16.cont [3/8] 0, 128
          %1045 = vxpose.xlu0.c.b16.cont [4/8] 0, 128
          %1046 = vxpose.xlu0.c.b16.cont [5/8] 0, 128
          %1047 = vxpose.xlu0.c.b16.cont [6/8] 0, 128
          %1048 = vxpose.xlu0.c.b16.cont [7/8] 0, 128
          %1049 = vxpose.xlu0.c.b16.end [8/8] 0, 128
          %v1050 = vpop.trf.xlu0
          %v1051 = vpop.trf.xlu0
          %v1052 = vpop.trf.xlu0
          %v1053 = vpop.trf.xlu0
          %v1054 = vpop.trf.xlu0
          %v1055 = vpop.trf.xlu0
          %v1056 = vpop.trf.xlu0
          %v1057 = vpop.trf.xlu0
          %1058 = vxpose.xlu0.c.b16.start [1/8] %v861, 128
          %1059 = vxpose.xlu0.c.b16.cont [2/8] 0, 128
          %1060 = vxpose.xlu0.c.b16.cont [3/8] 0, 128
          %1061 = vxpose.xlu0.c.b16.cont [4/8] 0, 128
          %1062 = vxpose.xlu0.c.b16.cont [5/8] 0, 128
          %1063 = vxpose.xlu0.c.b16.cont [6/8] 0, 128
          %1064 = vxpose.xlu0.c.b16.cont [7/8] 0, 128
          %1065 = vxpose.xlu0.c.b16.end [8/8] 0, 128
          %v1066 = vpop.trf.xlu0
          %v1067 = vpop.trf.xlu0
          %v1068 = vpop.trf.xlu0
          %v1069 = vpop.trf.xlu0
          %v1070 = vpop.trf.xlu0
          %v1071 = vpop.trf.xlu0
          %v1072 = vpop.trf.xlu0
          %v1073 = vpop.trf.xlu0
          %1074 = vxpose.xlu0.c.b16.start [1/8] %v887, 128
          %1075 = vxpose.xlu0.c.b16.cont [2/8] 0, 128
          %1076 = vxpose.xlu0.c.b16.cont [3/8] 0, 128
          %1077 = vxpose.xlu0.c.b16.cont [4/8] 0, 128
          %1078 = vxpose.xlu0.c.b16.cont [5/8] 0, 128
          %1079 = vxpose.xlu0.c.b16.cont [6/8] 0, 128
          %1080 = vxpose.xlu0.c.b16.cont [7/8] 0, 128
          %1081 = vxpose.xlu0.c.b16.end [8/8] 0, 128
          %v1082 = vpop.trf.xlu0
          %v1083 = vpop.trf.xlu0
          %v1084 = vpop.trf.xlu0
          %v1085 = vpop.trf.xlu0
          %v1086 = vpop.trf.xlu0
          %v1087 = vpop.trf.xlu0
          %v1088 = vpop.trf.xlu0
          %v1089 = vpop.trf.xlu0
          %v1090 = vrot.slane %v1034, 4
          %v1091 = vsel %vm846, %v1090, %v970
          %v1093 = vunpack.c.l.s4 1983009808
          %v1094 = vunpack.c.0.s8 %v1093
          %v1095 = vperm.slane %v1091, %v1094
          %v1096 = vrot.slane %v1066, 4
          %v1097 = vsel %vm846, %v1096, %v1002
          %v1099 = vunpack.c.l.s4 1983009808
          %v1100 = vunpack.c.0.s8 %v1099
          %v1101 = vperm.slane %v1097, %v1100
          %v1102 = vrot.slane %v1101, 4
          %v1103 = vsel %vm846, %v1102, %v1095
          %v1104 = vrot.slane %v1095, 4
          %v1105 = vsel %vm846, %v1101, %v1104
          %v1107 = vunpack.c.l.s4 1934713408
          %v1108 = vunpack.c.0.s8 %v1107
          %v1109 = vperm.slane %v1103, %v1108
          %v1111 = vunpack.c.l.s4 1934713408
          %v1112 = vunpack.c.0.s8 %v1111
          %v1113 = vperm.slane %v1105, %v1112
          %v1114 = vrot.slane %v1109, 4
          %v1115 = vsel %vm846, 0, %v1114
          %v1116 = vrot.slane %v1113, 4
          %v1117 = vsel %vm846, 0, %v1116
          %v1118 = vrot.slane %v1050, 4
          %v1119 = vsel %vm846, %v1118, %v986
          %v1121 = vunpack.c.l.s4 1983009808
          %v1122 = vunpack.c.0.s8 %v1121
          %v1123 = vperm.slane %v1119, %v1122
          %v1124 = vrot.slane %v1082, 4
          %v1125 = vsel %vm846, %v1124, %v1018
          %v1127 = vunpack.c.l.s4 1983009808
          %v1128 = vunpack.c.0.s8 %v1127
          %v1129 = vperm.slane %v1125, %v1128
          %v1130 = vrot.slane %v1129, 4
          %v1131 = vsel %vm846, %v1130, %v1123
          %v1132 = vrot.slane %v1123, 4
          %v1133 = vsel %vm846, %v1129, %v1132
          %v1135 = vunpack.c.l.s4 1934713408
          %v1136 = vunpack.c.0.s8 %v1135
          %v1137 = vperm.slane %v1131, %v1136
          %v1139 = vunpack.c.l.s4 1934713408
          %v1140 = vunpack.c.0.s8 %v1139
          %v1141 = vperm.slane %v1133, %v1140
          %v1142 = vrot.slane %v1137, 4
          %v1143 = vsel %vm846, 0, %v1142
          %v1144 = vrot.slane %v1141, 4
          %v1145 = vsel %vm846, 0, %v1144
          %v1148 = vpack.i.b16 %v1137, %v1109
          %v1150 = vshrl.u32 %v1109, 16
          %v1151 = vshrl.u32 %v1137, 16
          %v1152 = vpack.i.b16 %v1151, %v1150
          %v1156 = vpack.i.b16 %v1143, %v1115
          %v1158 = vshrl.u32 %v1115, 16
          %v1159 = vshrl.u32 %v1143, 16
          %v1160 = vpack.i.b16 %v1159, %v1158
          %v1164 = vpack.i.b16 %v1141, %v1113
          %v1166 = vshrl.u32 %v1113, 16
          %v1167 = vshrl.u32 %v1141, 16
          %v1168 = vpack.i.b16 %v1167, %v1166
          %v1172 = vpack.i.b16 %v1145, %v1117
          %v1174 = vshrl.u32 %v1117, 16
          %v1175 = vshrl.u32 %v1145, 16
          %v1176 = vpack.i.b16 %v1175, %v1174
          %1178 = vxpose.xlu0.c.b16.start [1/8] %v1148, 128
          %1179 = vxpose.xlu0.c.b16.cont [2/8] 0, 128
          %1180 = vxpose.xlu0.c.b16.cont [3/8] 0, 128
          %1181 = vxpose.xlu0.c.b16.cont [4/8] 0, 128
          %1182 = vxpose.xlu0.c.b16.cont [5/8] 0, 128
          %1183 = vxpose.xlu0.c.b16.cont [6/8] 0, 128
          %1184 = vxpose.xlu0.c.b16.cont [7/8] 0, 128
          %1185 = vxpose.xlu0.c.b16.end [8/8] 0, 128
          %v1186 = vpop.trf.xlu0
          %v1187 = vpop.trf.xlu0
          %v1188 = vpop.trf.xlu0
          %v1189 = vpop.trf.xlu0
          %v1190 = vpop.trf.xlu0
          %v1191 = vpop.trf.xlu0
          %v1192 = vpop.trf.xlu0
          %v1193 = vpop.trf.xlu0
          %1194 = vxpose.xlu0.c.b16.start [1/8] %v1152, 128
          %1195 = vxpose.xlu0.c.b16.cont [2/8] 0, 128
          %1196 = vxpose.xlu0.c.b16.cont [3/8] 0, 128
          %1197 = vxpose.xlu0.c.b16.cont [4/8] 0, 128
          %1198 = vxpose.xlu0.c.b16.cont [5/8] 0, 128
          %1199 = vxpose.xlu0.c.b16.cont [6/8] 0, 128
          %1200 = vxpose.xlu0.c.b16.cont [7/8] 0, 128
          %1201 = vxpose.xlu0.c.b16.end [8/8] 0, 128
          %v1202 = vpop.trf.xlu0
          %v1203 = vpop.trf.xlu0
          %v1204 = vpop.trf.xlu0
          %v1205 = vpop.trf.xlu0
          %v1206 = vpop.trf.xlu0
          %v1207 = vpop.trf.xlu0
          %v1208 = vpop.trf.xlu0
          %v1209 = vpop.trf.xlu0
          %1210 = vxpose.xlu0.c.b16.start [1/8] %v1156, 128
          %1211 = vxpose.xlu0.c.b16.cont [2/8] 0, 128
          %1212 = vxpose.xlu0.c.b16.cont [3/8] 0, 128
          %1213 = vxpose.xlu0.c.b16.cont [4/8] 0, 128
          %1214 = vxpose.xlu0.c.b16.cont [5/8] 0, 128
          %1215 = vxpose.xlu0.c.b16.cont [6/8] 0, 128
          %1216 = vxpose.xlu0.c.b16.cont [7/8] 0, 128
          %1217 = vxpose.xlu0.c.b16.end [8/8] 0, 128
          %v1218 = vpop.trf.xlu0
          %v1219 = vpop.trf.xlu0
          %v1220 = vpop.trf.xlu0
          %v1221 = vpop.trf.xlu0
          %v1222 = vpop.trf.xlu0
          %v1223 = vpop.trf.xlu0
          %v1224 = vpop.trf.xlu0
          %v1225 = vpop.trf.xlu0
          %1226 = vxpose.xlu0.c.b16.start [1/8] %v1160, 128
          %1227 = vxpose.xlu0.c.b16.cont [2/8] 0, 128
          %1228 = vxpose.xlu0.c.b16.cont [3/8] 0, 128
          %1229 = vxpose.xlu0.c.b16.cont [4/8] 0, 128
          %1230 = vxpose.xlu0.c.b16.cont [5/8] 0, 128
          %1231 = vxpose.xlu0.c.b16.cont [6/8] 0, 128
          %1232 = vxpose.xlu0.c.b16.cont [7/8] 0, 128
          %1233 = vxpose.xlu0.c.b16.end [8/8] 0, 128
          %v1234 = vpop.trf.xlu0
          %v1235 = vpop.trf.xlu0
          %v1236 = vpop.trf.xlu0
          %v1237 = vpop.trf.xlu0
          %v1238 = vpop.trf.xlu0
          %v1239 = vpop.trf.xlu0
          %v1240 = vpop.trf.xlu0
          %v1241 = vpop.trf.xlu0
          %1242 = vxpose.xlu0.c.b16.start [1/8] %v1164, 128
          %1243 = vxpose.xlu0.c.b16.cont [2/8] 0, 128
          %1244 = vxpose.xlu0.c.b16.cont [3/8] 0, 128
          %1245 = vxpose.xlu0.c.b16.cont [4/8] 0, 128
          %1246 = vxpose.xlu0.c.b16.cont [5/8] 0, 128
          %1247 = vxpose.xlu0.c.b16.cont [6/8] 0, 128
          %1248 = vxpose.xlu0.c.b16.cont [7/8] 0, 128
          %1249 = vxpose.xlu0.c.b16.end [8/8] 0, 128
          %v1250 = vpop.trf.xlu0
          %v1251 = vpop.trf.xlu0
          %v1252 = vpop.trf.xlu0
          %v1253 = vpop.trf.xlu0
          %v1254 = vpop.trf.xlu0
          %v1255 = vpop.trf.xlu0
          %v1256 = vpop.trf.xlu0
          %v1257 = vpop.trf.xlu0
          %1258 = vxpose.xlu0.c.b16.start [1/8] %v1168, 128
          %1259 = vxpose.xlu0.c.b16.cont [2/8] 0, 128
          %1260 = vxpose.xlu0.c.b16.cont [3/8] 0, 128
          %1261 = vxpose.xlu0.c.b16.cont [4/8] 0, 128
          %1262 = vxpose.xlu0.c.b16.cont [5/8] 0, 128
          %1263 = vxpose.xlu0.c.b16.cont [6/8] 0, 128
          %1264 = vxpose.xlu0.c.b16.cont [7/8] 0, 128
          %1265 = vxpose.xlu0.c.b16.end [8/8] 0, 128
          %v1266 = vpop.trf.xlu0
          %v1267 = vpop.trf.xlu0
          %v1268 = vpop.trf.xlu0
          %v1269 = vpop.trf.xlu0
          %v1270 = vpop.trf.xlu0
          %v1271 = vpop.trf.xlu0
          %v1272 = vpop.trf.xlu0
          %v1273 = vpop.trf.xlu0
          %1274 = vxpose.xlu0.c.b16.start [1/8] %v1172, 128
          %1275 = vxpose.xlu0.c.b16.cont [2/8] 0, 128
          %1276 = vxpose.xlu0.c.b16.cont [3/8] 0, 128
          %1277 = vxpose.xlu0.c.b16.cont [4/8] 0, 128
          %1278 = vxpose.xlu0.c.b16.cont [5/8] 0, 128
          %1279 = vxpose.xlu0.c.b16.cont [6/8] 0, 128
          %1280 = vxpose.xlu0.c.b16.cont [7/8] 0, 128
          %1281 = vxpose.xlu0.c.b16.end [8/8] 0, 128
          %v1282 = vpop.trf.xlu0
          %v1283 = vpop.trf.xlu0
          %v1284 = vpop.trf.xlu0
          %v1285 = vpop.trf.xlu0
          %v1286 = vpop.trf.xlu0
          %v1287 = vpop.trf.xlu0
          %v1288 = vpop.trf.xlu0
          %v1289 = vpop.trf.xlu0
          %1290 = vxpose.xlu0.c.b16.start [1/8] %v1176, 128
          %1291 = vxpose.xlu0.c.b16.cont [2/8] 0, 128
          %1292 = vxpose.xlu0.c.b16.cont [3/8] 0, 128
          %1293 = vxpose.xlu0.c.b16.cont [4/8] 0, 128
          %1294 = vxpose.xlu0.c.b16.cont [5/8] 0, 128
          %1295 = vxpose.xlu0.c.b16.cont [6/8] 0, 128
          %1296 = vxpose.xlu0.c.b16.cont [7/8] 0, 128
          %1297 = vxpose.xlu0.c.b16.end [8/8] 0, 128
          %v1298 = vpop.trf.xlu0
          %v1299 = vpop.trf.xlu0
          %v1300 = vpop.trf.xlu0
          %v1301 = vpop.trf.xlu0
          %v1302 = vpop.trf.xlu0
          %v1303 = vpop.trf.xlu0
          %v1304 = vpop.trf.xlu0
          %v1305 = vpop.trf.xlu0
          %v1306 = vrot.slane %v1250, 4
          %v1307 = vsel %vm846, %v1306, %v1186
          %v1309 = vunpack.c.l.s4 1983009808
          %v1310 = vunpack.c.0.s8 %v1309
          %v1311 = vperm.slane %v1307, %v1310
          %v1312 = vrot.slane %v1282, 4
          %v1313 = vsel %vm846, %v1312, %v1218
          %v1315 = vunpack.c.l.s4 1983009808
          %v1316 = vunpack.c.0.s8 %v1315
          %v1317 = vperm.slane %v1313, %v1316
          %v1318 = vrot.slane %v1317, 4
          %v1319 = vsel %vm846, %v1318, %v1311
          %v1321 = vunpack.c.l.s4 1934713408
          %v1322 = vunpack.c.0.s8 %v1321
          %v1323 = vperm.slane %v1319, %v1322
          %v1324 = vrot.slane %v1323, 4
          %v1325 = vsel %vm846, 0, %v1324
          %v1326 = vrot.slane %v1266, 4
          %v1327 = vsel %vm846, %v1326, %v1202
          %v1329 = vunpack.c.l.s4 1983009808
          %v1330 = vunpack.c.0.s8 %v1329
          %v1331 = vperm.slane %v1327, %v1330
          %v1332 = vrot.slane %v1298, 4
          %v1333 = vsel %vm846, %v1332, %v1234
          %v1335 = vunpack.c.l.s4 1983009808
          %v1336 = vunpack.c.0.s8 %v1335
          %v1337 = vperm.slane %v1333, %v1336
          %v1338 = vrot.slane %v1337, 4
          %v1339 = vsel %vm846, %v1338, %v1331
          %v1341 = vunpack.c.l.s4 1934713408
          %v1342 = vunpack.c.0.s8 %v1341
          %v1343 = vperm.slane %v1339, %v1342
          %v1344 = vrot.slane %v1343, 4
          %v1345 = vsel %vm846, 0, %v1344
          %v1348 = vpack.i.b16 %v1343, %v1323
          %v1349 = vshrl.u32 %v1323, 16
          %v1350 = vshrl.u32 %v1343, 16
          %v1351 = vpack.i.b16 %v1350, %v1349
          %v1354 = vpack.i.b16 %v1345, %v1325
          %v1355 = vshrl.u32 %v1325, 16
          %v1356 = vshrl.u32 %v1345, 16
          %v1357 = vpack.i.b16 %v1356, %v1355
          %vm1358 = vcmask 64512
          %v1360 = vsel %vm1358, %v805, 0
          %vm1362 = vcmask 1043456
          %v1364 = vsel %vm1362, %v1348, 0
          %1366 = vmatpush.bf16.msra.mxu0 0
          %1367 = vmatpush.bf16.msra.mxu0 0
          %1368 = vmatpush.bf16.msra.mxu0 0
          %1369 = vmatpush.bf16.msra.mxu0 0
          %1370 = vmatpush.bf16.msra.mxu0 0
          %1371 = vmatpush.bf16.msra.mxu0 0
          %1372 = vmatpush.bf16.msra.mxu0 0
          %1373 = vmatpush.bf16.msra.mxu0 %v1364
          %1374 = vmatmul.bf16.gmra.mxu0 %v1360
          %v1375 = vpop.f32.mrf.mxu0
          %v1376 = vadd.f32 0.0, %v1375
          %v1377 = vpop.f32.mrf.mxu0
          %1378 = vdwg.mxu0
          %v1380 = vsel %vm1358, %v808, 0
          %v1383 = vsel %vm1362, %v1351, 0
          %1385 = vmatpush.bf16.msra.mxu0 0
          %1386 = vmatpush.bf16.msra.mxu0 0
          %1387 = vmatpush.bf16.msra.mxu0 0
          %1388 = vmatpush.bf16.msra.mxu0 0
          %1389 = vmatpush.bf16.msra.mxu0 0
          %1390 = vmatpush.bf16.msra.mxu0 0
          %1391 = vmatpush.bf16.msra.mxu0 0
          %1392 = vmatpush.bf16.msra.mxu0 %v1383
          %1393 = vmatmul.bf16.gmra.mxu0 %v1380
          %v1394 = vpop.f32.mrf.mxu0
          %v1395 = vadd.f32 0.0, %v1394
          %v1396 = vpop.f32.mrf.mxu0
          %1397 = vdwg.mxu0
          %v1399 = vsel %vm1358, %v810, 0
          %v1402 = vsel %vm1362, %v1354, 0
          %1404 = vmatpush.bf16.msra.mxu0 0
          %1405 = vmatpush.bf16.msra.mxu0 0
          %1406 = vmatpush.bf16.msra.mxu0 0
          %1407 = vmatpush.bf16.msra.mxu0 0
          %1408 = vmatpush.bf16.msra.mxu0 0
          %1409 = vmatpush.bf16.msra.mxu0 0
          %1410 = vmatpush.bf16.msra.mxu0 0
          %1411 = vmatpush.bf16.msra.mxu0 %v1402
          %1412 = vmatmul.bf16.gmra.mxu0 %v1399
          %v1413 = vpop.f32.mrf.mxu0
          %v1414 = vadd.f32 0.0, %v1413
          %v1415 = vpop.f32.mrf.mxu0
          %1416 = vdwg.mxu0
          %v1418 = vsel %vm1358, %v812, 0
          %v1421 = vsel %vm1362, %v1357, 0
          %1423 = vmatpush.bf16.msra.mxu0 0
          %1424 = vmatpush.bf16.msra.mxu0 0
          %1425 = vmatpush.bf16.msra.mxu0 0
          %1426 = vmatpush.bf16.msra.mxu0 0
          %1427 = vmatpush.bf16.msra.mxu0 0
          %1428 = vmatpush.bf16.msra.mxu0 0
          %1429 = vmatpush.bf16.msra.mxu0 0
          %1430 = vmatpush.bf16.msra.mxu0 %v1421
          %1431 = vmatmul.bf16.gmra.mxu0 %v1418
          %v1432 = vpop.f32.mrf.mxu0
          %v1433 = vadd.f32 0.0, %v1432
          %v1434 = vpop.f32.mrf.mxu0
          %1435 = vdwg.mxu0
          %v1436 = vld [vmem:[#allocation5] sm:$0xff]
          %v1437 = vld [vmem:[#allocation5 + $0x8] sm:$0xff]
          %v1438 = vld [vmem:[#allocation5 + $0x10] sm:$0xff]
          %v1439 = vld [vmem:[#allocation5 + $0x18] sm:$0xff]
          %v1440 = vsel %vm1358, %v1376, -inf
          %1441 = vmax.xlane.f32.xlu0 %v1440
          %v1442 = vpop.xlane.xlu0 %1441
          %v1443 = vsel %vm1358, %v1395, -inf
          %1444 = vmax.xlane.f32.xlu0 %v1443
          %v1445 = vpop.xlane.xlu0 %1444
          %v1446 = vsel %vm1358, %v1414, -inf
          %1447 = vmax.xlane.f32.xlu0 %v1446
          %v1448 = vpop.xlane.xlu0 %1447
          %v1449 = vsel %vm1358, %v1433, -inf
          %1450 = vmax.xlane.f32.xlu0 %v1449
          %v1451 = vpop.xlane.xlu0 %1450
          %v1452 = vmax.f32 %v1436, %v1442
          %v1453 = vmax.f32 %v1437, %v1445
          %v1454 = vmax.f32 %v1438, %v1448
          %v1455 = vmax.f32 %v1439, %v1451
          %v1456 = vsub.f32 %v1436, %v1452
          %v1457 = vsub.f32 %v1437, %v1453
          %v1458 = vsub.f32 %v1438, %v1454
          %v1459 = vsub.f32 %v1439, %v1455
          %v1460 = vmul.f32 %v1456, 1.442695
          %v1461 = vpow.pop %v1460
          %v1462 = vmul.f32 %v1457, 1.442695
          %v1463 = vpow.pop %v1462
          %v1464 = vmul.f32 %v1458, 1.442695
          %v1465 = vpow.pop %v1464
          %v1466 = vmul.f32 %v1459, 1.442695
          %v1467 = vpow.pop %v1466
          %1469 = vset.pattern.permute.xlu0 0
          %1470 = vperm.xlu0 %1469, %v1452
          %v1471 = vpop.permute.xlu0 %1470
          %1474 = vset.pattern.permute.xlu0 0
          %1475 = vperm.xlu0 %1474, %v1453
          %v1476 = vpop.permute.xlu0 %1475
          %1479 = vset.pattern.permute.xlu0 0
          %1480 = vperm.xlu0 %1479, %v1454
          %v1481 = vpop.permute.xlu0 %1480
          %1484 = vset.pattern.permute.xlu0 0
          %1485 = vperm.xlu0 %1484, %v1455
          %v1486 = vpop.permute.xlu0 %1485
          %v1488 = vsub.f32 %v1376, %v1471
          %v1489 = vsub.f32 %v1395, %v1476
          %v1490 = vsub.f32 %v1414, %v1481
          %v1491 = vsub.f32 %v1433, %v1486
          %v1492 = vmul.f32 %v1488, 1.442695
          %v1493 = vpow.pop %v1492
          %v1494 = vmul.f32 %v1489, 1.442695
          %v1495 = vpow.pop %v1494
          %v1496 = vmul.f32 %v1490, 1.442695
          %v1497 = vpow.pop %v1496
          %v1498 = vmul.f32 %v1491, 1.442695
          %v1499 = vpow.pop %v1498
          %v1500 = vld [vmem:[#allocation6] sm:$0xff]
          %v1501 = vld [vmem:[#allocation6 + $0x8] sm:$0xff]
          %v1502 = vld [vmem:[#allocation6 + $0x10] sm:$0xff]
          %v1503 = vld [vmem:[#allocation6 + $0x18] sm:$0xff]
          %v1504 = vmul.f32 %v1461, %v1500
          %v1505 = vmul.f32 %v1463, %v1501
          %v1506 = vmul.f32 %v1465, %v1502
          %v1507 = vmul.f32 %v1467, %v1503
          %v1508 = vsel %vm1358, %v1493, 0.0
          %1509 = vadd.xlane.f32.xlu0 %v1508
          %v1510 = vpop.xlane.xlu0 %1509
          %v1511 = vsel %vm1358, %v1495, 0.0
          %1512 = vadd.xlane.f32.xlu0 %v1511
          %v1513 = vpop.xlane.xlu0 %1512
          %v1514 = vsel %vm1358, %v1497, 0.0
          %1515 = vadd.xlane.f32.xlu0 %v1514
          %v1516 = vpop.xlane.xlu0 %1515
          %v1517 = vsel %vm1358, %v1499, 0.0
          %1518 = vadd.xlane.f32.xlu0 %v1517
          %v1519 = vpop.xlane.xlu0 %1518
          %v1520 = vadd.f32 %v1504, %v1510
          %v1521 = vadd.f32 %v1505, %v1513
          %v1522 = vadd.f32 %v1506, %v1516
          %v1523 = vadd.f32 %v1507, %v1519
          %vm1524 = vcmask 7168
          %1525 = vst.msk [vmem:[#allocation6] sm:$0xff] %vm1524, %v1520
          %1526 = vst.msk [vmem:[#allocation6 + $0x8] sm:$0xff] %vm1524, %v1521
          %1527 = vst.msk [vmem:[#allocation6 + $0x10] sm:$0xff] %vm1524, %v1522
          %1528 = vst.msk [vmem:[#allocation6 + $0x18] sm:$0xff] %vm1524, %v1523
          %v1529 = vld [vmem:[#allocation7] sm:$0xff]
          %v1530 = vld [vmem:[#allocation7 + $0x8] sm:$0xff]
          %v1531 = vld [vmem:[#allocation7 + $0x10] sm:$0xff]
          %v1532 = vld [vmem:[#allocation7 + $0x18] sm:$0xff]
          %1534 = vset.pattern.permute.xlu0 0
          %1535 = vperm.xlu0 %1534, %v1461
          %v1536 = vpop.permute.xlu0 %1535
          %1539 = vset.pattern.permute.xlu0 0
          %1540 = vperm.xlu0 %1539, %v1463
          %v1541 = vpop.permute.xlu0 %1540
          %1544 = vset.pattern.permute.xlu0 0
          %1545 = vperm.xlu0 %1544, %v1465
          %v1546 = vpop.permute.xlu0 %1545
          %1549 = vset.pattern.permute.xlu0 0
          %1550 = vperm.xlu0 %1549, %v1467
          %v1551 = vpop.permute.xlu0 %1550
          %v1553 = vmul.f32 %v1536, %v1529
          %v1554 = vmul.f32 %v1541, %v1530
          %v1555 = vmul.f32 %v1546, %v1531
          %v1556 = vmul.f32 %v1551, %v1532
          %v1557 = vpack.c.bf16 %v1493, %v1493
          %v1558 = vpack.c.bf16 %v1495, %v1495
          %v1559 = vpack.c.bf16 %v1497, %v1497
          %v1560 = vpack.c.bf16 %v1499, %v1499
          %v1561 = vsel %vm846, %v934, %v927
          %v1563 = vunpack.c.l.s4 1983009808
          %v1564 = vunpack.c.0.s8 %v1563
          %v1565 = vperm.slane %v1561, %v1564
          %v1566 = vrot.slane %v935, 4
          %v1567 = vsel %vm846, %v1566, %v933
          %v1569 = vunpack.c.l.s4 1983009808
          %v1570 = vunpack.c.0.s8 %v1569
          %v1571 = vperm.slane %v1567, %v1570
          %v1572 = vrot.slane %v1571, 4
          %v1573 = vsel %vm846, %v1572, %v1565
          %v1575 = vunpack.c.l.s4 1934713408
          %v1576 = vunpack.c.0.s8 %v1575
          %v1577 = vperm.slane %v1573, %v1576
          %v1578 = vrot.slane %v1577, 4
          %v1579 = vsel %vm846, 0, %v1578
          %v1580 = vsel %vm846, %v960, %v953
          %v1582 = vunpack.c.l.s4 1983009808
          %v1583 = vunpack.c.0.s8 %v1582
          %v1584 = vperm.slane %v1580, %v1583
          %v1585 = vrot.slane %v961, 4
          %v1586 = vsel %vm846, %v1585, %v959
          %v1588 = vunpack.c.l.s4 1983009808
          %v1589 = vunpack.c.0.s8 %v1588
          %v1590 = vperm.slane %v1586, %v1589
          %v1591 = vrot.slane %v1590, 4
          %v1592 = vsel %vm846, %v1591, %v1584
          %v1594 = vunpack.c.l.s4 1934713408
          %v1595 = vunpack.c.0.s8 %v1594
          %v1596 = vperm.slane %v1592, %v1595
          %v1597 = vrot.slane %v1596, 4
          %v1598 = vsel %vm846, 0, %v1597
          %v1601 = vpack.i.b16 %v1596, %v1577
          %v1602 = vshrl.u32 %v1577, 16
          %v1603 = vshrl.u32 %v1596, 16
          %v1604 = vpack.i.b16 %v1603, %v1602
          %v1607 = vpack.i.b16 %v1598, %v1579
          %v1608 = vshrl.u32 %v1579, 16
          %v1609 = vshrl.u32 %v1598, 16
          %v1610 = vpack.i.b16 %v1609, %v1608
          %v1612 = vsel %vm1358, %v1557, 0
          %v1615 = vsel %vm1362, %v1601, 0
          %1617 = vmatpush.bf16.msra.mxu0 0
          %1618 = vmatpush.bf16.msra.mxu0 0
          %1619 = vmatpush.bf16.msra.mxu0 0
          %1620 = vmatpush.bf16.msra.mxu0 0
          %1621 = vmatpush.bf16.msra.mxu0 0
          %1622 = vmatpush.bf16.msra.mxu0 0
          %1623 = vmatpush.bf16.msra.mxu0 0
          %1624 = vmatpush.bf16.msra.mxu0 %v1615
          %1625 = vmatmul.bf16.gmra.mxu0 %v1612
          %v1626 = vpop.f32.mrf.mxu0
          %v1627 = vadd.f32 0.0, %v1626
          %v1628 = vpop.f32.mrf.mxu0
          %1629 = vdwg.mxu0
          %v1631 = vsel %vm1358, %v1558, 0
          %v1634 = vsel %vm1362, %v1604, 0
          %1636 = vmatpush.bf16.msra.mxu0 0
          %1637 = vmatpush.bf16.msra.mxu0 0
          %1638 = vmatpush.bf16.msra.mxu0 0
          %1639 = vmatpush.bf16.msra.mxu0 0
          %1640 = vmatpush.bf16.msra.mxu0 0
          %1641 = vmatpush.bf16.msra.mxu0 0
          %1642 = vmatpush.bf16.msra.mxu0 0
          %1643 = vmatpush.bf16.msra.mxu0 %v1634
          %1644 = vmatmul.bf16.gmra.mxu0 %v1631
          %v1645 = vpop.f32.mrf.mxu0
          %v1646 = vadd.f32 0.0, %v1645
          %v1647 = vpop.f32.mrf.mxu0
          %1648 = vdwg.mxu0
          %v1650 = vsel %vm1358, %v1559, 0
          %v1653 = vsel %vm1362, %v1607, 0
          %1655 = vmatpush.bf16.msra.mxu0 0
          %1656 = vmatpush.bf16.msra.mxu0 0
          %1657 = vmatpush.bf16.msra.mxu0 0
          %1658 = vmatpush.bf16.msra.mxu0 0
          %1659 = vmatpush.bf16.msra.mxu0 0
          %1660 = vmatpush.bf16.msra.mxu0 0
          %1661 = vmatpush.bf16.msra.mxu0 0
          %1662 = vmatpush.bf16.msra.mxu0 %v1653
          %1663 = vmatmul.bf16.gmra.mxu0 %v1650
          %v1664 = vpop.f32.mrf.mxu0
          %v1665 = vadd.f32 0.0, %v1664
          %v1666 = vpop.f32.mrf.mxu0
          %1667 = vdwg.mxu0
          %v1669 = vsel %vm1358, %v1560, 0
          %v1672 = vsel %vm1362, %v1610, 0
          %1674 = vmatpush.bf16.msra.mxu0 0
          %1675 = vmatpush.bf16.msra.mxu0 0
          %1676 = vmatpush.bf16.msra.mxu0 0
          %1677 = vmatpush.bf16.msra.mxu0 0
          %1678 = vmatpush.bf16.msra.mxu0 0
          %1679 = vmatpush.bf16.msra.mxu0 0
          %1680 = vmatpush.bf16.msra.mxu0 0
          %1681 = vmatpush.bf16.msra.mxu0 %v1672
          %1682 = vmatmul.bf16.gmra.mxu0 %v1669
          %v1683 = vpop.f32.mrf.mxu0
          %v1684 = vadd.f32 0.0, %v1683
          %v1685 = vpop.f32.mrf.mxu0
          %1686 = vdwg.mxu0
          %v1687 = vadd.f32 %v1553, %v1627
          %v1688 = vadd.f32 %v1554, %v1646
          %v1689 = vadd.f32 %v1555, %v1665
          %v1690 = vadd.f32 %v1556, %v1684
          %1691 = vst.msk [vmem:[#allocation7] sm:$0xff] %vm1358, %v1687
          %1692 = vst.msk [vmem:[#allocation7 + $0x8] sm:$0xff] %vm1358, %v1688
          %1693 = vst.msk [vmem:[#allocation7 + $0x10] sm:$0xff] %vm1358, %v1689
          %1694 = vst.msk [vmem:[#allocation7 + $0x18] sm:$0xff] %vm1358, %v1690
          %1695 = vst.msk [vmem:[#allocation5] sm:$0xff] %vm1524, %v1452
          %1696 = vst.msk [vmem:[#allocation5 + $0x8] sm:$0xff] %vm1524, %v1453
          %1697 = vst.msk [vmem:[#allocation5 + $0x10] sm:$0xff] %vm1524, %v1454
          %1698 = vst.msk [vmem:[#allocation5 + $0x18] sm:$0xff] %vm1524, %v1455
        $region108: #{tpu_custom_call.1} parent=87 // pred_fallthru
          _
        %p1699 = scmp.eq.s32.totalorder %s40, %s39
        // Predicated region
        $region109: #{tpu_custom_call.1} parent=87 // pred_check
          %p1700 = pneg %p1699
        $region110: #{tpu_custom_call.1} parent=87 // pred_check_branch
          %1702 = sbr.rel (%p1700) target = $region112
        $region111: #{tpu_custom_call.1} parent=87 // pred_region
          %v1703 = vld [vmem:[#allocation2] sm:$0xf]
          %1705 = vrot.lane.b32.xlu0 %v1703, 120
          %v1706 = vpop.permute.xlu0 %1705
          %1707 = vrot.lane.b32.xlu0 %v1703, 112
          %v1708 = vpop.permute.xlu0 %1707
          %1709 = vrot.lane.b32.xlu0 %v1703, 104
          %v1710 = vpop.permute.xlu0 %1709
          %s1711 = smul.addr %s40, 4
          %s1712 = scalar_lea.vmem [#allocation3], %s1711
          %v1713 = vld [vmem:[%s1712] sm:$0xf]
          %1715 = vrot.lane.b32.xlu0 %v1713, 120
          %v1716 = vpop.permute.xlu0 %1715
          %1717 = vrot.lane.b32.xlu0 %v1713, 112
          %v1718 = vpop.permute.xlu0 %1717
          %1719 = vrot.lane.b32.xlu0 %v1713, 104
          %v1720 = vpop.permute.xlu0 %1719
          %v1723 = vpack.i.b16 %v1716, %v1713
          %v1724 = vshrl.u32 %v1713, 16
          %v1725 = vshrl.u32 %v1716, 16
          %v1726 = vpack.i.b16 %v1725, %v1724
          %v1729 = vpack.i.b16 %v1720, %v1718
          %v1730 = vshrl.u32 %v1718, 16
          %v1731 = vshrl.u32 %v1720, 16
          %v1732 = vpack.i.b16 %v1731, %v1730
          %v1735 = vunpack.c.l.s4 1983009808
          %v1736 = vunpack.c.0.s8 %v1735
          %v1737 = vperm.slane %v1723, %v1736
          %v1740 = vunpack.c.l.s4 1983009808
          %v1741 = vunpack.c.0.s8 %v1740
          %v1742 = vperm.slane %v1729, %v1741
          %v1743 = vrot.slane %v1742, 4
          %vm1744 = vcmask 1047556
          %v1745 = vsel %vm1744, %v1743, %v1737
          %v1746 = vrot.slane %v1737, 4
          %v1747 = vsel %vm1744, %v1742, %v1746
          %v1749 = vunpack.c.l.s4 1934713408
          %v1750 = vunpack.c.0.s8 %v1749
          %v1751 = vperm.slane %v1745, %v1750
          %v1753 = vunpack.c.l.s4 1934713408
          %v1754 = vunpack.c.0.s8 %v1753
          %v1755 = vperm.slane %v1747, %v1754
          %v1756 = vrot.slane %v1751, 4
          %v1757 = vsel %vm1744, 0, %v1756
          %v1758 = vrot.slane %v1755, 4
          %v1759 = vsel %vm1744, 0, %v1758
          %v1762 = vunpack.c.l.s4 1983009808
          %v1763 = vunpack.c.0.s8 %v1762
          %v1764 = vperm.slane %v1726, %v1763
          %v1767 = vunpack.c.l.s4 1983009808
          %v1768 = vunpack.c.0.s8 %v1767
          %v1769 = vperm.slane %v1732, %v1768
          %v1770 = vrot.slane %v1769, 4
          %v1771 = vsel %vm1744, %v1770, %v1764
          %v1772 = vrot.slane %v1764, 4
          %v1773 = vsel %vm1744, %v1769, %v1772
          %v1775 = vunpack.c.l.s4 1934713408
          %v1776 = vunpack.c.0.s8 %v1775
          %v1777 = vperm.slane %v1771, %v1776
          %v1779 = vunpack.c.l.s4 1934713408
          %v1780 = vunpack.c.0.s8 %v1779
          %v1781 = vperm.slane %v1773, %v1780
          %v1782 = vrot.slane %v1777, 4
          %v1783 = vsel %vm1744, 0, %v1782
          %v1784 = vrot.slane %v1781, 4
          %v1785 = vsel %vm1744, 0, %v1784
          %s1786 = smul.addr %s40, 4
          %s1787 = scalar_lea.vmem [#allocation4], %s1786
          %v1788 = vld [vmem:[%s1787] sm:$0xf]
          %1790 = vrot.lane.b32.xlu0 %v1788, 120
          %v1791 = vpop.permute.xlu0 %1790
          %1792 = vrot.lane.b32.xlu0 %v1788, 112
          %v1793 = vpop.permute.xlu0 %1792
          %1794 = vrot.lane.b32.xlu0 %v1788, 104
          %v1795 = vpop.permute.xlu0 %1794
          %v1798 = vpack.i.b16 %v1791, %v1788
          %v1799 = vshrl.u32 %v1788, 16
          %v1800 = vshrl.u32 %v1791, 16
          %v1801 = vpack.i.b16 %v1800, %v1799
          %v1804 = vpack.i.b16 %v1795, %v1793
          %v1805 = vshrl.u32 %v1793, 16
          %v1806 = vshrl.u32 %v1795, 16
          %v1807 = vpack.i.b16 %v1806, %v1805
          %v1810 = vunpack.c.l.s4 1983009808
          %v1811 = vunpack.c.0.s8 %v1810
          %v1812 = vperm.slane %v1798, %v1811
          %v1815 = vunpack.c.l.s4 1983009808
          %v1816 = vunpack.c.0.s8 %v1815
          %v1817 = vperm.slane %v1804, %v1816
          %v1818 = vrot.slane %v1817, 4
          %v1819 = vsel %vm1744, %v1818, %v1812
          %v1820 = vrot.slane %v1812, 4
          %v1821 = vsel %vm1744, %v1817, %v1820
          %v1823 = vunpack.c.l.s4 1934713408
          %v1824 = vunpack.c.0.s8 %v1823
          %v1825 = vperm.slane %v1819, %v1824
          %v1827 = vunpack.c.l.s4 1934713408
          %v1828 = vunpack.c.0.s8 %v1827
          %v1829 = vperm.slane %v1821, %v1828
          %v1830 = vrot.slane %v1825, 4
          %v1831 = vsel %vm1744, 0, %v1830
          %v1832 = vrot.slane %v1829, 4
          %v1833 = vsel %vm1744, 0, %v1832
          %v1836 = vunpack.c.l.s4 1983009808
          %v1837 = vunpack.c.0.s8 %v1836
          %v1838 = vperm.slane %v1801, %v1837
          %v1841 = vunpack.c.l.s4 1983009808
          %v1842 = vunpack.c.0.s8 %v1841
          %v1843 = vperm.slane %v1807, %v1842
          %v1844 = vrot.slane %v1843, 4
          %v1845 = vsel %vm1744, %v1844, %v1838
          %v1846 = vrot.slane %v1838, 4
          %v1847 = vsel %vm1744, %v1843, %v1846
          %v1849 = vunpack.c.l.s4 1934713408
          %v1850 = vunpack.c.0.s8 %v1849
          %v1851 = vperm.slane %v1845, %v1850
          %v1853 = vunpack.c.l.s4 1934713408
          %v1854 = vunpack.c.0.s8 %v1853
          %v1855 = vperm.slane %v1847, %v1854
          %v1856 = vrot.slane %v1851, 4
          %v1857 = vsel %vm1744, 0, %v1856
          %v1858 = vrot.slane %v1855, 4
          %v1859 = vsel %vm1744, 0, %v1858
          %1860 = vxpose.xlu0.c.b16.start [1/8] %v1751, 128
          %1861 = vxpose.xlu0.c.b16.cont [2/8] 0, 128
          %1862 = vxpose.xlu0.c.b16.cont [3/8] 0, 128
          %1863 = vxpose.xlu0.c.b16.cont [4/8] 0, 128
          %1864 = vxpose.xlu0.c.b16.cont [5/8] 0, 128
          %1865 = vxpose.xlu0.c.b16.cont [6/8] 0, 128
          %1866 = vxpose.xlu0.c.b16.cont [7/8] 0, 128
          %1867 = vxpose.xlu0.c.b16.end [8/8] 0, 128
          %v1868 = vpop.trf.xlu0
          %v1869 = vpop.trf.xlu0
          %v1870 = vpop.trf.xlu0
          %v1871 = vpop.trf.xlu0
          %v1872 = vpop.trf.xlu0
          %v1873 = vpop.trf.xlu0
          %v1874 = vpop.trf.xlu0
          %v1875 = vpop.trf.xlu0
          %1876 = vxpose.xlu0.c.b16.start [1/8] %v1777, 128
          %1877 = vxpose.xlu0.c.b16.cont [2/8] 0, 128
          %1878 = vxpose.xlu0.c.b16.cont [3/8] 0, 128
          %1879 = vxpose.xlu0.c.b16.cont [4/8] 0, 128
          %1880 = vxpose.xlu0.c.b16.cont [5/8] 0, 128
          %1881 = vxpose.xlu0.c.b16.cont [6/8] 0, 128
          %1882 = vxpose.xlu0.c.b16.cont [7/8] 0, 128
          %1883 = vxpose.xlu0.c.b16.end [8/8] 0, 128
          %v1884 = vpop.trf.xlu0
          %v1885 = vpop.trf.xlu0
          %v1886 = vpop.trf.xlu0
          %v1887 = vpop.trf.xlu0
          %v1888 = vpop.trf.xlu0
          %v1889 = vpop.trf.xlu0
          %v1890 = vpop.trf.xlu0
          %v1891 = vpop.trf.xlu0
          %1892 = vxpose.xlu0.c.b16.start [1/8] %v1757, 128
          %1893 = vxpose.xlu0.c.b16.cont [2/8] 0, 128
          %1894 = vxpose.xlu0.c.b16.cont [3/8] 0, 128
          %1895 = vxpose.xlu0.c.b16.cont [4/8] 0, 128
          %1896 = vxpose.xlu0.c.b16.cont [5/8] 0, 128
          %1897 = vxpose.xlu0.c.b16.cont [6/8] 0, 128
          %1898 = vxpose.xlu0.c.b16.cont [7/8] 0, 128
          %1899 = vxpose.xlu0.c.b16.end [8/8] 0, 128
          %v1900 = vpop.trf.xlu0
          %v1901 = vpop.trf.xlu0
          %v1902 = vpop.trf.xlu0
          %v1903 = vpop.trf.xlu0
          %v1904 = vpop.trf.xlu0
          %v1905 = vpop.trf.xlu0
          %v1906 = vpop.trf.xlu0
          %v1907 = vpop.trf.xlu0
          %1908 = vxpose.xlu0.c.b16.start [1/8] %v1783, 128
          %1909 = vxpose.xlu0.c.b16.cont [2/8] 0, 128
          %1910 = vxpose.xlu0.c.b16.cont [3/8] 0, 128
          %1911 = vxpose.xlu0.c.b16.cont [4/8] 0, 128
          %1912 = vxpose.xlu0.c.b16.cont [5/8] 0, 128
          %1913 = vxpose.xlu0.c.b16.cont [6/8] 0, 128
          %1914 = vxpose.xlu0.c.b16.cont [7/8] 0, 128
          %1915 = vxpose.xlu0.c.b16.end [8/8] 0, 128
          %v1916 = vpop.trf.xlu0
          %v1917 = vpop.trf.xlu0
          %v1918 = vpop.trf.xlu0
          %v1919 = vpop.trf.xlu0
          %v1920 = vpop.trf.xlu0
          %v1921 = vpop.trf.xlu0
          %v1922 = vpop.trf.xlu0
          %v1923 = vpop.trf.xlu0
          %1924 = vxpose.xlu0.c.b16.start [1/8] %v1755, 128
          %1925 = vxpose.xlu0.c.b16.cont [2/8] 0, 128
          %1926 = vxpose.xlu0.c.b16.cont [3/8] 0, 128
          %1927 = vxpose.xlu0.c.b16.cont [4/8] 0, 128
          %1928 = vxpose.xlu0.c.b16.cont [5/8] 0, 128
          %1929 = vxpose.xlu0.c.b16.cont [6/8] 0, 128
          %1930 = vxpose.xlu0.c.b16.cont [7/8] 0, 128
          %1931 = vxpose.xlu0.c.b16.end [8/8] 0, 128
          %v1932 = vpop.trf.xlu0
          %v1933 = vpop.trf.xlu0
          %v1934 = vpop.trf.xlu0
          %v1935 = vpop.trf.xlu0
          %v1936 = vpop.trf.xlu0
          %v1937 = vpop.trf.xlu0
          %v1938 = vpop.trf.xlu0
          %v1939 = vpop.trf.xlu0
          %1940 = vxpose.xlu0.c.b16.start [1/8] %v1781, 128
          %1941 = vxpose.xlu0.c.b16.cont [2/8] 0, 128
          %1942 = vxpose.xlu0.c.b16.cont [3/8] 0, 128
          %1943 = vxpose.xlu0.c.b16.cont [4/8] 0, 128
          %1944 = vxpose.xlu0.c.b16.cont [5/8] 0, 128
          %1945 = vxpose.xlu0.c.b16.cont [6/8] 0, 128
          %1946 = vxpose.xlu0.c.b16.cont [7/8] 0, 128
          %1947 = vxpose.xlu0.c.b16.end [8/8] 0, 128
          %v1948 = vpop.trf.xlu0
          %v1949 = vpop.trf.xlu0
          %v1950 = vpop.trf.xlu0
          %v1951 = vpop.trf.xlu0
          %v1952 = vpop.trf.xlu0
          %v1953 = vpop.trf.xlu0
          %v1954 = vpop.trf.xlu0
          %v1955 = vpop.trf.xlu0
          %1956 = vxpose.xlu0.c.b16.start [1/8] %v1759, 128
          %1957 = vxpose.xlu0.c.b16.cont [2/8] 0, 128
          %1958 = vxpose.xlu0.c.b16.cont [3/8] 0, 128
          %1959 = vxpose.xlu0.c.b16.cont [4/8] 0, 128
          %1960 = vxpose.xlu0.c.b16.cont [5/8] 0, 128
          %1961 = vxpose.xlu0.c.b16.cont [6/8] 0, 128
          %1962 = vxpose.xlu0.c.b16.cont [7/8] 0, 128
          %1963 = vxpose.xlu0.c.b16.end [8/8] 0, 128
          %v1964 = vpop.trf.xlu0
          %v1965 = vpop.trf.xlu0
          %v1966 = vpop.trf.xlu0
          %v1967 = vpop.trf.xlu0
          %v1968 = vpop.trf.xlu0
          %v1969 = vpop.trf.xlu0
          %v1970 = vpop.trf.xlu0
          %v1971 = vpop.trf.xlu0
          %1972 = vxpose.xlu0.c.b16.start [1/8] %v1785, 128
          %1973 = vxpose.xlu0.c.b16.cont [2/8] 0, 128
          %1974 = vxpose.xlu0.c.b16.cont [3/8] 0, 128
          %1975 = vxpose.xlu0.c.b16.cont [4/8] 0, 128
          %1976 = vxpose.xlu0.c.b16.cont [5/8] 0, 128
          %1977 = vxpose.xlu0.c.b16.cont [6/8] 0, 128
          %1978 = vxpose.xlu0.c.b16.cont [7/8] 0, 128
          %1979 = vxpose.xlu0.c.b16.end [8/8] 0, 128
          %v1980 = vpop.trf.xlu0
          %v1981 = vpop.trf.xlu0
          %v1982 = vpop.trf.xlu0
          %v1983 = vpop.trf.xlu0
          %v1984 = vpop.trf.xlu0
          %v1985 = vpop.trf.xlu0
          %v1986 = vpop.trf.xlu0
          %v1987 = vpop.trf.xlu0
          %v1988 = vrot.slane %v1932, 4
          %v1989 = vsel %vm1744, %v1988, %v1868
          %v1991 = vunpack.c.l.s4 1983009808
          %v1992 = vunpack.c.0.s8 %v1991
          %v1993 = vperm.slane %v1989, %v1992
          %v1994 = vrot.slane %v1964, 4
          %v1995 = vsel %vm1744, %v1994, %v1900
          %v1997 = vunpack.c.l.s4 1983009808
          %v1998 = vunpack.c.0.s8 %v1997
          %v1999 = vperm.slane %v1995, %v1998
          %v2000 = vrot.slane %v1999, 4
          %v2001 = vsel %vm1744, %v2000, %v1993
          %v2002 = vrot.slane %v1993, 4
          %v2003 = vsel %vm1744, %v1999, %v2002
          %v2005 = vunpack.c.l.s4 1934713408
          %v2006 = vunpack.c.0.s8 %v2005
          %v2007 = vperm.slane %v2001, %v2006
          %v2009 = vunpack.c.l.s4 1934713408
          %v2010 = vunpack.c.0.s8 %v2009
          %v2011 = vperm.slane %v2003, %v2010
          %v2012 = vrot.slane %v2007, 4
          %v2013 = vsel %vm1744, 0, %v2012
          %v2014 = vrot.slane %v2011, 4
          %v2015 = vsel %vm1744, 0, %v2014
          %v2016 = vrot.slane %v1948, 4
          %v2017 = vsel %vm1744, %v2016, %v1884
          %v2019 = vunpack.c.l.s4 1983009808
          %v2020 = vunpack.c.0.s8 %v2019
          %v2021 = vperm.slane %v2017, %v2020
          %v2022 = vrot.slane %v1980, 4
          %v2023 = vsel %vm1744, %v2022, %v1916
          %v2025 = vunpack.c.l.s4 1983009808
          %v2026 = vunpack.c.0.s8 %v2025
          %v2027 = vperm.slane %v2023, %v2026
          %v2028 = vrot.slane %v2027, 4
          %v2029 = vsel %vm1744, %v2028, %v2021
          %v2030 = vrot.slane %v2021, 4
          %v2031 = vsel %vm1744, %v2027, %v2030
          %v2033 = vunpack.c.l.s4 1934713408
          %v2034 = vunpack.c.0.s8 %v2033
          %v2035 = vperm.slane %v2029, %v2034
          %v2037 = vunpack.c.l.s4 1934713408
          %v2038 = vunpack.c.0.s8 %v2037
          %v2039 = vperm.slane %v2031, %v2038
          %v2040 = vrot.slane %v2035, 4
          %v2041 = vsel %vm1744, 0, %v2040
          %v2042 = vrot.slane %v2039, 4
          %v2043 = vsel %vm1744, 0, %v2042
          %v2046 = vpack.i.b16 %v2035, %v2007
          %v2048 = vshrl.u32 %v2007, 16
          %v2049 = vshrl.u32 %v2035, 16
          %v2050 = vpack.i.b16 %v2049, %v2048
          %v2054 = vpack.i.b16 %v2041, %v2013
          %v2056 = vshrl.u32 %v2013, 16
          %v2057 = vshrl.u32 %v2041, 16
          %v2058 = vpack.i.b16 %v2057, %v2056
          %v2062 = vpack.i.b16 %v2039, %v2011
          %v2064 = vshrl.u32 %v2011, 16
          %v2065 = vshrl.u32 %v2039, 16
          %v2066 = vpack.i.b16 %v2065, %v2064
          %v2070 = vpack.i.b16 %v2043, %v2015
          %v2072 = vshrl.u32 %v2015, 16
          %v2073 = vshrl.u32 %v2043, 16
          %v2074 = vpack.i.b16 %v2073, %v2072
          %2076 = vxpose.xlu0.c.b16.start [1/8] %v2046, 128
          %2077 = vxpose.xlu0.c.b16.cont [2/8] 0, 128
          %2078 = vxpose.xlu0.c.b16.cont [3/8] 0, 128
          %2079 = vxpose.xlu0.c.b16.cont [4/8] 0, 128
          %2080 = vxpose.xlu0.c.b16.cont [5/8] 0, 128
          %2081 = vxpose.xlu0.c.b16.cont [6/8] 0, 128
          %2082 = vxpose.xlu0.c.b16.cont [7/8] 0, 128
          %2083 = vxpose.xlu0.c.b16.end [8/8] 0, 128
          %v2084 = vpop.trf.xlu0
          %v2085 = vpop.trf.xlu0
          %v2086 = vpop.trf.xlu0
          %v2087 = vpop.trf.xlu0
          %v2088 = vpop.trf.xlu0
          %v2089 = vpop.trf.xlu0
          %v2090 = vpop.trf.xlu0
          %v2091 = vpop.trf.xlu0
          %2092 = vxpose.xlu0.c.b16.start [1/8] %v2050, 128
          %2093 = vxpose.xlu0.c.b16.cont [2/8] 0, 128
          %2094 = vxpose.xlu0.c.b16.cont [3/8] 0, 128
          %2095 = vxpose.xlu0.c.b16.cont [4/8] 0, 128
          %2096 = vxpose.xlu0.c.b16.cont [5/8] 0, 128
          %2097 = vxpose.xlu0.c.b16.cont [6/8] 0, 128
          %2098 = vxpose.xlu0.c.b16.cont [7/8] 0, 128
          %2099 = vxpose.xlu0.c.b16.end [8/8] 0, 128
          %v2100 = vpop.trf.xlu0
          %v2101 = vpop.trf.xlu0
          %v2102 = vpop.trf.xlu0
          %v2103 = vpop.trf.xlu0
          %v2104 = vpop.trf.xlu0
          %v2105 = vpop.trf.xlu0
          %v2106 = vpop.trf.xlu0
          %v2107 = vpop.trf.xlu0
          %2108 = vxpose.xlu0.c.b16.start [1/8] %v2054, 128
          %2109 = vxpose.xlu0.c.b16.cont [2/8] 0, 128
          %2110 = vxpose.xlu0.c.b16.cont [3/8] 0, 128
          %2111 = vxpose.xlu0.c.b16.cont [4/8] 0, 128
          %2112 = vxpose.xlu0.c.b16.cont [5/8] 0, 128
          %2113 = vxpose.xlu0.c.b16.cont [6/8] 0, 128
          %2114 = vxpose.xlu0.c.b16.cont [7/8] 0, 128
          %2115 = vxpose.xlu0.c.b16.end [8/8] 0, 128
          %v2116 = vpop.trf.xlu0
          %v2117 = vpop.trf.xlu0
          %v2118 = vpop.trf.xlu0
          %v2119 = vpop.trf.xlu0
          %v2120 = vpop.trf.xlu0
          %v2121 = vpop.trf.xlu0
          %v2122 = vpop.trf.xlu0
          %v2123 = vpop.trf.xlu0
          %2124 = vxpose.xlu0.c.b16.start [1/8] %v2058, 128
          %2125 = vxpose.xlu0.c.b16.cont [2/8] 0, 128
          %2126 = vxpose.xlu0.c.b16.cont [3/8] 0, 128
          %2127 = vxpose.xlu0.c.b16.cont [4/8] 0, 128
          %2128 = vxpose.xlu0.c.b16.cont [5/8] 0, 128
          %2129 = vxpose.xlu0.c.b16.cont [6/8] 0, 128
          %2130 = vxpose.xlu0.c.b16.cont [7/8] 0, 128
          %2131 = vxpose.xlu0.c.b16.end [8/8] 0, 128
          %v2132 = vpop.trf.xlu0
          %v2133 = vpop.trf.xlu0
          %v2134 = vpop.trf.xlu0
          %v2135 = vpop.trf.xlu0
          %v2136 = vpop.trf.xlu0
          %v2137 = vpop.trf.xlu0
          %v2138 = vpop.trf.xlu0
          %v2139 = vpop.trf.xlu0
          %2140 = vxpose.xlu0.c.b16.start [1/8] %v2062, 128
          %2141 = vxpose.xlu0.c.b16.cont [2/8] 0, 128
          %2142 = vxpose.xlu0.c.b16.cont [3/8] 0, 128
          %2143 = vxpose.xlu0.c.b16.cont [4/8] 0, 128
          %2144 = vxpose.xlu0.c.b16.cont [5/8] 0, 128
          %2145 = vxpose.xlu0.c.b16.cont [6/8] 0, 128
          %2146 = vxpose.xlu0.c.b16.cont [7/8] 0, 128
          %2147 = vxpose.xlu0.c.b16.end [8/8] 0, 128
          %v2148 = vpop.trf.xlu0
          %v2149 = vpop.trf.xlu0
          %v2150 = vpop.trf.xlu0
          %v2151 = vpop.trf.xlu0
          %v2152 = vpop.trf.xlu0
          %v2153 = vpop.trf.xlu0
          %v2154 = vpop.trf.xlu0
          %v2155 = vpop.trf.xlu0
          %2156 = vxpose.xlu0.c.b16.start [1/8] %v2066, 128
          %2157 = vxpose.xlu0.c.b16.cont [2/8] 0, 128
          %2158 = vxpose.xlu0.c.b16.cont [3/8] 0, 128
          %2159 = vxpose.xlu0.c.b16.cont [4/8] 0, 128
          %2160 = vxpose.xlu0.c.b16.cont [5/8] 0, 128
          %2161 = vxpose.xlu0.c.b16.cont [6/8] 0, 128
          %2162 = vxpose.xlu0.c.b16.cont [7/8] 0, 128
          %2163 = vxpose.xlu0.c.b16.end [8/8] 0, 128
          %v2164 = vpop.trf.xlu0
          %v2165 = vpop.trf.xlu0
          %v2166 = vpop.trf.xlu0
          %v2167 = vpop.trf.xlu0
          %v2168 = vpop.trf.xlu0
          %v2169 = vpop.trf.xlu0
          %v2170 = vpop.trf.xlu0
          %v2171 = vpop.trf.xlu0
          %2172 = vxpose.xlu0.c.b16.start [1/8] %v2070, 128
          %2173 = vxpose.xlu0.c.b16.cont [2/8] 0, 128
          %2174 = vxpose.xlu0.c.b16.cont [3/8] 0, 128
          %2175 = vxpose.xlu0.c.b16.cont [4/8] 0, 128
          %2176 = vxpose.xlu0.c.b16.cont [5/8] 0, 128
          %2177 = vxpose.xlu0.c.b16.cont [6/8] 0, 128
          %2178 = vxpose.xlu0.c.b16.cont [7/8] 0, 128
          %2179 = vxpose.xlu0.c.b16.end [8/8] 0, 128
          %v2180 = vpop.trf.xlu0
          %v2181 = vpop.trf.xlu0
          %v2182 = vpop.trf.xlu0
          %v2183 = vpop.trf.xlu0
          %v2184 = vpop.trf.xlu0
          %v2185 = vpop.trf.xlu0
          %v2186 = vpop.trf.xlu0
          %v2187 = vpop.trf.xlu0
          %2188 = vxpose.xlu0.c.b16.start [1/8] %v2074, 128
          %2189 = vxpose.xlu0.c.b16.cont [2/8] 0, 128
          %2190 = vxpose.xlu0.c.b16.cont [3/8] 0, 128
          %2191 = vxpose.xlu0.c.b16.cont [4/8] 0, 128
          %2192 = vxpose.xlu0.c.b16.cont [5/8] 0, 128
          %2193 = vxpose.xlu0.c.b16.cont [6/8] 0, 128
          %2194 = vxpose.xlu0.c.b16.cont [7/8] 0, 128
          %2195 = vxpose.xlu0.c.b16.end [8/8] 0, 128
          %v2196 = vpop.trf.xlu0
          %v2197 = vpop.trf.xlu0
          %v2198 = vpop.trf.xlu0
          %v2199 = vpop.trf.xlu0
          %v2200 = vpop.trf.xlu0
          %v2201 = vpop.trf.xlu0
          %v2202 = vpop.trf.xlu0
          %v2203 = vpop.trf.xlu0
          %v2204 = vrot.slane %v2148, 4
          %v2205 = vsel %vm1744, %v2204, %v2084
          %v2207 = vunpack.c.l.s4 1983009808
          %v2208 = vunpack.c.0.s8 %v2207
          %v2209 = vperm.slane %v2205, %v2208
          %v2210 = vrot.slane %v2180, 4
          %v2211 = vsel %vm1744, %v2210, %v2116
          %v2213 = vunpack.c.l.s4 1983009808
          %v2214 = vunpack.c.0.s8 %v2213
          %v2215 = vperm.slane %v2211, %v2214
          %v2216 = vrot.slane %v2215, 4
          %v2217 = vsel %vm1744, %v2216, %v2209
          %v2219 = vunpack.c.l.s4 1934713408
          %v2220 = vunpack.c.0.s8 %v2219
          %v2221 = vperm.slane %v2217, %v2220
          %v2222 = vrot.slane %v2221, 4
          %v2223 = vsel %vm1744, 0, %v2222
          %v2224 = vrot.slane %v2164, 4
          %v2225 = vsel %vm1744, %v2224, %v2100
          %v2227 = vunpack.c.l.s4 1983009808
          %v2228 = vunpack.c.0.s8 %v2227
          %v2229 = vperm.slane %v2225, %v2228
          %v2230 = vrot.slane %v2196, 4
          %v2231 = vsel %vm1744, %v2230, %v2132
          %v2233 = vunpack.c.l.s4 1983009808
          %v2234 = vunpack.c.0.s8 %v2233
          %v2235 = vperm.slane %v2231, %v2234
          %v2236 = vrot.slane %v2235, 4
          %v2237 = vsel %vm1744, %v2236, %v2229
          %v2239 = vunpack.c.l.s4 1934713408
          %v2240 = vunpack.c.0.s8 %v2239
          %v2241 = vperm.slane %v2237, %v2240
          %v2242 = vrot.slane %v2241, 4
          %v2243 = vsel %vm1744, 0, %v2242
          %v2246 = vpack.i.b16 %v2241, %v2221
          %v2247 = vshrl.u32 %v2221, 16
          %v2248 = vshrl.u32 %v2241, 16
          %v2249 = vpack.i.b16 %v2248, %v2247
          %v2252 = vpack.i.b16 %v2243, %v2223
          %v2253 = vshrl.u32 %v2223, 16
          %v2254 = vshrl.u32 %v2243, 16
          %v2255 = vpack.i.b16 %v2254, %v2253
          %vm2256 = vcmask 64512
          %v2258 = vsel %vm2256, %v1703, 0
          %vm2260 = vcmask 1043456
          %v2262 = vsel %vm2260, %v2246, 0
          %2264 = vmatpush.bf16.msra.mxu0 0
          %2265 = vmatpush.bf16.msra.mxu0 0
          %2266 = vmatpush.bf16.msra.mxu0 0
          %2267 = vmatpush.bf16.msra.mxu0 0
          %2268 = vmatpush.bf16.msra.mxu0 0
          %2269 = vmatpush.bf16.msra.mxu0 0
          %2270 = vmatpush.bf16.msra.mxu0 0
          %2271 = vmatpush.bf16.msra.mxu0 %v2262
          %2272 = vmatmul.bf16.gmra.mxu0 %v2258
          %v2273 = vpop.f32.mrf.mxu0
          %v2274 = vadd.f32 0.0, %v2273
          %v2275 = vpop.f32.mrf.mxu0
          %2276 = vdwg.mxu0
          %v2278 = vsel %vm2256, %v1706, 0
          %v2281 = vsel %vm2260, %v2249, 0
          %2283 = vmatpush.bf16.msra.mxu0 0
          %2284 = vmatpush.bf16.msra.mxu0 0
          %2285 = vmatpush.bf16.msra.mxu0 0
          %2286 = vmatpush.bf16.msra.mxu0 0
          %2287 = vmatpush.bf16.msra.mxu0 0
          %2288 = vmatpush.bf16.msra.mxu0 0
          %2289 = vmatpush.bf16.msra.mxu0 0
          %2290 = vmatpush.bf16.msra.mxu0 %v2281
          %2291 = vmatmul.bf16.gmra.mxu0 %v2278
          %v2292 = vpop.f32.mrf.mxu0
          %v2293 = vadd.f32 0.0, %v2292
          %v2294 = vpop.f32.mrf.mxu0
          %2295 = vdwg.mxu0
          %v2297 = vsel %vm2256, %v1708, 0
          %v2300 = vsel %vm2260, %v2252, 0
          %2302 = vmatpush.bf16.msra.mxu0 0
          %2303 = vmatpush.bf16.msra.mxu0 0
          %2304 = vmatpush.bf16.msra.mxu0 0
          %2305 = vmatpush.bf16.msra.mxu0 0
          %2306 = vmatpush.bf16.msra.mxu0 0
          %2307 = vmatpush.bf16.msra.mxu0 0
          %2308 = vmatpush.bf16.msra.mxu0 0
          %2309 = vmatpush.bf16.msra.mxu0 %v2300
          %2310 = vmatmul.bf16.gmra.mxu0 %v2297
          %v2311 = vpop.f32.mrf.mxu0
          %v2312 = vadd.f32 0.0, %v2311
          %v2313 = vpop.f32.mrf.mxu0
          %2314 = vdwg.mxu0
          %v2316 = vsel %vm2256, %v1710, 0
          %v2319 = vsel %vm2260, %v2255, 0
          %2321 = vmatpush.bf16.msra.mxu0 0
          %2322 = vmatpush.bf16.msra.mxu0 0
          %2323 = vmatpush.bf16.msra.mxu0 0
          %2324 = vmatpush.bf16.msra.mxu0 0
          %2325 = vmatpush.bf16.msra.mxu0 0
          %2326 = vmatpush.bf16.msra.mxu0 0
          %2327 = vmatpush.bf16.msra.mxu0 0
          %2328 = vmatpush.bf16.msra.mxu0 %v2319
          %2329 = vmatmul.bf16.gmra.mxu0 %v2316
          %v2330 = vpop.f32.mrf.mxu0
          %v2331 = vadd.f32 0.0, %v2330
          %v2332 = vpop.f32.mrf.mxu0
          %2333 = vdwg.mxu0
          %v2334 = vlaneseq
          %v2335 = vshrl.u32 %v2334, 7
          %v2336 = vlaneseq
          %v2337 = vand.u32 %v2336, 127
          %vm2338 = vcmp.gt.s32.totalorder %v2337, %v2335
          %v2339 = vsel %vm2338, 1, 0
          %vm2340 = vcmp.eq.s32.totalorder %v2339, 1
          %v2341 = vsel %vm2340, -1e+30, %v2274
          %v2342 = vsel %vm2340, -1e+30, %v2293
          %v2343 = vsel %vm2340, -1e+30, %v2312
          %v2344 = vsel %vm2340, -1e+30, %v2331
          %v2345 = vld [vmem:[#allocation5] sm:$0xff]
          %v2346 = vld [vmem:[#allocation5 + $0x8] sm:$0xff]
          %v2347 = vld [vmem:[#allocation5 + $0x10] sm:$0xff]
          %v2348 = vld [vmem:[#allocation5 + $0x18] sm:$0xff]
          %v2349 = vsel %vm2256, %v2341, -inf
          %2350 = vmax.xlane.f32.xlu0 %v2349
          %v2351 = vpop.xlane.xlu0 %2350
          %v2352 = vsel %vm2256, %v2342, -inf
          %2353 = vmax.xlane.f32.xlu0 %v2352
          %v2354 = vpop.xlane.xlu0 %2353
          %v2355 = vsel %vm2256, %v2343, -inf
          %2356 = vmax.xlane.f32.xlu0 %v2355
          %v2357 = vpop.xlane.xlu0 %2356
          %v2358 = vsel %vm2256, %v2344, -inf
          %2359 = vmax.xlane.f32.xlu0 %v2358
          %v2360 = vpop.xlane.xlu0 %2359
          %v2361 = vmax.f32 %v2345, %v2351
          %v2362 = vmax.f32 %v2346, %v2354
          %v2363 = vmax.f32 %v2347, %v2357
          %v2364 = vmax.f32 %v2348, %v2360
          %v2365 = vsub.f32 %v2345, %v2361
          %v2366 = vsub.f32 %v2346, %v2362
          %v2367 = vsub.f32 %v2347, %v2363
          %v2368 = vsub.f32 %v2348, %v2364
          %v2369 = vmul.f32 %v2365, 1.442695
          %v2370 = vpow.pop %v2369
          %v2371 = vmul.f32 %v2366, 1.442695
          %v2372 = vpow.pop %v2371
          %v2373 = vmul.f32 %v2367, 1.442695
          %v2374 = vpow.pop %v2373
          %v2375 = vmul.f32 %v2368, 1.442695
          %v2376 = vpow.pop %v2375
          %2378 = vset.pattern.permute.xlu0 0
          %2379 = vperm.xlu0 %2378, %v2361
          %v2380 = vpop.permute.xlu0 %2379
          %2383 = vset.pattern.permute.xlu0 0
          %2384 = vperm.xlu0 %2383, %v2362
          %v2385 = vpop.permute.xlu0 %2384
          %2388 = vset.pattern.permute.xlu0 0
          %2389 = vperm.xlu0 %2388, %v2363
          %v2390 = vpop.permute.xlu0 %2389
          %2393 = vset.pattern.permute.xlu0 0
          %2394 = vperm.xlu0 %2393, %v2364
          %v2395 = vpop.permute.xlu0 %2394
          %v2397 = vsub.f32 %v2341, %v2380
          %v2398 = vsub.f32 %v2342, %v2385
          %v2399 = vsub.f32 %v2343, %v2390
          %v2400 = vsub.f32 %v2344, %v2395
          %v2401 = vmul.f32 %v2397, 1.442695
          %v2402 = vpow.pop %v2401
          %v2403 = vmul.f32 %v2398, 1.442695
          %v2404 = vpow.pop %v2403
          %v2405 = vmul.f32 %v2399, 1.442695
          %v2406 = vpow.pop %v2405
          %v2407 = vmul.f32 %v2400, 1.442695
          %v2408 = vpow.pop %v2407
          %v2409 = vld [vmem:[#allocation6] sm:$0xff]
          %v2410 = vld [vmem:[#allocation6 + $0x8] sm:$0xff]
          %v2411 = vld [vmem:[#allocation6 + $0x10] sm:$0xff]
          %v2412 = vld [vmem:[#allocation6 + $0x18] sm:$0xff]
          %v2413 = vmul.f32 %v2370, %v2409
          %v2414 = vmul.f32 %v2372, %v2410
          %v2415 = vmul.f32 %v2374, %v2411
          %v2416 = vmul.f32 %v2376, %v2412
          %v2417 = vsel %vm2256, %v2402, 0.0
          %2418 = vadd.xlane.f32.xlu0 %v2417
          %v2419 = vpop.xlane.xlu0 %2418
          %v2420 = vsel %vm2256, %v2404, 0.0
          %2421 = vadd.xlane.f32.xlu0 %v2420
          %v2422 = vpop.xlane.xlu0 %2421
          %v2423 = vsel %vm2256, %v2406, 0.0
          %2424 = vadd.xlane.f32.xlu0 %v2423
          %v2425 = vpop.xlane.xlu0 %2424
          %v2426 = vsel %vm2256, %v2408, 0.0
          %2427 = vadd.xlane.f32.xlu0 %v2426
          %v2428 = vpop.xlane.xlu0 %2427
          %v2429 = vadd.f32 %v2413, %v2419
          %v2430 = vadd.f32 %v2414, %v2422
          %v2431 = vadd.f32 %v2415, %v2425
          %v2432 = vadd.f32 %v2416, %v2428
          %vm2433 = vcmask 7168
          %2434 = vst.msk [vmem:[#allocation6] sm:$0xff] %vm2433, %v2429
          %2435 = vst.msk [vmem:[#allocation6 + $0x8] sm:$0xff] %vm2433, %v2430
          %2436 = vst.msk [vmem:[#allocation6 + $0x10] sm:$0xff] %vm2433, %v2431
          %2437 = vst.msk [vmem:[#allocation6 + $0x18] sm:$0xff] %vm2433, %v2432
          %v2438 = vld [vmem:[#allocation7] sm:$0xff]
          %v2439 = vld [vmem:[#allocation7 + $0x8] sm:$0xff]
          %v2440 = vld [vmem:[#allocation7 + $0x10] sm:$0xff]
          %v2441 = vld [vmem:[#allocation7 + $0x18] sm:$0xff]
          %2443 = vset.pattern.permute.xlu0 0
          %2444 = vperm.xlu0 %2443, %v2370
          %v2445 = vpop.permute.xlu0 %2444
          %2448 = vset.pattern.permute.xlu0 0
          %2449 = vperm.xlu0 %2448, %v2372
          %v2450 = vpop.permute.xlu0 %2449
          %2453 = vset.pattern.permute.xlu0 0
          %2454 = vperm.xlu0 %2453, %v2374
          %v2455 = vpop.permute.xlu0 %2454
          %2458 = vset.pattern.permute.xlu0 0
          %2459 = vperm.xlu0 %2458, %v2376
          %v2460 = vpop.permute.xlu0 %2459
          %v2462 = vmul.f32 %v2445, %v2438
          %v2463 = vmul.f32 %v2450, %v2439
          %v2464 = vmul.f32 %v2455, %v2440
          %v2465 = vmul.f32 %v2460, %v2441
          %v2466 = vpack.c.bf16 %v2402, %v2402
          %v2467 = vpack.c.bf16 %v2404, %v2404
          %v2468 = vpack.c.bf16 %v2406, %v2406
          %v2469 = vpack.c.bf16 %v2408, %v2408
          %v2470 = vsel %vm1744, %v1832, %v1825
          %v2472 = vunpack.c.l.s4 1983009808
          %v2473 = vunpack.c.0.s8 %v2472
          %v2474 = vperm.slane %v2470, %v2473
          %v2475 = vrot.slane %v1833, 4
          %v2476 = vsel %vm1744, %v2475, %v1831
          %v2478 = vunpack.c.l.s4 1983009808
          %v2479 = vunpack.c.0.s8 %v2478
          %v2480 = vperm.slane %v2476, %v2479
          %v2481 = vrot.slane %v2480, 4
          %v2482 = vsel %vm1744, %v2481, %v2474
          %v2484 = vunpack.c.l.s4 1934713408
          %v2485 = vunpack.c.0.s8 %v2484
          %v2486 = vperm.slane %v2482, %v2485
          %v2487 = vrot.slane %v2486, 4
          %v2488 = vsel %vm1744, 0, %v2487
          %v2489 = vsel %vm1744, %v1858, %v1851
          %v2491 = vunpack.c.l.s4 1983009808
          %v2492 = vunpack.c.0.s8 %v2491
          %v2493 = vperm.slane %v2489, %v2492
          %v2494 = vrot.slane %v1859, 4
          %v2495 = vsel %vm1744, %v2494, %v1857
          %v2497 = vunpack.c.l.s4 1983009808
          %v2498 = vunpack.c.0.s8 %v2497
          %v2499 = vperm.slane %v2495, %v2498
          %v2500 = vrot.slane %v2499, 4
          %v2501 = vsel %vm1744, %v2500, %v2493
          %v2503 = vunpack.c.l.s4 1934713408
          %v2504 = vunpack.c.0.s8 %v2503
          %v2505 = vperm.slane %v2501, %v2504
          %v2506 = vrot.slane %v2505, 4
          %v2507 = vsel %vm1744, 0, %v2506
          %v2510 = vpack.i.b16 %v2505, %v2486
          %v2511 = vshrl.u32 %v2486, 16
          %v2512 = vshrl.u32 %v2505, 16
          %v2513 = vpack.i.b16 %v2512, %v2511
          %v2516 = vpack.i.b16 %v2507, %v2488
          %v2517 = vshrl.u32 %v2488, 16
          %v2518 = vshrl.u32 %v2507, 16
          %v2519 = vpack.i.b16 %v2518, %v2517
          %v2521 = vsel %vm2256, %v2466, 0
          %v2524 = vsel %vm2260, %v2510, 0
          %2526 = vmatpush.bf16.msra.mxu0 0
          %2527 = vmatpush.bf16.msra.mxu0 0
          %2528 = vmatpush.bf16.msra.mxu0 0
          %2529 = vmatpush.bf16.msra.mxu0 0
          %2530 = vmatpush.bf16.msra.mxu0 0
          %2531 = vmatpush.bf16.msra.mxu0 0
          %2532 = vmatpush.bf16.msra.mxu0 0
          %2533 = vmatpush.bf16.msra.mxu0 %v2524
          %2534 = vmatmul.bf16.gmra.mxu0 %v2521
          %v2535 = vpop.f32.mrf.mxu0
          %v2536 = vadd.f32 0.0, %v2535
          %v2537 = vpop.f32.mrf.mxu0
          %2538 = vdwg.mxu0
          %v2540 = vsel %vm2256, %v2467, 0
          %v2543 = vsel %vm2260, %v2513, 0
          %2545 = vmatpush.bf16.msra.mxu0 0
          %2546 = vmatpush.bf16.msra.mxu0 0
          %2547 = vmatpush.bf16.msra.mxu0 0
          %2548 = vmatpush.bf16.msra.mxu0 0
          %2549 = vmatpush.bf16.msra.mxu0 0
          %2550 = vmatpush.bf16.msra.mxu0 0
          %2551 = vmatpush.bf16.msra.mxu0 0
          %2552 = vmatpush.bf16.msra.mxu0 %v2543
          %2553 = vmatmul.bf16.gmra.mxu0 %v2540
          %v2554 = vpop.f32.mrf.mxu0
          %v2555 = vadd.f32 0.0, %v2554
          %v2556 = vpop.f32.mrf.mxu0
          %2557 = vdwg.mxu0
          %v2559 = vsel %vm2256, %v2468, 0
          %v2562 = vsel %vm2260, %v2516, 0
          %2564 = vmatpush.bf16.msra.mxu0 0
          %2565 = vmatpush.bf16.msra.mxu0 0
          %2566 = vmatpush.bf16.msra.mxu0 0
          %2567 = vmatpush.bf16.msra.mxu0 0
          %2568 = vmatpush.bf16.msra.mxu0 0
          %2569 = vmatpush.bf16.msra.mxu0 0
          %2570 = vmatpush.bf16.msra.mxu0 0
          %2571 = vmatpush.bf16.msra.mxu0 %v2562
          %2572 = vmatmul.bf16.gmra.mxu0 %v2559
          %v2573 = vpop.f32.mrf.mxu0
          %v2574 = vadd.f32 0.0, %v2573
          %v2575 = vpop.f32.mrf.mxu0
          %2576 = vdwg.mxu0
          %v2578 = vsel %vm2256, %v2469, 0
          %v2581 = vsel %vm2260, %v2519, 0
          %2583 = vmatpush.bf16.msra.mxu0 0
          %2584 = vmatpush.bf16.msra.mxu0 0
          %2585 = vmatpush.bf16.msra.mxu0 0
          %2586 = vmatpush.bf16.msra.mxu0 0
          %2587 = vmatpush.bf16.msra.mxu0 0
          %2588 = vmatpush.bf16.msra.mxu0 0
          %2589 = vmatpush.bf16.msra.mxu0 0
          %2590 = vmatpush.bf16.msra.mxu0 %v2581
          %2591 = vmatmul.bf16.gmra.mxu0 %v2578
          %v2592 = vpop.f32.mrf.mxu0
          %v2593 = vadd.f32 0.0, %v2592
          %v2594 = vpop.f32.mrf.mxu0
          %2595 = vdwg.mxu0
          %v2596 = vadd.f32 %v2462, %v2536
          %v2597 = vadd.f32 %v2463, %v2555
          %v2598 = vadd.f32 %v2464, %v2574
          %v2599 = vadd.f32 %v2465, %v2593
          %2600 = vst.msk [vmem:[#allocation7] sm:$0xff] %vm2256, %v2596
          %2601 = vst.msk [vmem:[#allocation7 + $0x8] sm:$0xff] %vm2256, %v2597
          %2602 = vst.msk [vmem:[#allocation7 + $0x10] sm:$0xff] %vm2256, %v2598
          %2603 = vst.msk [vmem:[#allocation7 + $0x18] sm:$0xff] %vm2256, %v2599
          %2604 = vst.msk [vmem:[#allocation5] sm:$0xff] %vm2433, %v2361
          %2605 = vst.msk [vmem:[#allocation5 + $0x8] sm:$0xff] %vm2433, %v2362
          %2606 = vst.msk [vmem:[#allocation5 + $0x10] sm:$0xff] %vm2433, %v2363
          %2607 = vst.msk [vmem:[#allocation5 + $0x18] sm:$0xff] %vm2433, %v2364
        $region112: #{tpu_custom_call.1} parent=87 // pred_fallthru
          _
        %p2608 = scmp.eq.s32.totalorder %s40, 1
        // Predicated region
        $region113: #{tpu_custom_call.1} parent=87 // pred_check
          %p2609 = pneg %p2608
        $region114: #{tpu_custom_call.1} parent=87 // pred_check_branch
          %2611 = sbr.rel (%p2609) target = $region116
        $region115: #{tpu_custom_call.1} parent=87 // pred_region
          %v2612 = vld [vmem:[#allocation6] sm:$0xff]
          %v2613 = vld [vmem:[#allocation6 + $0x8] sm:$0xff]
          %v2614 = vld [vmem:[#allocation6 + $0x10] sm:$0xff]
          %v2615 = vld [vmem:[#allocation6 + $0x18] sm:$0xff]
          %v2616 = vrcp.pop %v2612
          %v2617 = vrcp.pop %v2613
          %v2618 = vrcp.pop %v2614
          %v2619 = vrcp.pop %v2615
          %v2620 = vld [vmem:[#allocation7] sm:$0xff]
          %v2621 = vld [vmem:[#allocation7 + $0x8] sm:$0xff]
          %v2622 = vld [vmem:[#allocation7 + $0x10] sm:$0xff]
          %v2623 = vld [vmem:[#allocation7 + $0x18] sm:$0xff]
          %2625 = vset.pattern.permute.xlu0 0
          %2626 = vperm.xlu0 %2625, %v2616
          %v2627 = vpop.permute.xlu0 %2626
          %2630 = vset.pattern.permute.xlu0 0
          %2631 = vperm.xlu0 %2630, %v2617
          %v2632 = vpop.permute.xlu0 %2631
          %2635 = vset.pattern.permute.xlu0 0
          %2636 = vperm.xlu0 %2635, %v2618
          %v2637 = vpop.permute.xlu0 %2636
          %2640 = vset.pattern.permute.xlu0 0
          %2641 = vperm.xlu0 %2640, %v2619
          %v2642 = vpop.permute.xlu0 %2641
          %v2644 = vmul.f32 %v2620, %v2627
          %v2645 = vmul.f32 %v2621, %v2632
          %v2646 = vmul.f32 %v2622, %v2637
          %v2647 = vmul.f32 %v2623, %v2642
          %v2648 = vpack.c.bf16 %v2644, %v2644
          %v2649 = vpack.c.bf16 %v2645, %v2645
          %v2650 = vpack.c.bf16 %v2646, %v2646
          %v2651 = vpack.c.bf16 %v2647, %v2647
          %v2654 = vpack.i.b16 %v2649, %v2648
          %v2655 = vshrl.u32 %v2648, 16
          %v2656 = vshrl.u32 %v2649, 16
          %v2657 = vpack.i.b16 %v2656, %v2655
          %v2660 = vpack.i.b16 %v2651, %v2650
          %v2661 = vshrl.u32 %v2650, 16
          %v2662 = vshrl.u32 %v2651, 16
          %v2663 = vpack.i.b16 %v2662, %v2661
          %v2666 = vunpack.c.l.s4 1983009808
          %v2667 = vunpack.c.0.s8 %v2666
          %v2668 = vperm.slane %v2654, %v2667
          %v2671 = vunpack.c.l.s4 1983009808
          %v2672 = vunpack.c.0.s8 %v2671
          %v2673 = vperm.slane %v2660, %v2672
          %v2674 = vrot.slane %v2673, 4
          %vm2675 = vcmask 1047556
          %v2676 = vsel %vm2675, %v2674, %v2668
          %v2677 = vrot.slane %v2668, 4
          %v2678 = vsel %vm2675, %v2673, %v2677
          %v2680 = vunpack.c.l.s4 1934713408
          %v2681 = vunpack.c.0.s8 %v2680
          %v2682 = vperm.slane %v2676, %v2681
          %v2684 = vunpack.c.l.s4 1934713408
          %v2685 = vunpack.c.0.s8 %v2684
          %v2686 = vperm.slane %v2678, %v2685
          %v2687 = vrot.slane %v2682, 4
          %v2688 = vsel %vm2675, 0, %v2687
          %v2689 = vrot.slane %v2686, 4
          %v2690 = vsel %vm2675, 0, %v2689
          %v2693 = vunpack.c.l.s4 1983009808
          %v2694 = vunpack.c.0.s8 %v2693
          %v2695 = vperm.slane %v2657, %v2694
          %v2698 = vunpack.c.l.s4 1983009808
          %v2699 = vunpack.c.0.s8 %v2698
          %v2700 = vperm.slane %v2663, %v2699
          %v2701 = vrot.slane %v2700, 4
          %v2702 = vsel %vm2675, %v2701, %v2695
          %v2703 = vrot.slane %v2695, 4
          %v2704 = vsel %vm2675, %v2700, %v2703
          %v2706 = vunpack.c.l.s4 1934713408
          %v2707 = vunpack.c.0.s8 %v2706
          %v2708 = vperm.slane %v2702, %v2707
          %v2710 = vunpack.c.l.s4 1934713408
          %v2711 = vunpack.c.0.s8 %v2710
          %v2712 = vperm.slane %v2704, %v2711
          %v2713 = vrot.slane %v2708, 4
          %v2714 = vsel %vm2675, 0, %v2713
          %v2715 = vrot.slane %v2712, 4
          %v2716 = vsel %vm2675, 0, %v2715
          %v2717 = vsel %vm2675, %v2689, %v2682
          %v2719 = vunpack.c.l.s4 1983009808
          %v2720 = vunpack.c.0.s8 %v2719
          %v2721 = vperm.slane %v2717, %v2720
          %v2722 = vrot.slane %v2690, 4
          %v2723 = vsel %vm2675, %v2722, %v2688
          %v2725 = vunpack.c.l.s4 1983009808
          %v2726 = vunpack.c.0.s8 %v2725
          %v2727 = vperm.slane %v2723, %v2726
          %v2728 = vrot.slane %v2727, 4
          %v2729 = vsel %vm2675, %v2728, %v2721
          %v2731 = vunpack.c.l.s4 1934713408
          %v2732 = vunpack.c.0.s8 %v2731
          %v2733 = vperm.slane %v2729, %v2732
          %v2734 = vrot.slane %v2733, 4
          %v2735 = vsel %vm2675, 0, %v2734
          %v2736 = vsel %vm2675, %v2715, %v2708
          %v2738 = vunpack.c.l.s4 1983009808
          %v2739 = vunpack.c.0.s8 %v2738
          %v2740 = vperm.slane %v2736, %v2739
          %v2741 = vrot.slane %v2716, 4
          %v2742 = vsel %vm2675, %v2741, %v2714
          %v2744 = vunpack.c.l.s4 1983009808
          %v2745 = vunpack.c.0.s8 %v2744
          %v2746 = vperm.slane %v2742, %v2745
          %v2747 = vrot.slane %v2746, 4
          %v2748 = vsel %vm2675, %v2747, %v2740
          %v2750 = vunpack.c.l.s4 1934713408
          %v2751 = vunpack.c.0.s8 %v2750
          %v2752 = vperm.slane %v2748, %v2751
          %v2753 = vrot.slane %v2752, 4
          %v2754 = vsel %vm2675, 0, %v2753
          %v2757 = vpack.i.b16 %v2752, %v2733
          %v2758 = vshrl.u32 %v2733, 16
          %v2759 = vshrl.u32 %v2752, 16
          %v2760 = vpack.i.b16 %v2759, %v2758
          %v2763 = vpack.i.b16 %v2754, %v2735
          %v2764 = vshrl.u32 %v2735, 16
          %v2765 = vshrl.u32 %v2754, 16
          %v2766 = vpack.i.b16 %v2765, %v2764
          %v2767 = vunpack.c.l.b16 %v2760
          %v2768 = vpack.c.b16 %v2767, %v2767
          %2769 = vrot.lane.b32.xlu0 %v2768, 8
          %v2770 = vpop.permute.xlu0 %2769
          %v2771 = vunpack.c.l.b16 %v2763
          %v2772 = vpack.c.b16 %v2771, %v2771
          %2773 = vrot.lane.b32.xlu0 %v2772, 16
          %v2774 = vpop.permute.xlu0 %2773
          %v2775 = vunpack.c.l.b16 %v2766
          %v2776 = vpack.c.b16 %v2775, %v2775
          %2777 = vrot.lane.b32.xlu0 %v2776, 24
          %v2778 = vpop.permute.xlu0 %2777
          %vm2779 = vcmask 64512
          %v2782 = vsel %vm2779, %v2757, %v2770
          %vm2783 = vcmask 130048
          %v2785 = vsel %vm2783, %v2782, %v2774
          %vm2786 = vcmask 195584
          %v2788 = vsel %vm2786, %v2785, %v2778
          %v2789 = vld [vmem:[#allocation11] sm:$0xf]
          %v2790 = vld [vmem:[#allocation11 + $0x4] sm:$0xf]
          %v2791 = vld [vmem:[#allocation11 + $0x8] sm:$0xf]
          %v2792 = vld [vmem:[#allocation11 + $0xc] sm:$0xf]
          %v2793 = vld [vmem:[%s10] sm:$0x1]
          %v2795 = vperm.slane %v2793, 0
          %v2801 = vunpack.c.l.b16 %v2789
          %v2802 = vunpack.c.l.b16 %v2790
          %v2803 = vunpack.c.l.b16 %v2791
          %v2804 = vunpack.c.l.b16 %v2792
          %v2805 = vpack.c.b16 %v2802, %v2801
          %v2806 = vpack.c.b16 %v2804, %v2803
          %vm2809 = vcmask 261120
          %v2810 = vsel %vm2809, %v2788, 0
          %2812 = vmatpush.bf16.msra.mxu0 0
          %2813 = vmatpush.bf16.msra.mxu0 0
          %2814 = vmatpush.bf16.msra.mxu0 0
          %2815 = vmatpush.bf16.msra.mxu0 0
          %2816 = vmatpush.bf16.msra.mxu0 0
          %2817 = vmatpush.bf16.msra.mxu0 0
          %2818 = vmatpush.bf16.msra.mxu0 %v2806
          %2819 = vmatpush.bf16.msra.mxu0 %v2805
          %2820 = vmatmul.bf16.gmra.mxu0 %v2810
          %v2821 = vpop.f32.mrf.mxu0
          %v2822 = vadd.f32 %v2795, %v2821
          %v2823 = vpop.f32.mrf.mxu0
          %2824 = vdwg.mxu0
          %v2825 = vld [vmem:[%s626] sm:$0xff]
          %v2826 = vadd.f32 %v2825, %v2822
          %v2827 = vld [vmem:[%s11] sm:$0x1]
          %v2828 = vld [vmem:[%s12] sm:$0x1]
          %v2829 = vsel %vm2809, %v2826, 0.0
          %2830 = vadd.xlane.f32.xlu0 %v2829
          %v2831 = vpop.xlane.xlu0 %2830
          %v2832 = vrcp.pop 32.0
          %v2833 = vmul.f32 32.0, %v2832
          %v2834 = vsub.f32 1.0, %v2833
          %v2835 = vmul.f32 %v2832, %v2834
          %v2836 = vadd.f32 %v2832, %v2835
          %vm2837 = vweird.f32 %v2832
          %v2838 = vsel %vm2837, %v2832, %v2836
          %v2839 = vmul.f32 %v2831, %v2838
          %v2840 = vsub.f32 %v2826, %v2839
          %v2841 = vmul.f32 %v2840, %v2840
          %v2842 = vsel %vm2809, %v2841, 0.0
          %2843 = vadd.xlane.f32.xlu0 %v2842
          %v2844 = vpop.xlane.xlu0 %2843
          %v2845 = vmul.f32 %v2844, %v2838
          %v2846 = vadd.f32 %v2845, 1e-05
          %v2847 = vrsqrt.pop %v2846
          %v2848 = vmul.f32 %v2847, %v2846
          %v2849 = vmul.f32 %v2848, %v2847
          %v2850 = vmul.f32 0.5, %v2849
          %v2851 = vsub.f32 1.5, %v2850
          %v2852 = vmul.f32 %v2847, %v2851
          %vm2853 = vweird.f32 %v2846
          %vm2854 = vweird.f32 %v2847
          %vm2855 = vmor %vm2853, %vm2854
          %v2856 = vsel %vm2855, %v2847, %v2852
          %v2857 = vmul.f32 %v2840, %v2856
          %v2859 = vperm.slane %v2827, 0
          %v2861 = vmul.f32 %v2859, %v2857
          %v2863 = vperm.slane %v2828, 0
          %v2865 = vadd.f32 %v2861, %v2863
          %v2866 = vpack.c.bf16 %v2865, %v2865
          %v2867 = vld [vmem:[#allocation13] sm:$0xf]
          %v2868 = vld [vmem:[#allocation13 + $0x4] sm:$0xf]
          %v2869 = vld [vmem:[#allocation13 + $0x8] sm:$0xf]
          %v2870 = vld [vmem:[#allocation13 + $0xc] sm:$0xf]
          %v2871 = vld [vmem:[%s14] sm:$0x1]
          %v2873 = vperm.slane %v2871, 0
          %v2879 = vunpack.c.l.b16 %v2867
          %v2880 = vunpack.c.l.b16 %v2868
          %v2881 = vunpack.c.l.b16 %v2869
          %v2882 = vunpack.c.l.b16 %v2870
          %v2883 = vpack.c.b16 %v2880, %v2879
          %v2884 = vpack.c.b16 %v2882, %v2881
          %v2888 = vsel %vm2809, %v2866, 0
          %2890 = vmatpush.bf16.msra.mxu0 0
          %2891 = vmatpush.bf16.msra.mxu0 0
          %2892 = vmatpush.bf16.msra.mxu0 0
          %2893 = vmatpush.bf16.msra.mxu0 0
          %2894 = vmatpush.bf16.msra.mxu0 0
          %2895 = vmatpush.bf16.msra.mxu0 0
          %2896 = vmatpush.bf16.msra.mxu0 %v2884
          %2897 = vmatpush.bf16.msra.mxu0 %v2883
          %2898 = vmatmul.bf16.gmra.mxu0 %v2888
          %v2899 = vpop.f32.mrf.mxu0
          %v2900 = vadd.f32 %v2873, %v2899
          %v2901 = vpop.f32.mrf.mxu0
          %2902 = vdwg.mxu0
          %v2903 = vmul.f32 %v2900, 0.5
          %v2904 = vmul.f32 %v2900, %v2900
          %v2905 = vmul.f32 %v2900, %v2904
          %v2906 = vmul.f32 %v2905, 0.044715
          %v2907 = vadd.f32 %v2900, %v2906
          %v2908 = vmul.f32 %v2907, 0.7978846
          %v2909 = vtanh.pop %v2908
          %v2910 = vadd.f32 %v2909, 1.0
          %v2911 = vmul.f32 %v2903, %v2910
          %v2912 = vpack.c.bf16 %v2911, %v2911
          %v2913 = vld [vmem:[%s15] sm:$0xf]
          %v2914 = vld [vmem:[%s15 + $0x4] sm:$0xf]
          %v2915 = vld [vmem:[%s15 + $0x8] sm:$0xf]
          %v2916 = vld [vmem:[%s15 + $0xc] sm:$0xf]
          %v2917 = vld [vmem:[%s15 + $0x10] sm:$0xf]
          %v2918 = vld [vmem:[%s15 + $0x14] sm:$0xf]
          %v2919 = vld [vmem:[%s15 + $0x18] sm:$0xf]
          %v2920 = vld [vmem:[%s15 + $0x1c] sm:$0xf]
          %v2921 = vld [vmem:[%s15 + $0x20] sm:$0xf]
          %v2922 = vld [vmem:[%s15 + $0x24] sm:$0xf]
          %v2923 = vld [vmem:[%s15 + $0x28] sm:$0xf]
          %v2924 = vld [vmem:[%s15 + $0x2c] sm:$0xf]
          %v2925 = vld [vmem:[%s15 + $0x30] sm:$0xf]
          %v2926 = vld [vmem:[%s15 + $0x34] sm:$0xf]
          %v2927 = vld [vmem:[%s15 + $0x38] sm:$0xf]
          %v2928 = vld [vmem:[%s15 + $0x3c] sm:$0xf]
          %v2929 = vld [vmem:[%s16] sm:$0x1]
          %v2931 = vperm.slane %v2929, 0
          %v2949 = vunpack.c.l.b16 %v2913
          %v2950 = vunpack.c.l.b16 %v2914
          %v2951 = vunpack.c.l.b16 %v2915
          %v2952 = vunpack.c.l.b16 %v2916
          %v2953 = vunpack.c.l.b16 %v2917
          %v2954 = vunpack.c.l.b16 %v2918
          %v2955 = vunpack.c.l.b16 %v2919
          %v2956 = vunpack.c.l.b16 %v2920
          %v2957 = vunpack.c.l.b16 %v2921
          %v2958 = vunpack.c.l.b16 %v2922
          %v2959 = vunpack.c.l.b16 %v2923
          %v2960 = vunpack.c.l.b16 %v2924
          %v2961 = vunpack.c.l.b16 %v2925
          %v2962 = vunpack.c.l.b16 %v2926
          %v2963 = vunpack.c.l.b16 %v2927
          %v2964 = vunpack.c.l.b16 %v2928
          %v2965 = vpack.c.b16 %v2950, %v2949
          %v2966 = vpack.c.b16 %v2952, %v2951
          %v2967 = vpack.c.b16 %v2954, %v2953
          %v2968 = vpack.c.b16 %v2956, %v2955
          %v2969 = vpack.c.b16 %v2958, %v2957
          %v2970 = vpack.c.b16 %v2960, %v2959
          %v2971 = vpack.c.b16 %v2962, %v2961
          %v2972 = vpack.c.b16 %v2964, %v2963
          %2981 = vmatpush.bf16.msra.mxu0 %v2972
          %2982 = vmatpush.bf16.msra.mxu0 %v2971
          %2983 = vmatpush.bf16.msra.mxu0 %v2970
          %2984 = vmatpush.bf16.msra.mxu0 %v2969
          %2985 = vmatpush.bf16.msra.mxu0 %v2968
          %2986 = vmatpush.bf16.msra.mxu0 %v2967
          %2987 = vmatpush.bf16.msra.mxu0 %v2966
          %2988 = vmatpush.bf16.msra.mxu0 %v2965
          %2989 = vmatmul.bf16.gmra.mxu0 %v2912
          %v2990 = vpop.f32.mrf.mxu0
          %v2991 = vadd.f32 %v2931, %v2990
          %v2992 = vpop.f32.mrf.mxu0
          %2993 = vdwg.mxu0
          %v2994 = vadd.f32 %v2826, %v2991
          %2995 = vst.msk [vmem:[%s618] sm:$0xff] %vm2809, %v2994
        $region116: #{tpu_custom_call.1} parent=87 // pred_fallthru
          _
        %s2996 = sand.u32 %s426, 1
        %s2997 = scalar_lea.sflag [#allocation10], %s2996
        %s2998 = sand.u32 %s426, 1
        %s2999 = smul.addr %s2998, 8
        %s3000 = scalar_lea.vmem [#allocation14], %s2999
        // Predicated region
        $region117: #{tpu_custom_call.1} parent=87 // pred_check
          %p3001 = pneg %p436
        $region118: #{tpu_custom_call.1} parent=87 // pred_check_branch
          %3003 = sbr.rel (%p3001) target = $region120
        $region119: #{tpu_custom_call.1} parent=87 // pred_region
          %3005 = vsyncadd %s2997, 0
          %s3006 = smul.addr %s38, 2
          %s3007 = sadd.s32 %s39, %s3006
          %s3008 = smul.addr %s3007, 8
          %s3009 = scalar_lea.hbm %s17, %s3008
          %s3011 = sshll.u32 %s3000, 4
          %s3012 = int_to_ptr.vmem [resolvable:$true] %s3011
          %s3013 = sshll.u32 %s3009, 4
          %s3014 = int_to_ptr.hbm [resolvable:$true] %s3013
          %3016 = dma.vmem_to_hbm [thread:$0]  %s3012, 128, %s3014, %s2997
        $region120: #{tpu_custom_call.1} parent=87 // pred_fallthru
          _
      $region88: #{tpu_custom_call.1} parent=5 // pred_fallthru
        _
      %p3017 = scmp.le.s32.totalorder 2, %s28
      // Predicated region
      $region121: #{tpu_custom_call.1} parent=5 // pred_check
        %p3018 = pneg %p3017
      $region122: #{tpu_custom_call.1} parent=5 // pred_check_branch
        %3020 = sbr.rel (%p3018) target = $region124
      $region123: #{tpu_custom_call.1} parent=5 // pred_region
        %s3021 = ssub.s32 %s28, 2
        // Predicated region
        $region125: #{tpu_custom_call.1} parent=123 // pred_check
          %p3022 = pneg %p442
        $region126: #{tpu_custom_call.1} parent=123 // pred_check_branch
          %3024 = sbr.rel (%p3022) target = $region128
        $region127: #{tpu_custom_call.1} parent=123 // pred_region
          %s3025 = sand.u32 %s427, 1
          %s3026 = scalar_lea.sflag [#allocation10], %s3025
          %s3027 = sand.u32 %s427, 1
          %s3028 = smul.addr %s3027, 8
          %s3029 = scalar_lea.vmem [#allocation14], %s3028
          %3031 = dma.done %s3026, 128
        $region128: #{tpu_custom_call.1} parent=123 // pred_fallthru
          _
      $region124: #{tpu_custom_call.1} parent=5 // pred_fallthru
        _
    $region6: #{tpu_custom_call.1} parent=1 // loop_footer
      %s32 = sadd.s32 1, %s28
    $region7: #{tpu_custom_call.1} parent=1 // loop_footer_branch
      %27 = sbr.rel target = $region3
    $region8: #{tpu_custom_call.1} parent=1 // loop_exit
      _
    %3032 = vsyncpa [#allocation9], 1
    %s3033 = scalar_lea.sflag [#allocation9], 1
    %3034 = vsyncpa %s3033, 1
    %3035 = vsyncpa [#allocation12], 1
    %3036 = vsyncpa [#allocation10], 1
    %s3037 = scalar_lea.sflag [#allocation10], 1
    %3038 = vsyncpa %s3037, 1

</llo_original>
